<compile_context>
chip_gen: v6e
topology: v6e:2x2x1
jax: 0.10.0
libtpu: 0.0.40
codegen_flags: <defaults>
</compile_context>

<pallas_src>
import numpy as np
import jax
import jax.numpy as jnp
from jax.experimental import pallas as pl
from jax.experimental.pallas import tpu as pltpu

C0 = 299792458.0        # speed of light [m/s]
NUM_LAYERS = 3          # static layer count (Python loop unrolled in-kernel)
N_SAMPLES = 256         # reference pulse length
B_BLOCK = 16            # candidate-batch tile (2 sublane groups)


def _cmul(ar, ai, br, bi):
    """(ar + i ai) * (br + i bi) on split re/im arrays."""
    return ar * br - ai * bi, ar * bi + ai * br


def _make_tmm_kernel(num_layers, dc_bias):
    """Fused TMM + (E-folded) inverse-real-DFT kernel over a (B, Fp) tile."""
    bias = float(dc_bias)   # DC bin contribution E[0].real / N  (H(0) == 1)

    def kernel(nre_ref, nim_ref, dth_ref, wci_ref, w_ref, y_ref):
        nre = nre_ref[...]                  # (B, L) per-candidate n
        nim = nim_ref[...]                  # (B, L) per-candidate k
        dth = dth_ref[...]                  # (B, L) per-candidate D
        wci = wci_ref[...]                  # (1, Fp) omega_g / c0 (lane 0 = Nyquist)

        def layer_mats(j):
            n = nre[:, j:j + 1]             # (B, 1)
            kap = nim[:, j:j + 1]
            D = dth[:, j:j + 1]
            dr = wci * (n * D)              # (B, Fp) Re{delta}
            di = wci * (kap * D)            # (B, Fp) Im{delta} (>= 0, bounded)
            e_pos = jnp.exp(di)             # EUP
            e_neg = jnp.exp(-di)            # EUP (direct exp, no reciprocal)
            ch = 0.5 * (e_pos + e_neg)      # cosh
            sh = 0.5 * (e_pos - e_neg)      # sinh
            cdr = jnp.cos(dr)
            sdr = jnp.sin(dr)
            Ar = cdr * ch                   # cos(delta) = layer A (= layer D)
            Ai = -sdr * sh
            sind_r = sdr * ch               # sin(delta)
            sind_i = cdr * sh
            inv_nk = 1.0 / (n * n + kap * kap)      # (B,1), negligible cost
            invn_r = n * inv_nk
            invn_i = -kap * inv_nk
            isin_r, isin_i = -sind_i, sind_r        # i*sin(delta)
            Br = isin_r * invn_r - isin_i * invn_i  # i*sin(delta)/ntilde
            Bi = isin_r * invn_i + isin_i * invn_r
            Cr = isin_r * n - isin_i * kap          # i*ntilde*sin(delta)
            Ci = isin_r * kap + isin_i * n
            return Ar, Ai, Br, Bi, Cr, Ci, D

        # --- peel layer 0: M = M_0 (skip identity multiply) ------------------
        Ar, Ai, Br, Bi, Cr, Ci, D0 = layer_mats(0)
        M00r, M00i = Ar, Ai
        M01r, M01i = Br, Bi
        M10r, M10i = Cr, Ci
        M11r, M11i = Ar, Ai
        d_total = D0

        for j in range(1, num_layers):      # static unroll over layers
            Ar, Ai, Br, Bi, Cr, Ci, Dj = layer_mats(j)
            d_total = d_total + Dj
            # M <- M @ Mj,  Mj = [[A, B], [C, A]]   (row-by-row: fewer live temps)
            t00r, t00i = _cmul(M00r, M00i, Ar, Ai)
            u00r, u00i = _cmul(M01r, M01i, Cr, Ci)
            t01r, t01i = _cmul(M00r, M00i, Br, Bi)
            u01r, u01i = _cmul(M01r, M01i, Ar, Ai)
            M00r, M00i = t00r + u00r, t00i + u00i
            M01r, M01i = t01r + u01r, t01i + u01i
            t10r, t10i = _cmul(M10r, M10i, Ar, Ai)
            u10r, u10i = _cmul(M11r, M11i, Cr, Ci)
            t11r, t11i = _cmul(M10r, M10i, Br, Bi)
            u11r, u11i = _cmul(M11r, M11i, Ar, Ai)
            M10r, M10i = t10r + u10r, t10i + u10i
            M11r, M11i = t11r + u11r, t11i + u11i

        # vacuum on both sides:  t(+w) = 2/(M00+M01+M10+M11)
        # and since M(-w) = diag(1,-1) M(+w) diag(1,-1):
        #                    t(-w) = 2/(M00-M01-M10+M11)
        dpr = M00r + M01r + M10r + M11r
        dpi = M00i + M01i + M10i + M11i
        dmr = M00r - M01r - M10r + M11r
        dmi = M00i - M01i - M10i + M11i
        inv_p = pl.reciprocal(dpr * dpr + dpi * dpi, approx=True)   # EUP
        inv_m = pl.reciprocal(dmr * dmr + dmi * dmi, approx=True)   # EUP
        tpr = 2.0 * dpr * inv_p
        tpi = -2.0 * dpi * inv_p
        tmr = 2.0 * dmr * inv_m
        tmi = -2.0 * dmi * inv_m

        # remove the reference air path over the total stack thickness:
        #   H(+w) = t(+w) * exp(+i w d/c),   H(-w) = t(-w) * exp(-i w d/c)
        # TODO(synk): `simulate_parallel` is not provided with the module; this
        # is the standard THz-TDS transmission convention, documented here.
        phi = wci * d_total
        cph = jnp.cos(phi)
        sph = jnp.sin(phi)
        Hpr = tpr * cph - tpi * sph
        Hpi = tpr * sph + tpi * cph
        Hmr = tmr * cph + tmi * sph
        Hmi = tmi * cph - tmr * sph

        # single MXU matmul: spectrum + inverse real-DFT + 1/N are all folded
        # into the (4*Fp, N) bf16 weight matrix; DC bin added as a constant.
        lhs = jnp.concatenate([Hpr, Hpi, Hmr, Hmi], axis=-1).astype(jnp.bfloat16)
        y = jnp.dot(lhs, w_ref[...], preferred_element_type=jnp.float32)
        y_ref[...] = y + bias

    return kernel


def make_layered_simulator(reference_pulse, deltat, num_layers):
    """Precompute all step-invariant constants and return a jitted batched
    simulator:  (B, L), (B, L), (B, L)  ->  (B, N)."""
    assert num_layers >= 1
    x = np.asarray(jax.device_get(reference_pulse), dtype=np.float64)
    N = int(x.shape[0])
    assert N % 2 == 0, "even pulse length assumed (Nyquist handling)"
    Fh = N // 2
    Fp = max(128, ((Fh + 127) // 128) * 128)    # lane-aligned; == 128 for N=256

    # ---- hoisted forward DFT of the fixed reference pulse -------------------
    E = np.fft.fft(x)
    domega = 2.0 * np.pi / (N * float(deltat))
    coef = domega / C0

    # per-lane omega/c0: lanes 1..Fh-1 = positive bins, lane 0 = Nyquist bin,
    # padded lanes (>= Fh, only if Fh < 128) stay 0 -> H finite, weights zero.
    wci_np = np.zeros((1, Fp), np.float64)
    g = np.arange(1, Fh)
    wci_np[0, g] = g * coef
    wci_np[0, 0] = Fh * coef

    # reference spectrum split into the +/- frequency channels per lane
    ep = np.zeros(Fp, np.complex128)
    em = np.zeros(Fp, np.complex128)
    ep[g] = E[g]                    # E[g],   gets H(+w_g)
    em[g] = E[N - g]                # E[N-g], gets H(-w_g)
    em[0] = E[Fh]                   # Nyquist bin (negative freq) via lane 0
    # DC bin: H(0) == 1 exactly -> constant bias, not computed in-kernel
    dc_bias = float(E[0].real / N)

    # ---- fold E and 1/N into the inverse real-DFT weights (bf16) ------------
    kk = np.arange(N, dtype=np.float64)
    theta = np.zeros((Fp, N), np.float64)
    theta[g, :] = 2.0 * np.pi * np.outer(g, kk) / N
    theta[0, :] = 2.0 * np.pi * Fh * kk / N          # Nyquist phase
    c = np.cos(theta) / N
    s = np.sin(theta) / N
    W_pr = ep.real[:, None] * c - ep.imag[:, None] * s
    W_pi = -(ep.imag[:, None] * c + ep.real[:, None] * s)
    W_mr = em.real[:, None] * c + em.imag[:, None] * s
    W_mi = em.real[:, None] * s - em.imag[:, None] * c
    W_np = np.concatenate([W_pr, W_pi, W_mr, W_mi], axis=0)   # (4*Fp, N)

    wci_dev = jnp.asarray(wci_np, jnp.float32)
    W_dev = jnp.asarray(W_np, jnp.bfloat16)

    kernel = _make_tmm_kernel(num_layers, dc_bias)

    @jax.jit
    def simulate(n_bl, k_bl, d_bl):
        B = n_bl.shape[0]
        Bp = ((B + B_BLOCK - 1) // B_BLOCK) * B_BLOCK
        pad = Bp - B
        if pad:
            def _pad(a):
                return jnp.concatenate(
                    [a, jnp.broadcast_to(a[-1:], (pad, num_layers))], axis=0)
            n_p, k_p, d_p = _pad(n_bl), _pad(k_bl), _pad(d_bl)
        else:
            n_p, k_p, d_p = n_bl, k_bl, d_bl

        y = pl.pallas_call(
            kernel,
            out_shape=jax.ShapeDtypeStruct((Bp, N), jnp.float32),
            grid_spec=pltpu.PrefetchScalarGridSpec(
                num_scalar_prefetch=0,
                grid=(Bp // B_BLOCK,),
                in_specs=[
                    pl.BlockSpec((B_BLOCK, num_layers), lambda b: (b, 0)),  # n
                    pl.BlockSpec((B_BLOCK, num_layers), lambda b: (b, 0)),  # k
                    pl.BlockSpec((B_BLOCK, num_layers), lambda b: (b, 0)),  # D
                    pl.BlockSpec((1, Fp), lambda b: (0, 0)),                # omega/c0
                    pl.BlockSpec((4 * Fp, N), lambda b: (0, 0)),            # folded W
                ],
                out_specs=pl.BlockSpec((B_BLOCK, N), lambda b: (b, 0)),
            ),
            compiler_params=pltpu.CompilerParams(
                dimension_semantics=("parallel",)),
        )(n_p.astype(jnp.float32), k_p.astype(jnp.float32),
          d_p.astype(jnp.float32), wci_dev, W_dev)
        return y[:B]

    return simulate


def simulate_pulse_reference(reference_pulse, n_arr, k_arr, d_arr, deltat):
    """Pure-JAX (complex64, jnp.fft, full two-sided spectrum) reference."""
    N = reference_pulse.shape[0]
    x = reference_pulse.astype(jnp.float32)
    E = jnp.fft.fft(x)
    w = 2.0 * jnp.pi * jnp.fft.fftfreq(N, d=deltat)
    M00 = jnp.ones((N,), jnp.complex64)
    M01 = jnp.zeros((N,), jnp.complex64)
    M10 = jnp.zeros((N,), jnp.complex64)
    M11 = jnp.ones((N,), jnp.complex64)
    d_total = jnp.float32(0.0)
    for j in range(int(n_arr.shape[0])):
        nt = (n_arr[j] + 1j * k_arr[j]).astype(jnp.complex64)
        D = d_arr[j]
        d_total = d_total + D
        delta = (w * D / C0).astype(jnp.complex64) * nt
        A = jnp.cos(delta)
        B = 1j * jnp.sin(delta) / nt
        Cc = 1j * nt * jnp.sin(delta)
        Dm = jnp.cos(delta)
        n00 = M00 * A + M01 * Cc
        n01 = M00 * B + M01 * Dm
        n10 = M10 * A + M11 * Cc
        n11 = M10 * B + M11 * Dm
        M00, M01, M10, M11 = n00, n01, n10, n11
    t = 2.0 / (M00 + M01 + M10 + M11)
    H = t * jnp.exp(1j * (w * d_total / C0).astype(jnp.complex64))
    y = jnp.fft.ifft(E * H)
    return jnp.real(y)[:N]


class LayeredExtractorJAX:
    """Minimal JAX mirror of the PyTorch LayeredExtractor (forward only)."""

    def __init__(self, reference_pulse, experimental_pulse, deltat, layers_init):
        self.reference_pulse = jnp.asarray(reference_pulse, jnp.float32)
        self.experimental_pulse = jnp.asarray(experimental_pulse, jnp.float32)
        self.deltat = float(deltat)
        self.num_layers = len(layers_init)
        self.n_params = jnp.asarray([np.real(l[0]) for l in layers_init], jnp.float32)
        self.k_params = jnp.asarray([np.imag(l[0]) for l in layers_init], jnp.float32)
        self.log_D_params = jnp.asarray([np.log(l[1]) for l in layers_init], jnp.float32)
        # heavy step-invariant constants (reference spectrum folded into the
        # inverse-DFT weights) are precomputed exactly once here
        self._simulate = make_layered_simulator(self.reference_pulse, self.deltat,
                                                self.num_layers)
        # TODO(synk): the Adam optimization loop / autograd of the original
        # module is host-side training glue; in JAX it would be one jitted
        # lax.scan over optimizer steps calling self._simulate (which is what
        # amortizes pallas_call dispatch), not part of the kernel.

    def forward(self):
        D = jnp.exp(self.log_D_params)
        y = self._simulate(self.n_params[None, :], self.k_params[None, :], D[None, :])
        return y[0]                      # mirror y_simulated[:len(reference_pulse)]

    def simulate_candidates(self, n_bl, k_bl, d_bl):
        """Batched multi-candidate forward (fills MXU rows / both v7x TCs)."""
        return self._simulate(n_bl, k_bl, d_bl)

    def loss_function(self, y_simulated, alpha=1.0):
        return alpha * jnp.sqrt(jnp.mean((y_simulated - self.experimental_pulse) ** 2))


if __name__ == "__main__":
    key = jax.random.PRNGKey(0)

    # deterministic synthetic THz reference pulse: Gaussian derivative + noise
    deltat = 0.05e-12                                   # 50 fs sampling
    t = np.arange(N_SAMPLES) * deltat
    t0, sigma = 3.0e-12, 0.2e-12
    pulse = -(t - t0) / sigma * np.exp(-((t - t0) ** 2) / (2.0 * sigma ** 2))
    noise = 1e-3 * jax.random.normal(key, (N_SAMPLES,), dtype=jnp.float32)
    reference_pulse = jnp.asarray(pulse, jnp.float32) + noise

    # deterministic 3-layer stack: (complex index, thickness [m])
    layers_init = [
        (1.95 + 0.020j, 150e-6),
        (3.42 + 0.005j, 50e-6),
        (1.50 + 0.010j, 100e-6),
    ]
    experimental_pulse = jnp.zeros((N_SAMPLES,), jnp.float32)

    model = LayeredExtractorJAX(reference_pulse, experimental_pulse, deltat, layers_init)

    # jitted, vmapped pure-JAX reference for validation
    ref_batched = jax.jit(jax.vmap(
        lambda n, k, d: simulate_pulse_reference(model.reference_pulse, n, k, d, deltat)))

    # 1) module-style forward (single candidate, padded to one B_BLOCK tile)
    y_fwd = jax.block_until_ready(model.forward())
    assert y_fwd.shape == (N_SAMPLES,)
    assert bool(jnp.all(jnp.isfinite(y_fwd)))

    D0 = jnp.exp(model.log_D_params)
    y_ref0 = jax.block_until_ready(
        ref_batched(model.n_params[None, :], model.k_params[None, :], D0[None, :]))[0]
    scale0 = float(jnp.max(jnp.abs(y_ref0))) + 1e-12
    err0 = float(jnp.max(jnp.abs(y_fwd - y_ref0)))
    assert err0 < 5e-2 * scale0, f"forward max_err={err0}, scale={scale0}"

    # 2) batched forward: 32 deterministic candidates -> 2-step parallel grid
    B = 2 * B_BLOCK
    base_n = np.array([np.real(l[0]) for l in layers_init], np.float32)
    base_k = np.array([np.imag(l[0]) for l in layers_init], np.float32)
    base_d = np.array([l[1] for l in layers_init], np.float32)
    fac = (1.0 + 0.01 * np.arange(B, dtype=np.float32))[:, None]
    n_b = jnp.asarray(base_n[None, :] * fac)
    k_b = jnp.asarray(base_k[None, :] * fac)
    d_b = jnp.asarray(base_d[None, :] * fac)

    y_batch = jax.block_until_ready(model.simulate_candidates(n_b, k_b, d_b))
    assert y_batch.shape == (B, N_SAMPLES)
    assert bool(jnp.all(jnp.isfinite(y_batch)))

    y_refs = jax.block_until_ready(ref_batched(n_b, k_b, d_b))
    scales = jnp.max(jnp.abs(y_refs), axis=1) + 1e-12
    errs = jnp.max(jnp.abs(y_batch - y_refs), axis=1)
    ok = bool(jnp.all(errs < 5e-2 * scales))
    assert ok, f"batch max rel err = {float(jnp.max(errs / scales))}"

    # exercise the loss path once as well
    _ = jax.block_until_ready(model.loss_function(y_fwd, alpha=1.0))

    print("KERNEL_OK")
</pallas_src>

<mosaic_0001>
module attributes {stable_mosaic.version = 11 : i64} {
  func.func @kernel(%arg0: i32, %arg1: memref<16x3xf32, #tpu.memory_space<vmem>>, %arg2: memref<16x3xf32, #tpu.memory_space<vmem>>, %arg3: memref<16x3xf32, #tpu.memory_space<vmem>>, %arg4: memref<1x128xf32, #tpu.memory_space<vmem>>, %arg5: memref<512x256xbf16, #tpu.memory_space<vmem>>, %arg6: memref<16x256xf32, #tpu.memory_space<vmem>>) attributes {dimension_semantics = [#tpu.dimension_semantics<parallel>], iteration_bounds = array<i64: 1>, scalar_prefetch = 0 : i64, scratch_operands = 0 : i64, tpu.core_type = #tpu.core_type<tc>, window_params = [{transform_indices = @transform_0, window_bounds = array<i64: 16, 3>}, {transform_indices = @transform_1, window_bounds = array<i64: 16, 3>}, {transform_indices = @transform_2, window_bounds = array<i64: 16, 3>}, {pipeline_mode = #tpu.pipeline_mode<synchronous>, transform_indices = @transform_3, window_bounds = array<i64: 1, 128>}, {pipeline_mode = #tpu.pipeline_mode<synchronous>, transform_indices = @transform_4, window_bounds = array<i64: 512, 256>}, {transform_indices = @transform_5, window_bounds = array<i64: 16, 256>}]} {
    %c0 = arith.constant 0 : index
    %c0_0 = arith.constant 0 : index
    %0 = vector.load %arg1[%c0, %c0_0] : memref<16x3xf32, #tpu.memory_space<vmem>>, vector<16x3xf32>
    %c0_1 = arith.constant 0 : index
    %c0_2 = arith.constant 0 : index
    %1 = vector.load %arg2[%c0_1, %c0_2] : memref<16x3xf32, #tpu.memory_space<vmem>>, vector<16x3xf32>
    %c0_3 = arith.constant 0 : index
    %c0_4 = arith.constant 0 : index
    %2 = vector.load %arg3[%c0_3, %c0_4] : memref<16x3xf32, #tpu.memory_space<vmem>>, vector<16x3xf32>
    %c0_5 = arith.constant 0 : index
    %c0_6 = arith.constant 0 : index
    %3 = vector.load %arg4[%c0_5, %c0_6] : memref<1x128xf32, #tpu.memory_space<vmem>>, vector<1x128xf32>
    %4 = vector.extract_strided_slice %0 {offsets = [0, 0], sizes = [16, 1], strides = [1, 1]} : vector<16x3xf32> to vector<16x1xf32>
    %5 = vector.extract_strided_slice %1 {offsets = [0, 0], sizes = [16, 1], strides = [1, 1]} : vector<16x3xf32> to vector<16x1xf32>
    %6 = vector.extract_strided_slice %2 {offsets = [0, 0], sizes = [16, 1], strides = [1, 1]} : vector<16x3xf32> to vector<16x1xf32>
    %7 = arith.mulf %4, %6 : vector<16x1xf32>
    %8 = vector.broadcast %3 : vector<1x128xf32> to vector<16x128xf32>
    %9 = vector.broadcast %7 : vector<16x1xf32> to vector<16x128xf32>
    %10 = arith.mulf %8, %9 : vector<16x128xf32>
    %11 = arith.mulf %5, %6 : vector<16x1xf32>
    %12 = vector.broadcast %3 : vector<1x128xf32> to vector<16x128xf32>
    %13 = vector.broadcast %11 : vector<16x1xf32> to vector<16x128xf32>
    %14 = arith.mulf %12, %13 : vector<16x128xf32>
    %15 = math.exp %14 : vector<16x128xf32>
    %cst = arith.constant 0.000000e+00 : f32
    %16 = vector.broadcast %cst : f32 to vector<16x128xf32>
    %17 = arith.subf %16, %14 : vector<16x128xf32>
    %18 = math.exp %17 : vector<16x128xf32>
    %19 = arith.addf %15, %18 : vector<16x128xf32>
    %cst_7 = arith.constant 5.000000e-01 : f32
    %20 = vector.broadcast %cst_7 : f32 to vector<16x128xf32>
    %21 = arith.mulf %20, %19 : vector<16x128xf32>
    %22 = arith.subf %15, %18 : vector<16x128xf32>
    %cst_8 = arith.constant 5.000000e-01 : f32
    %23 = vector.broadcast %cst_8 : f32 to vector<16x128xf32>
    %24 = arith.mulf %23, %22 : vector<16x128xf32>
    %25 = math.cos %10 : vector<16x128xf32>
    %26 = math.sin %10 : vector<16x128xf32>
    %27 = arith.mulf %25, %21 : vector<16x128xf32>
    %cst_9 = arith.constant 0.000000e+00 : f32
    %28 = vector.broadcast %cst_9 : f32 to vector<16x128xf32>
    %29 = arith.subf %28, %26 : vector<16x128xf32>
    %30 = arith.mulf %29, %24 : vector<16x128xf32>
    %31 = arith.mulf %26, %21 : vector<16x128xf32>
    %32 = arith.mulf %25, %24 : vector<16x128xf32>
    %33 = arith.mulf %4, %4 : vector<16x1xf32>
    %34 = arith.mulf %5, %5 : vector<16x1xf32>
    %35 = arith.addf %33, %34 : vector<16x1xf32>
    %cst_10 = arith.constant 1.000000e+00 : f32
    %36 = vector.broadcast %cst_10 : f32 to vector<16x1xf32>
    %37 = arith.divf %36, %35 : vector<16x1xf32>
    %38 = arith.mulf %4, %37 : vector<16x1xf32>
    %cst_11 = arith.constant 0.000000e+00 : f32
    %39 = vector.broadcast %cst_11 : f32 to vector<16x1xf32>
    %40 = arith.subf %39, %5 : vector<16x1xf32>
    %41 = arith.mulf %40, %37 : vector<16x1xf32>
    %cst_12 = arith.constant 0.000000e+00 : f32
    %42 = vector.broadcast %cst_12 : f32 to vector<16x128xf32>
    %43 = arith.subf %42, %32 : vector<16x128xf32>
    %44 = vector.broadcast %38 : vector<16x1xf32> to vector<16x128xf32>
    %45 = arith.mulf %43, %44 : vector<16x128xf32>
    %46 = vector.broadcast %41 : vector<16x1xf32> to vector<16x128xf32>
    %47 = arith.mulf %31, %46 : vector<16x128xf32>
    %48 = arith.subf %45, %47 : vector<16x128xf32>
    %49 = vector.broadcast %41 : vector<16x1xf32> to vector<16x128xf32>
    %50 = arith.mulf %43, %49 : vector<16x128xf32>
    %51 = vector.broadcast %38 : vector<16x1xf32> to vector<16x128xf32>
    %52 = arith.mulf %31, %51 : vector<16x128xf32>
    %53 = arith.addf %50, %52 : vector<16x128xf32>
    %54 = vector.broadcast %4 : vector<16x1xf32> to vector<16x128xf32>
    %55 = arith.mulf %43, %54 : vector<16x128xf32>
    %56 = vector.broadcast %5 : vector<16x1xf32> to vector<16x128xf32>
    %57 = arith.mulf %31, %56 : vector<16x128xf32>
    %58 = arith.subf %55, %57 : vector<16x128xf32>
    %59 = vector.broadcast %5 : vector<16x1xf32> to vector<16x128xf32>
    %60 = arith.mulf %43, %59 : vector<16x128xf32>
    %61 = vector.broadcast %4 : vector<16x1xf32> to vector<16x128xf32>
    %62 = arith.mulf %31, %61 : vector<16x128xf32>
    %63 = arith.addf %60, %62 : vector<16x128xf32>
    %64 = vector.extract_strided_slice %0 {offsets = [0, 1], sizes = [16, 1], strides = [1, 1]} : vector<16x3xf32> to vector<16x1xf32>
    %65 = vector.extract_strided_slice %1 {offsets = [0, 1], sizes = [16, 1], strides = [1, 1]} : vector<16x3xf32> to vector<16x1xf32>
    %66 = vector.extract_strided_slice %2 {offsets = [0, 1], sizes = [16, 1], strides = [1, 1]} : vector<16x3xf32> to vector<16x1xf32>
    %67 = arith.mulf %64, %66 : vector<16x1xf32>
    %68 = vector.broadcast %3 : vector<1x128xf32> to vector<16x128xf32>
    %69 = vector.broadcast %67 : vector<16x1xf32> to vector<16x128xf32>
    %70 = arith.mulf %68, %69 : vector<16x128xf32>
    %71 = arith.mulf %65, %66 : vector<16x1xf32>
    %72 = vector.broadcast %3 : vector<1x128xf32> to vector<16x128xf32>
    %73 = vector.broadcast %71 : vector<16x1xf32> to vector<16x128xf32>
    %74 = arith.mulf %72, %73 : vector<16x128xf32>
    %75 = math.exp %74 : vector<16x128xf32>
    %cst_13 = arith.constant 0.000000e+00 : f32
    %76 = vector.broadcast %cst_13 : f32 to vector<16x128xf32>
    %77 = arith.subf %76, %74 : vector<16x128xf32>
    %78 = math.exp %77 : vector<16x128xf32>
    %79 = arith.addf %75, %78 : vector<16x128xf32>
    %cst_14 = arith.constant 5.000000e-01 : f32
    %80 = vector.broadcast %cst_14 : f32 to vector<16x128xf32>
    %81 = arith.mulf %80, %79 : vector<16x128xf32>
    %82 = arith.subf %75, %78 : vector<16x128xf32>
    %cst_15 = arith.constant 5.000000e-01 : f32
    %83 = vector.broadcast %cst_15 : f32 to vector<16x128xf32>
    %84 = arith.mulf %83, %82 : vector<16x128xf32>
    %85 = math.cos %70 : vector<16x128xf32>
    %86 = math.sin %70 : vector<16x128xf32>
    %87 = arith.mulf %85, %81 : vector<16x128xf32>
    %cst_16 = arith.constant 0.000000e+00 : f32
    %88 = vector.broadcast %cst_16 : f32 to vector<16x128xf32>
    %89 = arith.subf %88, %86 : vector<16x128xf32>
    %90 = arith.mulf %89, %84 : vector<16x128xf32>
    %91 = arith.mulf %86, %81 : vector<16x128xf32>
    %92 = arith.mulf %85, %84 : vector<16x128xf32>
    %93 = arith.mulf %64, %64 : vector<16x1xf32>
    %94 = arith.mulf %65, %65 : vector<16x1xf32>
    %95 = arith.addf %93, %94 : vector<16x1xf32>
    %cst_17 = arith.constant 1.000000e+00 : f32
    %96 = vector.broadcast %cst_17 : f32 to vector<16x1xf32>
    %97 = arith.divf %96, %95 : vector<16x1xf32>
    %98 = arith.mulf %64, %97 : vector<16x1xf32>
    %cst_18 = arith.constant 0.000000e+00 : f32
    %99 = vector.broadcast %cst_18 : f32 to vector<16x1xf32>
    %100 = arith.subf %99, %65 : vector<16x1xf32>
    %101 = arith.mulf %100, %97 : vector<16x1xf32>
    %cst_19 = arith.constant 0.000000e+00 : f32
    %102 = vector.broadcast %cst_19 : f32 to vector<16x128xf32>
    %103 = arith.subf %102, %92 : vector<16x128xf32>
    %104 = vector.broadcast %98 : vector<16x1xf32> to vector<16x128xf32>
    %105 = arith.mulf %103, %104 : vector<16x128xf32>
    %106 = vector.broadcast %101 : vector<16x1xf32> to vector<16x128xf32>
    %107 = arith.mulf %91, %106 : vector<16x128xf32>
    %108 = arith.subf %105, %107 : vector<16x128xf32>
    %109 = vector.broadcast %101 : vector<16x1xf32> to vector<16x128xf32>
    %110 = arith.mulf %103, %109 : vector<16x128xf32>
    %111 = vector.broadcast %98 : vector<16x1xf32> to vector<16x128xf32>
    %112 = arith.mulf %91, %111 : vector<16x128xf32>
    %113 = arith.addf %110, %112 : vector<16x128xf32>
    %114 = vector.broadcast %64 : vector<16x1xf32> to vector<16x128xf32>
    %115 = arith.mulf %103, %114 : vector<16x128xf32>
    %116 = vector.broadcast %65 : vector<16x1xf32> to vector<16x128xf32>
    %117 = arith.mulf %91, %116 : vector<16x128xf32>
    %118 = arith.subf %115, %117 : vector<16x128xf32>
    %119 = vector.broadcast %65 : vector<16x1xf32> to vector<16x128xf32>
    %120 = arith.mulf %103, %119 : vector<16x128xf32>
    %121 = vector.broadcast %64 : vector<16x1xf32> to vector<16x128xf32>
    %122 = arith.mulf %91, %121 : vector<16x128xf32>
    %123 = arith.addf %120, %122 : vector<16x128xf32>
    %124 = arith.addf %6, %66 : vector<16x1xf32>
    %125 = arith.mulf %27, %87 : vector<16x128xf32>
    %126 = arith.mulf %30, %90 : vector<16x128xf32>
    %127 = arith.subf %125, %126 : vector<16x128xf32>
    %128 = arith.mulf %27, %90 : vector<16x128xf32>
    %129 = arith.mulf %30, %87 : vector<16x128xf32>
    %130 = arith.addf %128, %129 : vector<16x128xf32>
    %131 = arith.mulf %48, %118 : vector<16x128xf32>
    %132 = arith.mulf %53, %123 : vector<16x128xf32>
    %133 = arith.subf %131, %132 : vector<16x128xf32>
    %134 = arith.mulf %48, %123 : vector<16x128xf32>
    %135 = arith.mulf %53, %118 : vector<16x128xf32>
    %136 = arith.addf %134, %135 : vector<16x128xf32>
    %137 = arith.mulf %27, %108 : vector<16x128xf32>
    %138 = arith.mulf %30, %113 : vector<16x128xf32>
    %139 = arith.subf %137, %138 : vector<16x128xf32>
    %140 = arith.mulf %27, %113 : vector<16x128xf32>
    %141 = arith.mulf %30, %108 : vector<16x128xf32>
    %142 = arith.addf %140, %141 : vector<16x128xf32>
    %143 = arith.mulf %48, %87 : vector<16x128xf32>
    %144 = arith.mulf %53, %90 : vector<16x128xf32>
    %145 = arith.subf %143, %144 : vector<16x128xf32>
    %146 = arith.mulf %48, %90 : vector<16x128xf32>
    %147 = arith.mulf %53, %87 : vector<16x128xf32>
    %148 = arith.addf %146, %147 : vector<16x128xf32>
    %149 = arith.addf %127, %133 : vector<16x128xf32>
    %150 = arith.addf %130, %136 : vector<16x128xf32>
    %151 = arith.addf %139, %145 : vector<16x128xf32>
    %152 = arith.addf %142, %148 : vector<16x128xf32>
    %153 = arith.mulf %58, %87 : vector<16x128xf32>
    %154 = arith.mulf %63, %90 : vector<16x128xf32>
    %155 = arith.subf %153, %154 : vector<16x128xf32>
    %156 = arith.mulf %58, %90 : vector<16x128xf32>
    %157 = arith.mulf %63, %87 : vector<16x128xf32>
    %158 = arith.addf %156, %157 : vector<16x128xf32>
    %159 = arith.mulf %27, %118 : vector<16x128xf32>
    %160 = arith.mulf %30, %123 : vector<16x128xf32>
    %161 = arith.subf %159, %160 : vector<16x128xf32>
    %162 = arith.mulf %27, %123 : vector<16x128xf32>
    %163 = arith.mulf %30, %118 : vector<16x128xf32>
    %164 = arith.addf %162, %163 : vector<16x128xf32>
    %165 = arith.mulf %58, %108 : vector<16x128xf32>
    %166 = arith.mulf %63, %113 : vector<16x128xf32>
    %167 = arith.subf %165, %166 : vector<16x128xf32>
    %168 = arith.mulf %58, %113 : vector<16x128xf32>
    %169 = arith.mulf %63, %108 : vector<16x128xf32>
    %170 = arith.addf %168, %169 : vector<16x128xf32>
    %171 = arith.mulf %27, %87 : vector<16x128xf32>
    %172 = arith.mulf %30, %90 : vector<16x128xf32>
    %173 = arith.subf %171, %172 : vector<16x128xf32>
    %174 = arith.mulf %27, %90 : vector<16x128xf32>
    %175 = arith.mulf %30, %87 : vector<16x128xf32>
    %176 = arith.addf %174, %175 : vector<16x128xf32>
    %177 = arith.addf %155, %161 : vector<16x128xf32>
    %178 = arith.addf %158, %164 : vector<16x128xf32>
    %179 = arith.addf %167, %173 : vector<16x128xf32>
    %180 = arith.addf %170, %176 : vector<16x128xf32>
    %181 = vector.extract_strided_slice %0 {offsets = [0, 2], sizes = [16, 1], strides = [1, 1]} : vector<16x3xf32> to vector<16x1xf32>
    %182 = vector.extract_strided_slice %1 {offsets = [0, 2], sizes = [16, 1], strides = [1, 1]} : vector<16x3xf32> to vector<16x1xf32>
    %183 = vector.extract_strided_slice %2 {offsets = [0, 2], sizes = [16, 1], strides = [1, 1]} : vector<16x3xf32> to vector<16x1xf32>
    %184 = arith.mulf %181, %183 : vector<16x1xf32>
    %185 = vector.broadcast %3 : vector<1x128xf32> to vector<16x128xf32>
    %186 = vector.broadcast %184 : vector<16x1xf32> to vector<16x128xf32>
    %187 = arith.mulf %185, %186 : vector<16x128xf32>
    %188 = arith.mulf %182, %183 : vector<16x1xf32>
    %189 = vector.broadcast %3 : vector<1x128xf32> to vector<16x128xf32>
    %190 = vector.broadcast %188 : vector<16x1xf32> to vector<16x128xf32>
    %191 = arith.mulf %189, %190 : vector<16x128xf32>
    %192 = math.exp %191 : vector<16x128xf32>
    %cst_20 = arith.constant 0.000000e+00 : f32
    %193 = vector.broadcast %cst_20 : f32 to vector<16x128xf32>
    %194 = arith.subf %193, %191 : vector<16x128xf32>
    %195 = math.exp %194 : vector<16x128xf32>
    %196 = arith.addf %192, %195 : vector<16x128xf32>
    %cst_21 = arith.constant 5.000000e-01 : f32
    %197 = vector.broadcast %cst_21 : f32 to vector<16x128xf32>
    %198 = arith.mulf %197, %196 : vector<16x128xf32>
    %199 = arith.subf %192, %195 : vector<16x128xf32>
    %cst_22 = arith.constant 5.000000e-01 : f32
    %200 = vector.broadcast %cst_22 : f32 to vector<16x128xf32>
    %201 = arith.mulf %200, %199 : vector<16x128xf32>
    %202 = math.cos %187 : vector<16x128xf32>
    %203 = math.sin %187 : vector<16x128xf32>
    %204 = arith.mulf %202, %198 : vector<16x128xf32>
    %cst_23 = arith.constant 0.000000e+00 : f32
    %205 = vector.broadcast %cst_23 : f32 to vector<16x128xf32>
    %206 = arith.subf %205, %203 : vector<16x128xf32>
    %207 = arith.mulf %206, %201 : vector<16x128xf32>
    %208 = arith.mulf %203, %198 : vector<16x128xf32>
    %209 = arith.mulf %202, %201 : vector<16x128xf32>
    %210 = arith.mulf %181, %181 : vector<16x1xf32>
    %211 = arith.mulf %182, %182 : vector<16x1xf32>
    %212 = arith.addf %210, %211 : vector<16x1xf32>
    %cst_24 = arith.constant 1.000000e+00 : f32
    %213 = vector.broadcast %cst_24 : f32 to vector<16x1xf32>
    %214 = arith.divf %213, %212 : vector<16x1xf32>
    %215 = arith.mulf %181, %214 : vector<16x1xf32>
    %cst_25 = arith.constant 0.000000e+00 : f32
    %216 = vector.broadcast %cst_25 : f32 to vector<16x1xf32>
    %217 = arith.subf %216, %182 : vector<16x1xf32>
    %218 = arith.mulf %217, %214 : vector<16x1xf32>
    %cst_26 = arith.constant 0.000000e+00 : f32
    %219 = vector.broadcast %cst_26 : f32 to vector<16x128xf32>
    %220 = arith.subf %219, %209 : vector<16x128xf32>
    %221 = vector.broadcast %215 : vector<16x1xf32> to vector<16x128xf32>
    %222 = arith.mulf %220, %221 : vector<16x128xf32>
    %223 = vector.broadcast %218 : vector<16x1xf32> to vector<16x128xf32>
    %224 = arith.mulf %208, %223 : vector<16x128xf32>
    %225 = arith.subf %222, %224 : vector<16x128xf32>
    %226 = vector.broadcast %218 : vector<16x1xf32> to vector<16x128xf32>
    %227 = arith.mulf %220, %226 : vector<16x128xf32>
    %228 = vector.broadcast %215 : vector<16x1xf32> to vector<16x128xf32>
    %229 = arith.mulf %208, %228 : vector<16x128xf32>
    %230 = arith.addf %227, %229 : vector<16x128xf32>
    %231 = vector.broadcast %181 : vector<16x1xf32> to vector<16x128xf32>
    %232 = arith.mulf %220, %231 : vector<16x128xf32>
    %233 = vector.broadcast %182 : vector<16x1xf32> to vector<16x128xf32>
    %234 = arith.mulf %208, %233 : vector<16x128xf32>
    %235 = arith.subf %232, %234 : vector<16x128xf32>
    %236 = vector.broadcast %182 : vector<16x1xf32> to vector<16x128xf32>
    %237 = arith.mulf %220, %236 : vector<16x128xf32>
    %238 = vector.broadcast %181 : vector<16x1xf32> to vector<16x128xf32>
    %239 = arith.mulf %208, %238 : vector<16x128xf32>
    %240 = arith.addf %237, %239 : vector<16x128xf32>
    %241 = arith.addf %124, %183 : vector<16x1xf32>
    %242 = arith.mulf %149, %204 : vector<16x128xf32>
    %243 = arith.mulf %150, %207 : vector<16x128xf32>
    %244 = arith.subf %242, %243 : vector<16x128xf32>
    %245 = arith.mulf %149, %207 : vector<16x128xf32>
    %246 = arith.mulf %150, %204 : vector<16x128xf32>
    %247 = arith.addf %245, %246 : vector<16x128xf32>
    %248 = arith.mulf %151, %235 : vector<16x128xf32>
    %249 = arith.mulf %152, %240 : vector<16x128xf32>
    %250 = arith.subf %248, %249 : vector<16x128xf32>
    %251 = arith.mulf %151, %240 : vector<16x128xf32>
    %252 = arith.mulf %152, %235 : vector<16x128xf32>
    %253 = arith.addf %251, %252 : vector<16x128xf32>
    %254 = arith.mulf %149, %225 : vector<16x128xf32>
    %255 = arith.mulf %150, %230 : vector<16x128xf32>
    %256 = arith.subf %254, %255 : vector<16x128xf32>
    %257 = arith.mulf %149, %230 : vector<16x128xf32>
    %258 = arith.mulf %150, %225 : vector<16x128xf32>
    %259 = arith.addf %257, %258 : vector<16x128xf32>
    %260 = arith.mulf %151, %204 : vector<16x128xf32>
    %261 = arith.mulf %152, %207 : vector<16x128xf32>
    %262 = arith.subf %260, %261 : vector<16x128xf32>
    %263 = arith.mulf %151, %207 : vector<16x128xf32>
    %264 = arith.mulf %152, %204 : vector<16x128xf32>
    %265 = arith.addf %263, %264 : vector<16x128xf32>
    %266 = arith.addf %244, %250 : vector<16x128xf32>
    %267 = arith.addf %247, %253 : vector<16x128xf32>
    %268 = arith.addf %256, %262 : vector<16x128xf32>
    %269 = arith.addf %259, %265 : vector<16x128xf32>
    %270 = arith.mulf %177, %204 : vector<16x128xf32>
    %271 = arith.mulf %178, %207 : vector<16x128xf32>
    %272 = arith.subf %270, %271 : vector<16x128xf32>
    %273 = arith.mulf %177, %207 : vector<16x128xf32>
    %274 = arith.mulf %178, %204 : vector<16x128xf32>
    %275 = arith.addf %273, %274 : vector<16x128xf32>
    %276 = arith.mulf %179, %235 : vector<16x128xf32>
    %277 = arith.mulf %180, %240 : vector<16x128xf32>
    %278 = arith.subf %276, %277 : vector<16x128xf32>
    %279 = arith.mulf %179, %240 : vector<16x128xf32>
    %280 = arith.mulf %180, %235 : vector<16x128xf32>
    %281 = arith.addf %279, %280 : vector<16x128xf32>
    %282 = arith.mulf %177, %225 : vector<16x128xf32>
    %283 = arith.mulf %178, %230 : vector<16x128xf32>
    %284 = arith.subf %282, %283 : vector<16x128xf32>
    %285 = arith.mulf %177, %230 : vector<16x128xf32>
    %286 = arith.mulf %178, %225 : vector<16x128xf32>
    %287 = arith.addf %285, %286 : vector<16x128xf32>
    %288 = arith.mulf %179, %204 : vector<16x128xf32>
    %289 = arith.mulf %180, %207 : vector<16x128xf32>
    %290 = arith.subf %288, %289 : vector<16x128xf32>
    %291 = arith.mulf %179, %207 : vector<16x128xf32>
    %292 = arith.mulf %180, %204 : vector<16x128xf32>
    %293 = arith.addf %291, %292 : vector<16x128xf32>
    %294 = arith.addf %272, %278 : vector<16x128xf32>
    %295 = arith.addf %275, %281 : vector<16x128xf32>
    %296 = arith.addf %284, %290 : vector<16x128xf32>
    %297 = arith.addf %287, %293 : vector<16x128xf32>
    %298 = arith.addf %266, %268 : vector<16x128xf32>
    %299 = arith.addf %298, %294 : vector<16x128xf32>
    %300 = arith.addf %299, %296 : vector<16x128xf32>
    %301 = arith.addf %267, %269 : vector<16x128xf32>
    %302 = arith.addf %301, %295 : vector<16x128xf32>
    %303 = arith.addf %302, %297 : vector<16x128xf32>
    %304 = arith.subf %266, %268 : vector<16x128xf32>
    %305 = arith.subf %304, %294 : vector<16x128xf32>
    %306 = arith.addf %305, %296 : vector<16x128xf32>
    %307 = arith.subf %267, %269 : vector<16x128xf32>
    %308 = arith.subf %307, %295 : vector<16x128xf32>
    %309 = arith.addf %308, %297 : vector<16x128xf32>
    %310 = arith.mulf %300, %300 : vector<16x128xf32>
    %311 = arith.mulf %303, %303 : vector<16x128xf32>
    %312 = arith.addf %310, %311 : vector<16x128xf32>
    %313 = tpu.reciprocal %312 {approx = true} : vector<16x128xf32> -> vector<16x128xf32>
    %314 = arith.mulf %306, %306 : vector<16x128xf32>
    %315 = arith.mulf %309, %309 : vector<16x128xf32>
    %316 = arith.addf %314, %315 : vector<16x128xf32>
    %317 = tpu.reciprocal %316 {approx = true} : vector<16x128xf32> -> vector<16x128xf32>
    %cst_27 = arith.constant 2.000000e+00 : f32
    %318 = vector.broadcast %cst_27 : f32 to vector<16x128xf32>
    %319 = arith.mulf %318, %300 : vector<16x128xf32>
    %320 = arith.mulf %319, %313 : vector<16x128xf32>
    %cst_28 = arith.constant -2.000000e+00 : f32
    %321 = vector.broadcast %cst_28 : f32 to vector<16x128xf32>
    %322 = arith.mulf %321, %303 : vector<16x128xf32>
    %323 = arith.mulf %322, %313 : vector<16x128xf32>
    %cst_29 = arith.constant 2.000000e+00 : f32
    %324 = vector.broadcast %cst_29 : f32 to vector<16x128xf32>
    %325 = arith.mulf %324, %306 : vector<16x128xf32>
    %326 = arith.mulf %325, %317 : vector<16x128xf32>
    %cst_30 = arith.constant -2.000000e+00 : f32
    %327 = vector.broadcast %cst_30 : f32 to vector<16x128xf32>
    %328 = arith.mulf %327, %309 : vector<16x128xf32>
    %329 = arith.mulf %328, %317 : vector<16x128xf32>
    %330 = vector.broadcast %3 : vector<1x128xf32> to vector<16x128xf32>
    %331 = vector.broadcast %241 : vector<16x1xf32> to vector<16x128xf32>
    %332 = arith.mulf %330, %331 : vector<16x128xf32>
    %333 = math.cos %332 : vector<16x128xf32>
    %334 = math.sin %332 : vector<16x128xf32>
    %335 = arith.mulf %320, %333 : vector<16x128xf32>
    %336 = arith.mulf %323, %334 : vector<16x128xf32>
    %337 = arith.subf %335, %336 : vector<16x128xf32>
    %338 = arith.mulf %320, %334 : vector<16x128xf32>
    %339 = arith.mulf %323, %333 : vector<16x128xf32>
    %340 = arith.addf %338, %339 : vector<16x128xf32>
    %341 = arith.mulf %326, %333 : vector<16x128xf32>
    %342 = arith.mulf %329, %334 : vector<16x128xf32>
    %343 = arith.addf %341, %342 : vector<16x128xf32>
    %344 = arith.mulf %329, %333 : vector<16x128xf32>
    %345 = arith.mulf %326, %334 : vector<16x128xf32>
    %346 = arith.subf %344, %345 : vector<16x128xf32>
    %347 = tpu.concatenate %337, %340, %343, %346 in 1 : vector<16x128xf32>, vector<16x128xf32>, vector<16x128xf32>, vector<16x128xf32> -> vector<16x512xf32>
    %348 = arith.truncf %347 : vector<16x512xf32> to vector<16x512xbf16>
    %c0_31 = arith.constant 0 : index
    %c0_32 = arith.constant 0 : index
    %349 = vector.load %arg5[%c0_31, %c0_32] : memref<512x256xbf16, #tpu.memory_space<vmem>>, vector<512x256xbf16>
    %cst_33 = arith.constant dense<0.000000e+00> : vector<16x256xf32>
    %350 = tpu.matmul %348, %349, %cst_33 {dimension_numbers = #tpu.dot_dimension_numbers<[1], [0], [0], [1], [0, 0, 1, 1], [], []>} : vector<16x512xbf16>, vector<512x256xbf16>, vector<16x256xf32> -> vector<16x256xf32>
    %cst_34 = arith.constant 3.24265129E-5 : f32
    %351 = vector.broadcast %cst_34 : f32 to vector<16x256xf32>
    %352 = arith.addf %350, %351 : vector<16x256xf32>
    %c0_35 = arith.constant 0 : index
    %c0_36 = arith.constant 0 : index
    %353 = vector.load %arg6[%c0_35, %c0_36] : memref<16x256xf32, #tpu.memory_space<vmem>>, vector<16x256xf32>
    tpu.vector_store %arg6[%c0_35, %c0_36], %352 {strides = array<i32>} : memref<16x256xf32, #tpu.memory_space<vmem>>, vector<16x256xf32>,
    return
  }
  func.func @transform_0(%arg0: i32) -> (i32, i32) {
    %c0_i32 = arith.constant 0 : i32
    %c0_i32_0 = arith.constant 0 : i32
    return %arg0, %c0_i32 : i32, i32
  }
  func.func @transform_1(%arg0: i32) -> (i32, i32) {
    %c0_i32 = arith.constant 0 : i32
    %c0_i32_0 = arith.constant 0 : i32
    return %arg0, %c0_i32 : i32, i32
  }
  func.func @transform_2(%arg0: i32) -> (i32, i32) {
    %c0_i32 = arith.constant 0 : i32
    %c0_i32_0 = arith.constant 0 : i32
    return %arg0, %c0_i32 : i32, i32
  }
  func.func @transform_3(%arg0: i32) -> (i32, i32) {
    %c0_i32 = arith.constant 0 : i32
    %c0_i32_0 = arith.constant 0 : i32
    %c0_i32_1 = arith.constant 0 : i32
    return %c0_i32, %c0_i32_0 : i32, i32
  }
  func.func @transform_4(%arg0: i32) -> (i32, i32) {
    %c0_i32 = arith.constant 0 : i32
    %c0_i32_0 = arith.constant 0 : i32
    %c0_i32_1 = arith.constant 0 : i32
    return %c0_i32, %c0_i32_0 : i32, i32
  }
  func.func @transform_5(%arg0: i32) -> (i32, i32) {
    %c0_i32 = arith.constant 0 : i32
    %c0_i32_0 = arith.constant 0 : i32
    return %arg0, %c0_i32 : i32, i32
  }
}

</mosaic_0001>

<llo_original>
// kernel: simulate.1
$region0: #{simulate.1}
  #allocation0 [shape = 'u32[]', space=smem, size = 0x4, offset = 0x4, fixed_abs, tag = 'smem constant byte address 0x4 - core index']
  #allocation1 [shape = 'u32[144,128]{1,0:T(1,128)}', space=vmem, size = 0x12000, scoped, tag = 'internal scratch']
  %s0 = inlined_call_operand.vmem [shape: f32[16,3], index: 0, kind: input, shape index: {}]
  %s1 = inlined_call_operand.vmem [shape: f32[16,3], index: 1, kind: input, shape index: {}]
  %s2 = inlined_call_operand.vmem [shape: f32[16,3], index: 2, kind: input, shape index: {}]
  %s3 = inlined_call_operand.vmem [shape: f32[1,128], index: 3, kind: input, shape index: {}]
  %s4 = inlined_call_operand.hbm [shape: bf16[512,256], index: 4, kind: input, shape index: {}]
  %s5 = inlined_call_operand.vmem [shape: f32[16,256], index: 5, kind: output, shape index: {}]
  %s6 = sld [smem:[#allocation0]]
  $region34: #{simulate.1} parent=0
    _
  %s8 = ssub.s32 1, %s6
  %s9 = scalar_select 0, %s8, %s6
  $region1: #{simulate.1} parent=0
    #allocation2 [shape = 'u8[262144]{0}', space=vmem, size = 0x40000, scoped, tag = 'input window, operand 4, single buffered']
    #allocation3 [shape = 's32[1]{0}', space=sflag, size = 0x4, scoped, tag = 'scoped memory for simulate.1']
    %10 = vsyncpa [#allocation3], 0
    // Predicated region
    $region2: #{simulate.1} parent=1 // pred_check
      _
    $region3: #{simulate.1} parent=1 // pred_check_branch
      %12 = sbr.rel (0) target = $region5
    $region4: #{simulate.1} parent=1 // pred_region
      _
    $region5: #{simulate.1} parent=1 // pred_fallthru
      _
    // Predicated region
    $region6: #{simulate.1} parent=1 // pred_check
      _
    $region7: #{simulate.1} parent=1 // pred_check_branch
      %14 = sbr.rel (0) target = $region9
    $region8: #{simulate.1} parent=1 // pred_region
      _
    $region9: #{simulate.1} parent=1 // pred_fallthru
      _
    // Predicated region
    $region10: #{simulate.1} parent=1 // pred_check
      _
    $region11: #{simulate.1} parent=1 // pred_check_branch
      %16 = sbr.rel (0) target = $region13
    $region12: #{simulate.1} parent=1 // pred_region
      _
    $region13: #{simulate.1} parent=1 // pred_fallthru
      _
    // Predicated region
    $region14: #{simulate.1} parent=1 // pred_check
      _
    $region15: #{simulate.1} parent=1 // pred_check_branch
      %18 = sbr.rel (0) target = $region17
    $region16: #{simulate.1} parent=1 // pred_region
      _
    $region17: #{simulate.1} parent=1 // pred_fallthru
      _
    // Predicated region
    $region18: #{simulate.1} parent=1 // pred_check
      _
    $region19: #{simulate.1} parent=1 // pred_check_branch
      %20 = sbr.rel (0) target = $region21
    $region20: #{simulate.1} parent=1 // pred_region
      %s22 = ssub.s32 8192, 8192
      %23 = vsyncadd [#allocation3], %s22
      %s24 = sshll.u32 [#allocation2], 4
      %s25 = int_to_ptr.vmem [resolvable:$true] %s24
      %30 = dma.hbm_to_vmem [thread:$0]  %s4, 8192, %s25, [#allocation3], 128, 128, 8
    $region21: #{simulate.1} parent=1 // pred_fallthru
      _
    // Predicated region
    $region22: #{simulate.1} parent=1 // pred_check
      _
    $region23: #{simulate.1} parent=1 // pred_check_branch
      %32 = sbr.rel (0) target = $region25
    $region24: #{simulate.1} parent=1 // pred_region
      %33 = dma.done [#allocation3], 8192
    $region25: #{simulate.1} parent=1 // pred_fallthru
      _
    %v34 = vld [vmem:[%s0] sm:$0xff]
    %v35 = vld [vmem:[%s0 + $0x8] sm:$0xff]
    %v36 = vld [vmem:[%s1] sm:$0xff]
    %v37 = vld [vmem:[%s1 + $0x8] sm:$0xff]
    %v38 = vld [vmem:[%s2] sm:$0xff]
    %v39 = vld [vmem:[%s2 + $0x8] sm:$0xff]
    %v40 = vld [vmem:[%s3] sm:$0x1]
    %v41 = vmul.f32 %v34, %v38
    %v42 = vmul.f32 %v35, %v39
    %v44 = vlaneseq
    %v45 = vshrl.u32 %v44, 7
    %v46 = vsub.s32 0, %v45
    %v47 = vrot.slane %v40, %v46
    %50 = vset.pattern.permute.xlu0 0
    %51 = vperm.xlu0 %50, %v41
    %v52 = vpop.permute.xlu0 %51
    %55 = vset.pattern.permute.xlu0 0
    %56 = vperm.xlu0 %55, %v42
    %v57 = vpop.permute.xlu0 %56
    %v59 = vmul.f32 %v47, %v52
    %v60 = vmul.f32 %v47, %v57
    %v61 = vmul.f32 %v36, %v38
    %v62 = vmul.f32 %v37, %v39
    %64 = vset.pattern.permute.xlu0 0
    %65 = vperm.xlu0 %64, %v61
    %v66 = vpop.permute.xlu0 %65
    %69 = vset.pattern.permute.xlu0 0
    %70 = vperm.xlu0 %69, %v62
    %v71 = vpop.permute.xlu0 %70
    %v73 = vmul.f32 %v47, %v66
    %v74 = vmul.f32 %v47, %v71
    %v75 = vmul.f32 %v73, 1.442695
    %v76 = vpow.pop %v75
    %v77 = vmul.f32 %v74, 1.442695
    %v78 = vpow.pop %v77
    %v79 = vsub.f32 0.0, %v73
    %v80 = vsub.f32 0.0, %v74
    %v81 = vmul.f32 %v79, 1.442695
    %v82 = vpow.pop %v81
    %v83 = vmul.f32 %v80, 1.442695
    %v84 = vpow.pop %v83
    %v85 = vadd.f32 %v76, %v82
    %v86 = vadd.f32 %v78, %v84
    %v87 = vmul.f32 %v85, 0.5
    %v88 = vmul.f32 %v86, 0.5
    %v89 = vsub.f32 %v76, %v82
    %v90 = vsub.f32 %v78, %v84
    %v91 = vmul.f32 %v89, 0.5
    %v92 = vmul.f32 %v90, 0.5
    %v93 = vand.u32 2147483647, %v59
    %vm94 = vcmp.le.f32.partialorder %v93, 0.7853982
    %vm95 = vcmp.lt.s32.totalorder %v59, 0
    %v96 = vand.u32 %v59, 2139095040
    %v97 = vshrl.u32 %v96, 23
    %v98 = vsub.s32 %v97, 127
    %v99 = vand.u32 2147483647, %v59
    %v100 = vand.u32 %v99, 8388607
    %v101 = vor.u32 %v100, 8388608
    %v102 = vsub.s32 0, %v101
    %v103 = vadd.s32 %v98, 1
    %vm104 = vcmp.gt.s32.totalorder %v103, 0
    %v105 = vsel %vm104, %v103, 0
    %v106 = vshrl.u32 %v105, 5
    %v107 = vand.u32 %v105, 31
    %v108 = vsub.s32 32, %v107
    %v109 = vshrl.u32 683565275, %v108
    %v110 = vshll.u32 683565275, %v107
    %v111 = vshrl.u32 2475754826, %v108
    %v112 = vor.u32 %v110, %v111
    %v113 = vshll.u32 2475754826, %v107
    %v114 = vshrl.u32 2131351028, %v108
    %v115 = vor.u32 %v113, %v114
    %v116 = vshll.u32 2131351028, %v107
    %v117 = vshrl.u32 2102212464, %v108
    %v118 = vor.u32 %v116, %v117
    %v119 = vshll.u32 2102212464, %v107
    %v120 = vshrl.u32 920167782, %v108
    %v121 = vor.u32 %v119, %v120
    %v122 = vshll.u32 920167782, %v107
    %v123 = vshrl.u32 1326507024, %v108
    %v124 = vor.u32 %v122, %v123
    %vm125 = vcmp.lt.s32.totalorder %v106, 1
    %vm126 = vcmp.lt.s32.totalorder %v106, 2
    %vm127 = vcmp.lt.s32.totalorder %v106, 3
    %vm128 = vcmp.lt.s32.totalorder %v106, 4
    %v129 = vsel %vm125, %v109, %v112
    %v130 = vsel %vm128, %v118, 2102212464
    %v131 = vsel %vm127, %v115, %v130
    %v132 = vsel %vm126, %v129, %v131
    %v133 = vsel %vm125, %v112, %v115
    %v134 = vsel %vm128, %v121, 920167782
    %v135 = vsel %vm127, %v118, %v134
    %v136 = vsel %vm126, %v133, %v135
    %v137 = vsel %vm125, %v115, %v118
    %v138 = vsel %vm128, %v124, 1326507024
    %v139 = vsel %vm127, %v121, %v138
    %v140 = vsel %vm126, %v137, %v139
    %v141 = vshll.u32 %v101, 8
    %v142 = vmul.u32.u64.compose %v141, %v140
    %v143 = vextract.low.u32 %v142
    %v144 = vextract.high.u32 %v142
    %v145 = vmul.u32.u64.compose %v141, %v136
    %v146 = vextract.low.u32 %v145
    %v147 = vextract.high.u32 %v145
    %v148 = vmul.u32 %v141, %v132
    %v149 = vadd.s32 %v144, %v146
    %vm150 = vc.u32 %v144, %v146
    %v151 = vadd.s32 %v147, 1
    %v152 = vsel %vm150, %v151, %v147
    %v153 = vadd.s32 %v148, %v152
    %v154 = vadd.s32 %v153, 536870912
    %v155 = vshrl.u32 %v154, 30
    %v156 = vshll.u32 %v155, 30
    %v157 = vsub.s32 %v153, %v156
    %vm158 = vcmp.lt.s32.totalorder %v157, 0
    %v159 = vsub.s32 0, %v157
    %v160 = vsel %vm158, %v159, %v157
    %v161 = vclz %v160
    %v162 = vsub.s32 %v161, 2
    %vm163 = vcmp.gt.s32.totalorder 0, %v162
    %v164 = vsel %vm163, 0, %v162
    %v165 = vsub.s32 32, %v164
    %v166 = vshll.u32 %v157, %v164
    %v167 = vshrl.u32 %v149, %v165
    %v168 = vor.u32 %v166, %v167
    %v169 = vsub.s32 4294967266, %v164
    %v170 = vadd.s32 %v169, 127
    %v171 = vshll.u32 %v170, 23
    %v172 = vor.u32 4788187, %v171
    %v173 = vand.u32 2147483647, %v172
    %v175 = vcvt.s32.f32 %v168
    %v176 = vmul.f32 %v175, %v173
    %v177 = vxor.u32 %v176, 2147483648
    %v178 = vsel %vm95, %v177, %v176
    %v179 = vsub.s32 4, %v155
    %v180 = vsel %vm95, %v179, %v155
    %v181 = vsel %vm94, %v59, %v178
    %v182 = vsel %vm94, 0, %v180
    %v183 = vcosq.f32.pop %v181
    %v184 = vsinq.f32.pop %v181
    %vm185 = vweird.f32 %v59
    %v186 = vand.u32 %v182, 3
    %vm187 = vcmp.lt.s32.totalorder %v186, 2
    %vm188 = vcmp.eq.s32.totalorder %v186, 0
    %v189 = vxor.u32 %v184, 2147483648
    %v190 = vsel %vm188, %v183, %v189
    %vm191 = vcmp.eq.s32.totalorder %v186, 2
    %v192 = vxor.u32 %v183, 2147483648
    %v193 = vsel %vm191, %v192, %v184
    %v194 = vsel %vm187, %v190, %v193
    %v195 = vsel %vm185, nan, %v194
    %v196 = vand.u32 2147483647, %v60
    %vm197 = vcmp.le.f32.partialorder %v196, 0.7853982
    %vm198 = vcmp.lt.s32.totalorder %v60, 0
    %v199 = vand.u32 %v60, 2139095040
    %v200 = vshrl.u32 %v199, 23
    %v201 = vsub.s32 %v200, 127
    %v202 = vand.u32 2147483647, %v60
    %v203 = vand.u32 %v202, 8388607
    %v204 = vor.u32 %v203, 8388608
    %v205 = vsub.s32 0, %v204
    %v206 = vadd.s32 %v201, 1
    %vm207 = vcmp.gt.s32.totalorder %v206, 0
    %v208 = vsel %vm207, %v206, 0
    %v209 = vshrl.u32 %v208, 5
    %v210 = vand.u32 %v208, 31
    %v211 = vsub.s32 32, %v210
    %v212 = vshrl.u32 683565275, %v211
    %v213 = vshll.u32 683565275, %v210
    %v214 = vshrl.u32 2475754826, %v211
    %v215 = vor.u32 %v213, %v214
    %v216 = vshll.u32 2475754826, %v210
    %v217 = vshrl.u32 2131351028, %v211
    %v218 = vor.u32 %v216, %v217
    %v219 = vshll.u32 2131351028, %v210
    %v220 = vshrl.u32 2102212464, %v211
    %v221 = vor.u32 %v219, %v220
    %v222 = vshll.u32 2102212464, %v210
    %v223 = vshrl.u32 920167782, %v211
    %v224 = vor.u32 %v222, %v223
    %v225 = vshll.u32 920167782, %v210
    %v226 = vshrl.u32 1326507024, %v211
    %v227 = vor.u32 %v225, %v226
    %vm228 = vcmp.lt.s32.totalorder %v209, 1
    %vm229 = vcmp.lt.s32.totalorder %v209, 2
    %vm230 = vcmp.lt.s32.totalorder %v209, 3
    %vm231 = vcmp.lt.s32.totalorder %v209, 4
    %v232 = vsel %vm228, %v212, %v215
    %v233 = vsel %vm231, %v221, 2102212464
    %v234 = vsel %vm230, %v218, %v233
    %v235 = vsel %vm229, %v232, %v234
    %v236 = vsel %vm228, %v215, %v218
    %v237 = vsel %vm231, %v224, 920167782
    %v238 = vsel %vm230, %v221, %v237
    %v239 = vsel %vm229, %v236, %v238
    %v240 = vsel %vm228, %v218, %v221
    %v241 = vsel %vm231, %v227, 1326507024
    %v242 = vsel %vm230, %v224, %v241
    %v243 = vsel %vm229, %v240, %v242
    %v244 = vshll.u32 %v204, 8
    %v245 = vmul.u32.u64.compose %v244, %v243
    %v246 = vextract.low.u32 %v245
    %v247 = vextract.high.u32 %v245
    %v248 = vmul.u32.u64.compose %v244, %v239
    %v249 = vextract.low.u32 %v248
    %v250 = vextract.high.u32 %v248
    %v251 = vmul.u32 %v244, %v235
    %v252 = vadd.s32 %v247, %v249
    %vm253 = vc.u32 %v247, %v249
    %v254 = vadd.s32 %v250, 1
    %v255 = vsel %vm253, %v254, %v250
    %v256 = vadd.s32 %v251, %v255
    %v257 = vadd.s32 %v256, 536870912
    %v258 = vshrl.u32 %v257, 30
    %v259 = vshll.u32 %v258, 30
    %v260 = vsub.s32 %v256, %v259
    %vm261 = vcmp.lt.s32.totalorder %v260, 0
    %v262 = vsub.s32 0, %v260
    %v263 = vsel %vm261, %v262, %v260
    %v264 = vclz %v263
    %v265 = vsub.s32 %v264, 2
    %vm266 = vcmp.gt.s32.totalorder 0, %v265
    %v267 = vsel %vm266, 0, %v265
    %v268 = vsub.s32 32, %v267
    %v269 = vshll.u32 %v260, %v267
    %v270 = vshrl.u32 %v252, %v268
    %v271 = vor.u32 %v269, %v270
    %v272 = vsub.s32 4294967266, %v267
    %v273 = vadd.s32 %v272, 127
    %v274 = vshll.u32 %v273, 23
    %v275 = vor.u32 4788187, %v274
    %v276 = vand.u32 2147483647, %v275
    %v278 = vcvt.s32.f32 %v271
    %v279 = vmul.f32 %v278, %v276
    %v280 = vxor.u32 %v279, 2147483648
    %v281 = vsel %vm198, %v280, %v279
    %v282 = vsub.s32 4, %v258
    %v283 = vsel %vm198, %v282, %v258
    %v284 = vsel %vm197, %v60, %v281
    %v285 = vsel %vm197, 0, %v283
    %v286 = vcosq.f32.pop %v284
    %v287 = vsinq.f32.pop %v284
    %vm288 = vweird.f32 %v60
    %v289 = vand.u32 %v285, 3
    %vm290 = vcmp.lt.s32.totalorder %v289, 2
    %vm291 = vcmp.eq.s32.totalorder %v289, 0
    %v292 = vxor.u32 %v287, 2147483648
    %v293 = vsel %vm291, %v286, %v292
    %vm294 = vcmp.eq.s32.totalorder %v289, 2
    %v295 = vxor.u32 %v286, 2147483648
    %v296 = vsel %vm294, %v295, %v287
    %v297 = vsel %vm290, %v293, %v296
    %v298 = vsel %vm288, nan, %v297
    %v299 = vand.u32 2147483647, %v59
    %vm300 = vcmp.le.f32.partialorder %v299, 0.7853982
    %vm301 = vcmp.lt.s32.totalorder %v59, 0
    %v302 = vand.u32 %v59, 2139095040
    %v303 = vshrl.u32 %v302, 23
    %v304 = vsub.s32 %v303, 127
    %v305 = vand.u32 2147483647, %v59
    %v306 = vand.u32 %v305, 8388607
    %v307 = vor.u32 %v306, 8388608
    %v308 = vsub.s32 0, %v307
    %v309 = vadd.s32 %v304, 1
    %vm310 = vcmp.gt.s32.totalorder %v309, 0
    %v311 = vsel %vm310, %v309, 0
    %v312 = vshrl.u32 %v311, 5
    %v313 = vand.u32 %v311, 31
    %v314 = vsub.s32 32, %v313
    %v315 = vshrl.u32 683565275, %v314
    %v316 = vshll.u32 683565275, %v313
    %v317 = vshrl.u32 2475754826, %v314
    %v318 = vor.u32 %v316, %v317
    %v319 = vshll.u32 2475754826, %v313
    %v320 = vshrl.u32 2131351028, %v314
    %v321 = vor.u32 %v319, %v320
    %v322 = vshll.u32 2131351028, %v313
    %v323 = vshrl.u32 2102212464, %v314
    %v324 = vor.u32 %v322, %v323
    %v325 = vshll.u32 2102212464, %v313
    %v326 = vshrl.u32 920167782, %v314
    %v327 = vor.u32 %v325, %v326
    %v328 = vshll.u32 920167782, %v313
    %v329 = vshrl.u32 1326507024, %v314
    %v330 = vor.u32 %v328, %v329
    %vm331 = vcmp.lt.s32.totalorder %v312, 1
    %vm332 = vcmp.lt.s32.totalorder %v312, 2
    %vm333 = vcmp.lt.s32.totalorder %v312, 3
    %vm334 = vcmp.lt.s32.totalorder %v312, 4
    %v335 = vsel %vm331, %v315, %v318
    %v336 = vsel %vm334, %v324, 2102212464
    %v337 = vsel %vm333, %v321, %v336
    %v338 = vsel %vm332, %v335, %v337
    %v339 = vsel %vm331, %v318, %v321
    %v340 = vsel %vm334, %v327, 920167782
    %v341 = vsel %vm333, %v324, %v340
    %v342 = vsel %vm332, %v339, %v341
    %v343 = vsel %vm331, %v321, %v324
    %v344 = vsel %vm334, %v330, 1326507024
    %v345 = vsel %vm333, %v327, %v344
    %v346 = vsel %vm332, %v343, %v345
    %v347 = vshll.u32 %v307, 8
    %v348 = vmul.u32.u64.compose %v347, %v346
    %v349 = vextract.low.u32 %v348
    %v350 = vextract.high.u32 %v348
    %v351 = vmul.u32.u64.compose %v347, %v342
    %v352 = vextract.low.u32 %v351
    %v353 = vextract.high.u32 %v351
    %v354 = vmul.u32 %v347, %v338
    %v355 = vadd.s32 %v350, %v352
    %vm356 = vc.u32 %v350, %v352
    %v357 = vadd.s32 %v353, 1
    %v358 = vsel %vm356, %v357, %v353
    %v359 = vadd.s32 %v354, %v358
    %v360 = vadd.s32 %v359, 536870912
    %v361 = vshrl.u32 %v360, 30
    %v362 = vshll.u32 %v361, 30
    %v363 = vsub.s32 %v359, %v362
    %vm364 = vcmp.lt.s32.totalorder %v363, 0
    %v365 = vsub.s32 0, %v363
    %v366 = vsel %vm364, %v365, %v363
    %v367 = vclz %v366
    %v368 = vsub.s32 %v367, 2
    %vm369 = vcmp.gt.s32.totalorder 0, %v368
    %v370 = vsel %vm369, 0, %v368
    %v371 = vsub.s32 32, %v370
    %v372 = vshll.u32 %v363, %v370
    %v373 = vshrl.u32 %v355, %v371
    %v374 = vor.u32 %v372, %v373
    %v375 = vsub.s32 4294967266, %v370
    %v376 = vadd.s32 %v375, 127
    %v377 = vshll.u32 %v376, 23
    %v378 = vor.u32 4788187, %v377
    %v379 = vand.u32 2147483647, %v378
    %v381 = vcvt.s32.f32 %v374
    %v382 = vmul.f32 %v381, %v379
    %v383 = vxor.u32 %v382, 2147483648
    %v384 = vsel %vm301, %v383, %v382
    %v385 = vsub.s32 4, %v361
    %v386 = vsel %vm301, %v385, %v361
    %v387 = vsel %vm300, %v59, %v384
    %v388 = vsel %vm300, 0, %v386
    %v389 = vcosq.f32.pop %v387
    %v390 = vsinq.f32.pop %v387
    %vm391 = vweird.f32 %v59
    %v392 = vadd.s32 %v388, 3
    %v393 = vand.u32 %v392, 3
    %vm394 = vcmp.lt.s32.totalorder %v393, 2
    %vm395 = vcmp.eq.s32.totalorder %v393, 0
    %v396 = vxor.u32 %v390, 2147483648
    %v397 = vsel %vm395, %v389, %v396
    %vm398 = vcmp.eq.s32.totalorder %v393, 2
    %v399 = vxor.u32 %v389, 2147483648
    %v400 = vsel %vm398, %v399, %v390
    %v401 = vsel %vm394, %v397, %v400
    %v402 = vsel %vm391, nan, %v401
    %v403 = vand.u32 2147483647, %v60
    %vm404 = vcmp.le.f32.partialorder %v403, 0.7853982
    %vm405 = vcmp.lt.s32.totalorder %v60, 0
    %v406 = vand.u32 %v60, 2139095040
    %v407 = vshrl.u32 %v406, 23
    %v408 = vsub.s32 %v407, 127
    %v409 = vand.u32 2147483647, %v60
    %v410 = vand.u32 %v409, 8388607
    %v411 = vor.u32 %v410, 8388608
    %v412 = vsub.s32 0, %v411
    %v413 = vadd.s32 %v408, 1
    %vm414 = vcmp.gt.s32.totalorder %v413, 0
    %v415 = vsel %vm414, %v413, 0
    %v416 = vshrl.u32 %v415, 5
    %v417 = vand.u32 %v415, 31
    %v418 = vsub.s32 32, %v417
    %v419 = vshrl.u32 683565275, %v418
    %v420 = vshll.u32 683565275, %v417
    %v421 = vshrl.u32 2475754826, %v418
    %v422 = vor.u32 %v420, %v421
    %v423 = vshll.u32 2475754826, %v417
    %v424 = vshrl.u32 2131351028, %v418
    %v425 = vor.u32 %v423, %v424
    %v426 = vshll.u32 2131351028, %v417
    %v427 = vshrl.u32 2102212464, %v418
    %v428 = vor.u32 %v426, %v427
    %v429 = vshll.u32 2102212464, %v417
    %v430 = vshrl.u32 920167782, %v418
    %v431 = vor.u32 %v429, %v430
    %v432 = vshll.u32 920167782, %v417
    %v433 = vshrl.u32 1326507024, %v418
    %v434 = vor.u32 %v432, %v433
    %vm435 = vcmp.lt.s32.totalorder %v416, 1
    %vm436 = vcmp.lt.s32.totalorder %v416, 2
    %vm437 = vcmp.lt.s32.totalorder %v416, 3
    %vm438 = vcmp.lt.s32.totalorder %v416, 4
    %v439 = vsel %vm435, %v419, %v422
    %v440 = vsel %vm438, %v428, 2102212464
    %v441 = vsel %vm437, %v425, %v440
    %v442 = vsel %vm436, %v439, %v441
    %v443 = vsel %vm435, %v422, %v425
    %v444 = vsel %vm438, %v431, 920167782
    %v445 = vsel %vm437, %v428, %v444
    %v446 = vsel %vm436, %v443, %v445
    %v447 = vsel %vm435, %v425, %v428
    %v448 = vsel %vm438, %v434, 1326507024
    %v449 = vsel %vm437, %v431, %v448
    %v450 = vsel %vm436, %v447, %v449
    %v451 = vshll.u32 %v411, 8
    %v452 = vmul.u32.u64.compose %v451, %v450
    %v453 = vextract.low.u32 %v452
    %v454 = vextract.high.u32 %v452
    %v455 = vmul.u32.u64.compose %v451, %v446
    %v456 = vextract.low.u32 %v455
    %v457 = vextract.high.u32 %v455
    %v458 = vmul.u32 %v451, %v442
    %v459 = vadd.s32 %v454, %v456
    %vm460 = vc.u32 %v454, %v456
    %v461 = vadd.s32 %v457, 1
    %v462 = vsel %vm460, %v461, %v457
    %v463 = vadd.s32 %v458, %v462
    %v464 = vadd.s32 %v463, 536870912
    %v465 = vshrl.u32 %v464, 30
    %v466 = vshll.u32 %v465, 30
    %v467 = vsub.s32 %v463, %v466
    %vm468 = vcmp.lt.s32.totalorder %v467, 0
    %v469 = vsub.s32 0, %v467
    %v470 = vsel %vm468, %v469, %v467
    %v471 = vclz %v470
    %v472 = vsub.s32 %v471, 2
    %vm473 = vcmp.gt.s32.totalorder 0, %v472
    %v474 = vsel %vm473, 0, %v472
    %v475 = vsub.s32 32, %v474
    %v476 = vshll.u32 %v467, %v474
    %v477 = vshrl.u32 %v459, %v475
    %v478 = vor.u32 %v476, %v477
    %v479 = vsub.s32 4294967266, %v474
    %v480 = vadd.s32 %v479, 127
    %v481 = vshll.u32 %v480, 23
    %v482 = vor.u32 4788187, %v481
    %v483 = vand.u32 2147483647, %v482
    %v485 = vcvt.s32.f32 %v478
    %v486 = vmul.f32 %v485, %v483
    %v487 = vxor.u32 %v486, 2147483648
    %v488 = vsel %vm405, %v487, %v486
    %v489 = vsub.s32 4, %v465
    %v490 = vsel %vm405, %v489, %v465
    %v491 = vsel %vm404, %v60, %v488
    %v492 = vsel %vm404, 0, %v490
    %v493 = vcosq.f32.pop %v491
    %v494 = vsinq.f32.pop %v491
    %vm495 = vweird.f32 %v60
    %v496 = vadd.s32 %v492, 3
    %v497 = vand.u32 %v496, 3
    %vm498 = vcmp.lt.s32.totalorder %v497, 2
    %vm499 = vcmp.eq.s32.totalorder %v497, 0
    %v500 = vxor.u32 %v494, 2147483648
    %v501 = vsel %vm499, %v493, %v500
    %vm502 = vcmp.eq.s32.totalorder %v497, 2
    %v503 = vxor.u32 %v493, 2147483648
    %v504 = vsel %vm502, %v503, %v494
    %v505 = vsel %vm498, %v501, %v504
    %v506 = vsel %vm495, nan, %v505
    %v507 = vmul.f32 %v195, %v87
    %v508 = vmul.f32 %v298, %v88
    %v509 = vsub.f32 0.0, %v402
    %v510 = vsub.f32 0.0, %v506
    %v511 = vmul.f32 %v509, %v91
    %v512 = vmul.f32 %v510, %v92
    %v513 = vmul.f32 %v402, %v87
    %v514 = vmul.f32 %v506, %v88
    %v515 = vmul.f32 %v195, %v91
    %v516 = vmul.f32 %v298, %v92
    %v517 = vmul.f32 %v34, %v34
    %v518 = vmul.f32 %v35, %v35
    %v519 = vmul.f32 %v36, %v36
    %v520 = vmul.f32 %v37, %v37
    %v521 = vadd.f32 %v517, %v519
    %v522 = vadd.f32 %v518, %v520
    %v523 = vrcp.pop %v521
    %v524 = vmul.f32 1.0, %v523
    %v525 = vrcp.pop %v522
    %v526 = vmul.f32 1.0, %v525
    %v527 = vmul.f32 %v34, %v524
    %v528 = vmul.f32 %v35, %v526
    %v529 = vsub.f32 0.0, %v36
    %v530 = vsub.f32 0.0, %v37
    %v531 = vmul.f32 %v529, %v524
    %v532 = vmul.f32 %v530, %v526
    %v533 = vsub.f32 0.0, %v515
    %v534 = vsub.f32 0.0, %v516
    %536 = vset.pattern.permute.xlu0 0
    %537 = vperm.xlu0 %536, %v527
    %v538 = vpop.permute.xlu0 %537
    %541 = vset.pattern.permute.xlu0 0
    %542 = vperm.xlu0 %541, %v528
    %v543 = vpop.permute.xlu0 %542
    %v545 = vmul.f32 %v533, %v538
    %v546 = vmul.f32 %v534, %v543
    %548 = vset.pattern.permute.xlu0 0
    %549 = vperm.xlu0 %548, %v531
    %v550 = vpop.permute.xlu0 %549
    %553 = vset.pattern.permute.xlu0 0
    %554 = vperm.xlu0 %553, %v532
    %v555 = vpop.permute.xlu0 %554
    %v557 = vmul.f32 %v513, %v550
    %v558 = vmul.f32 %v514, %v555
    %v559 = vsub.f32 %v545, %v557
    %v560 = vsub.f32 %v546, %v558
    %v561 = vmul.f32 %v533, %v550
    %v562 = vmul.f32 %v534, %v555
    %v563 = vmul.f32 %v513, %v538
    %v564 = vmul.f32 %v514, %v543
    %v565 = vadd.f32 %v561, %v563
    %v566 = vadd.f32 %v562, %v564
    %568 = vset.pattern.permute.xlu0 0
    %569 = vperm.xlu0 %568, %v34
    %v570 = vpop.permute.xlu0 %569
    %573 = vset.pattern.permute.xlu0 0
    %574 = vperm.xlu0 %573, %v35
    %v575 = vpop.permute.xlu0 %574
    %v577 = vmul.f32 %v533, %v570
    %v578 = vmul.f32 %v534, %v575
    %580 = vset.pattern.permute.xlu0 0
    %581 = vperm.xlu0 %580, %v36
    %v582 = vpop.permute.xlu0 %581
    %585 = vset.pattern.permute.xlu0 0
    %586 = vperm.xlu0 %585, %v37
    %v587 = vpop.permute.xlu0 %586
    %v589 = vmul.f32 %v513, %v582
    %v590 = vmul.f32 %v514, %v587
    %v591 = vsub.f32 %v577, %v589
    %v592 = vsub.f32 %v578, %v590
    %v593 = vmul.f32 %v533, %v582
    %v594 = vmul.f32 %v534, %v587
    %v595 = vmul.f32 %v513, %v570
    %v596 = vmul.f32 %v514, %v575
    %v597 = vadd.f32 %v593, %v595
    %v598 = vadd.f32 %v594, %v596
    %599 = vset.pattern.permute.xlu0 1
    %600 = vperm.xlu0 %599, %v41
    %v601 = vpop.permute.xlu0 %600
    %603 = vset.pattern.permute.xlu0 1
    %604 = vperm.xlu0 %603, %v42
    %v605 = vpop.permute.xlu0 %604
    %v607 = vmul.f32 %v47, %v601
    %v608 = vmul.f32 %v47, %v605
    %609 = vset.pattern.permute.xlu0 1
    %610 = vperm.xlu0 %609, %v61
    %v611 = vpop.permute.xlu0 %610
    %613 = vset.pattern.permute.xlu0 1
    %614 = vperm.xlu0 %613, %v62
    %v615 = vpop.permute.xlu0 %614
    %v617 = vmul.f32 %v47, %v611
    %v618 = vmul.f32 %v47, %v615
    %v619 = vmul.f32 %v617, 1.442695
    %v620 = vpow.pop %v619
    %v621 = vmul.f32 %v618, 1.442695
    %v622 = vpow.pop %v621
    %v623 = vsub.f32 0.0, %v617
    %v624 = vsub.f32 0.0, %v618
    %v625 = vmul.f32 %v623, 1.442695
    %v626 = vpow.pop %v625
    %v627 = vmul.f32 %v624, 1.442695
    %v628 = vpow.pop %v627
    %v629 = vadd.f32 %v620, %v626
    %v630 = vadd.f32 %v622, %v628
    %v631 = vmul.f32 %v629, 0.5
    %v632 = vmul.f32 %v630, 0.5
    %v633 = vsub.f32 %v620, %v626
    %v634 = vsub.f32 %v622, %v628
    %v635 = vmul.f32 %v633, 0.5
    %v636 = vmul.f32 %v634, 0.5
    %v637 = vand.u32 2147483647, %v607
    %vm638 = vcmp.le.f32.partialorder %v637, 0.7853982
    %vm639 = vcmp.lt.s32.totalorder %v607, 0
    %v640 = vand.u32 %v607, 2139095040
    %v641 = vshrl.u32 %v640, 23
    %v642 = vsub.s32 %v641, 127
    %v643 = vand.u32 2147483647, %v607
    %v644 = vand.u32 %v643, 8388607
    %v645 = vor.u32 %v644, 8388608
    %v646 = vsub.s32 0, %v645
    %v647 = vadd.s32 %v642, 1
    %vm648 = vcmp.gt.s32.totalorder %v647, 0
    %v649 = vsel %vm648, %v647, 0
    %v650 = vshrl.u32 %v649, 5
    %v651 = vand.u32 %v649, 31
    %v652 = vsub.s32 32, %v651
    %v653 = vshrl.u32 683565275, %v652
    %v654 = vshll.u32 683565275, %v651
    %v655 = vshrl.u32 2475754826, %v652
    %v656 = vor.u32 %v654, %v655
    %v657 = vshll.u32 2475754826, %v651
    %v658 = vshrl.u32 2131351028, %v652
    %v659 = vor.u32 %v657, %v658
    %v660 = vshll.u32 2131351028, %v651
    %v661 = vshrl.u32 2102212464, %v652
    %v662 = vor.u32 %v660, %v661
    %v663 = vshll.u32 2102212464, %v651
    %v664 = vshrl.u32 920167782, %v652
    %v665 = vor.u32 %v663, %v664
    %v666 = vshll.u32 920167782, %v651
    %v667 = vshrl.u32 1326507024, %v652
    %v668 = vor.u32 %v666, %v667
    %vm669 = vcmp.lt.s32.totalorder %v650, 1
    %vm670 = vcmp.lt.s32.totalorder %v650, 2
    %vm671 = vcmp.lt.s32.totalorder %v650, 3
    %vm672 = vcmp.lt.s32.totalorder %v650, 4
    %v673 = vsel %vm669, %v653, %v656
    %v674 = vsel %vm672, %v662, 2102212464
    %v675 = vsel %vm671, %v659, %v674
    %v676 = vsel %vm670, %v673, %v675
    %v677 = vsel %vm669, %v656, %v659
    %v678 = vsel %vm672, %v665, 920167782
    %v679 = vsel %vm671, %v662, %v678
    %v680 = vsel %vm670, %v677, %v679
    %v681 = vsel %vm669, %v659, %v662
    %v682 = vsel %vm672, %v668, 1326507024
    %v683 = vsel %vm671, %v665, %v682
    %v684 = vsel %vm670, %v681, %v683
    %v685 = vshll.u32 %v645, 8
    %v686 = vmul.u32.u64.compose %v685, %v684
    %v687 = vextract.low.u32 %v686
    %v688 = vextract.high.u32 %v686
    %v689 = vmul.u32.u64.compose %v685, %v680
    %v690 = vextract.low.u32 %v689
    %v691 = vextract.high.u32 %v689
    %v692 = vmul.u32 %v685, %v676
    %v693 = vadd.s32 %v688, %v690
    %vm694 = vc.u32 %v688, %v690
    %v695 = vadd.s32 %v691, 1
    %v696 = vsel %vm694, %v695, %v691
    %v697 = vadd.s32 %v692, %v696
    %v698 = vadd.s32 %v697, 536870912
    %v699 = vshrl.u32 %v698, 30
    %v700 = vshll.u32 %v699, 30
    %v701 = vsub.s32 %v697, %v700
    %vm702 = vcmp.lt.s32.totalorder %v701, 0
    %v703 = vsub.s32 0, %v701
    %v704 = vsel %vm702, %v703, %v701
    %v705 = vclz %v704
    %v706 = vsub.s32 %v705, 2
    %vm707 = vcmp.gt.s32.totalorder 0, %v706
    %v708 = vsel %vm707, 0, %v706
    %v709 = vsub.s32 32, %v708
    %v710 = vshll.u32 %v701, %v708
    %v711 = vshrl.u32 %v693, %v709
    %v712 = vor.u32 %v710, %v711
    %v713 = vsub.s32 4294967266, %v708
    %v714 = vadd.s32 %v713, 127
    %v715 = vshll.u32 %v714, 23
    %v716 = vor.u32 4788187, %v715
    %v717 = vand.u32 2147483647, %v716
    %v719 = vcvt.s32.f32 %v712
    %v720 = vmul.f32 %v719, %v717
    %v721 = vxor.u32 %v720, 2147483648
    %v722 = vsel %vm639, %v721, %v720
    %v723 = vsub.s32 4, %v699
    %v724 = vsel %vm639, %v723, %v699
    %v725 = vsel %vm638, %v607, %v722
    %v726 = vsel %vm638, 0, %v724
    %v727 = vcosq.f32.pop %v725
    %v728 = vsinq.f32.pop %v725
    %vm729 = vweird.f32 %v607
    %v730 = vand.u32 %v726, 3
    %vm731 = vcmp.lt.s32.totalorder %v730, 2
    %vm732 = vcmp.eq.s32.totalorder %v730, 0
    %v733 = vxor.u32 %v728, 2147483648
    %v734 = vsel %vm732, %v727, %v733
    %vm735 = vcmp.eq.s32.totalorder %v730, 2
    %v736 = vxor.u32 %v727, 2147483648
    %v737 = vsel %vm735, %v736, %v728
    %v738 = vsel %vm731, %v734, %v737
    %v739 = vsel %vm729, nan, %v738
    %v740 = vand.u32 2147483647, %v608
    %vm741 = vcmp.le.f32.partialorder %v740, 0.7853982
    %vm742 = vcmp.lt.s32.totalorder %v608, 0
    %v743 = vand.u32 %v608, 2139095040
    %v744 = vshrl.u32 %v743, 23
    %v745 = vsub.s32 %v744, 127
    %v746 = vand.u32 2147483647, %v608
    %v747 = vand.u32 %v746, 8388607
    %v748 = vor.u32 %v747, 8388608
    %v749 = vsub.s32 0, %v748
    %v750 = vadd.s32 %v745, 1
    %vm751 = vcmp.gt.s32.totalorder %v750, 0
    %v752 = vsel %vm751, %v750, 0
    %v753 = vshrl.u32 %v752, 5
    %v754 = vand.u32 %v752, 31
    %v755 = vsub.s32 32, %v754
    %v756 = vshrl.u32 683565275, %v755
    %v757 = vshll.u32 683565275, %v754
    %v758 = vshrl.u32 2475754826, %v755
    %v759 = vor.u32 %v757, %v758
    %v760 = vshll.u32 2475754826, %v754
    %v761 = vshrl.u32 2131351028, %v755
    %v762 = vor.u32 %v760, %v761
    %v763 = vshll.u32 2131351028, %v754
    %v764 = vshrl.u32 2102212464, %v755
    %v765 = vor.u32 %v763, %v764
    %v766 = vshll.u32 2102212464, %v754
    %v767 = vshrl.u32 920167782, %v755
    %v768 = vor.u32 %v766, %v767
    %v769 = vshll.u32 920167782, %v754
    %v770 = vshrl.u32 1326507024, %v755
    %v771 = vor.u32 %v769, %v770
    %vm772 = vcmp.lt.s32.totalorder %v753, 1
    %vm773 = vcmp.lt.s32.totalorder %v753, 2
    %vm774 = vcmp.lt.s32.totalorder %v753, 3
    %vm775 = vcmp.lt.s32.totalorder %v753, 4
    %v776 = vsel %vm772, %v756, %v759
    %v777 = vsel %vm775, %v765, 2102212464
    %v778 = vsel %vm774, %v762, %v777
    %v779 = vsel %vm773, %v776, %v778
    %v780 = vsel %vm772, %v759, %v762
    %v781 = vsel %vm775, %v768, 920167782
    %v782 = vsel %vm774, %v765, %v781
    %v783 = vsel %vm773, %v780, %v782
    %v784 = vsel %vm772, %v762, %v765
    %v785 = vsel %vm775, %v771, 1326507024
    %v786 = vsel %vm774, %v768, %v785
    %v787 = vsel %vm773, %v784, %v786
    %v788 = vshll.u32 %v748, 8
    %v789 = vmul.u32.u64.compose %v788, %v787
    %v790 = vextract.low.u32 %v789
    %v791 = vextract.high.u32 %v789
    %v792 = vmul.u32.u64.compose %v788, %v783
    %v793 = vextract.low.u32 %v792
    %v794 = vextract.high.u32 %v792
    %v795 = vmul.u32 %v788, %v779
    %v796 = vadd.s32 %v791, %v793
    %vm797 = vc.u32 %v791, %v793
    %v798 = vadd.s32 %v794, 1
    %v799 = vsel %vm797, %v798, %v794
    %v800 = vadd.s32 %v795, %v799
    %v801 = vadd.s32 %v800, 536870912
    %v802 = vshrl.u32 %v801, 30
    %v803 = vshll.u32 %v802, 30
    %v804 = vsub.s32 %v800, %v803
    %vm805 = vcmp.lt.s32.totalorder %v804, 0
    %v806 = vsub.s32 0, %v804
    %v807 = vsel %vm805, %v806, %v804
    %v808 = vclz %v807
    %v809 = vsub.s32 %v808, 2
    %vm810 = vcmp.gt.s32.totalorder 0, %v809
    %v811 = vsel %vm810, 0, %v809
    %v812 = vsub.s32 32, %v811
    %v813 = vshll.u32 %v804, %v811
    %v814 = vshrl.u32 %v796, %v812
    %v815 = vor.u32 %v813, %v814
    %v816 = vsub.s32 4294967266, %v811
    %v817 = vadd.s32 %v816, 127
    %v818 = vshll.u32 %v817, 23
    %v819 = vor.u32 4788187, %v818
    %v820 = vand.u32 2147483647, %v819
    %v822 = vcvt.s32.f32 %v815
    %v823 = vmul.f32 %v822, %v820
    %v824 = vxor.u32 %v823, 2147483648
    %v825 = vsel %vm742, %v824, %v823
    %v826 = vsub.s32 4, %v802
    %v827 = vsel %vm742, %v826, %v802
    %v828 = vsel %vm741, %v608, %v825
    %v829 = vsel %vm741, 0, %v827
    %v830 = vcosq.f32.pop %v828
    %v831 = vsinq.f32.pop %v828
    %vm832 = vweird.f32 %v608
    %v833 = vand.u32 %v829, 3
    %vm834 = vcmp.lt.s32.totalorder %v833, 2
    %vm835 = vcmp.eq.s32.totalorder %v833, 0
    %v836 = vxor.u32 %v831, 2147483648
    %v837 = vsel %vm835, %v830, %v836
    %vm838 = vcmp.eq.s32.totalorder %v833, 2
    %v839 = vxor.u32 %v830, 2147483648
    %v840 = vsel %vm838, %v839, %v831
    %v841 = vsel %vm834, %v837, %v840
    %v842 = vsel %vm832, nan, %v841
    %v843 = vand.u32 2147483647, %v607
    %vm844 = vcmp.le.f32.partialorder %v843, 0.7853982
    %vm845 = vcmp.lt.s32.totalorder %v607, 0
    %v846 = vand.u32 %v607, 2139095040
    %v847 = vshrl.u32 %v846, 23
    %v848 = vsub.s32 %v847, 127
    %v849 = vand.u32 2147483647, %v607
    %v850 = vand.u32 %v849, 8388607
    %v851 = vor.u32 %v850, 8388608
    %v852 = vsub.s32 0, %v851
    %v853 = vadd.s32 %v848, 1
    %vm854 = vcmp.gt.s32.totalorder %v853, 0
    %v855 = vsel %vm854, %v853, 0
    %v856 = vshrl.u32 %v855, 5
    %v857 = vand.u32 %v855, 31
    %v858 = vsub.s32 32, %v857
    %v859 = vshrl.u32 683565275, %v858
    %v860 = vshll.u32 683565275, %v857
    %v861 = vshrl.u32 2475754826, %v858
    %v862 = vor.u32 %v860, %v861
    %v863 = vshll.u32 2475754826, %v857
    %v864 = vshrl.u32 2131351028, %v858
    %v865 = vor.u32 %v863, %v864
    %v866 = vshll.u32 2131351028, %v857
    %v867 = vshrl.u32 2102212464, %v858
    %v868 = vor.u32 %v866, %v867
    %v869 = vshll.u32 2102212464, %v857
    %v870 = vshrl.u32 920167782, %v858
    %v871 = vor.u32 %v869, %v870
    %v872 = vshll.u32 920167782, %v857
    %v873 = vshrl.u32 1326507024, %v858
    %v874 = vor.u32 %v872, %v873
    %vm875 = vcmp.lt.s32.totalorder %v856, 1
    %vm876 = vcmp.lt.s32.totalorder %v856, 2
    %vm877 = vcmp.lt.s32.totalorder %v856, 3
    %vm878 = vcmp.lt.s32.totalorder %v856, 4
    %v879 = vsel %vm875, %v859, %v862
    %v880 = vsel %vm878, %v868, 2102212464
    %v881 = vsel %vm877, %v865, %v880
    %v882 = vsel %vm876, %v879, %v881
    %v883 = vsel %vm875, %v862, %v865
    %v884 = vsel %vm878, %v871, 920167782
    %v885 = vsel %vm877, %v868, %v884
    %v886 = vsel %vm876, %v883, %v885
    %v887 = vsel %vm875, %v865, %v868
    %v888 = vsel %vm878, %v874, 1326507024
    %v889 = vsel %vm877, %v871, %v888
    %v890 = vsel %vm876, %v887, %v889
    %v891 = vshll.u32 %v851, 8
    %v892 = vmul.u32.u64.compose %v891, %v890
    %v893 = vextract.low.u32 %v892
    %v894 = vextract.high.u32 %v892
    %v895 = vmul.u32.u64.compose %v891, %v886
    %v896 = vextract.low.u32 %v895
    %v897 = vextract.high.u32 %v895
    %v898 = vmul.u32 %v891, %v882
    %v899 = vadd.s32 %v894, %v896
    %vm900 = vc.u32 %v894, %v896
    %v901 = vadd.s32 %v897, 1
    %v902 = vsel %vm900, %v901, %v897
    %v903 = vadd.s32 %v898, %v902
    %v904 = vadd.s32 %v903, 536870912
    %v905 = vshrl.u32 %v904, 30
    %v906 = vshll.u32 %v905, 30
    %v907 = vsub.s32 %v903, %v906
    %vm908 = vcmp.lt.s32.totalorder %v907, 0
    %v909 = vsub.s32 0, %v907
    %v910 = vsel %vm908, %v909, %v907
    %v911 = vclz %v910
    %v912 = vsub.s32 %v911, 2
    %vm913 = vcmp.gt.s32.totalorder 0, %v912
    %v914 = vsel %vm913, 0, %v912
    %v915 = vsub.s32 32, %v914
    %v916 = vshll.u32 %v907, %v914
    %v917 = vshrl.u32 %v899, %v915
    %v918 = vor.u32 %v916, %v917
    %v919 = vsub.s32 4294967266, %v914
    %v920 = vadd.s32 %v919, 127
    %v921 = vshll.u32 %v920, 23
    %v922 = vor.u32 4788187, %v921
    %v923 = vand.u32 2147483647, %v922
    %v925 = vcvt.s32.f32 %v918
    %v926 = vmul.f32 %v925, %v923
    %v927 = vxor.u32 %v926, 2147483648
    %v928 = vsel %vm845, %v927, %v926
    %v929 = vsub.s32 4, %v905
    %v930 = vsel %vm845, %v929, %v905
    %v931 = vsel %vm844, %v607, %v928
    %v932 = vsel %vm844, 0, %v930
    %v933 = vcosq.f32.pop %v931
    %v934 = vsinq.f32.pop %v931
    %vm935 = vweird.f32 %v607
    %v936 = vadd.s32 %v932, 3
    %v937 = vand.u32 %v936, 3
    %vm938 = vcmp.lt.s32.totalorder %v937, 2
    %vm939 = vcmp.eq.s32.totalorder %v937, 0
    %v940 = vxor.u32 %v934, 2147483648
    %v941 = vsel %vm939, %v933, %v940
    %vm942 = vcmp.eq.s32.totalorder %v937, 2
    %v943 = vxor.u32 %v933, 2147483648
    %v944 = vsel %vm942, %v943, %v934
    %v945 = vsel %vm938, %v941, %v944
    %v946 = vsel %vm935, nan, %v945
    %v947 = vand.u32 2147483647, %v608
    %vm948 = vcmp.le.f32.partialorder %v947, 0.7853982
    %vm949 = vcmp.lt.s32.totalorder %v608, 0
    %v950 = vand.u32 %v608, 2139095040
    %v951 = vshrl.u32 %v950, 23
    %v952 = vsub.s32 %v951, 127
    %v953 = vand.u32 2147483647, %v608
    %v954 = vand.u32 %v953, 8388607
    %v955 = vor.u32 %v954, 8388608
    %v956 = vsub.s32 0, %v955
    %v957 = vadd.s32 %v952, 1
    %vm958 = vcmp.gt.s32.totalorder %v957, 0
    %v959 = vsel %vm958, %v957, 0
    %v960 = vshrl.u32 %v959, 5
    %v961 = vand.u32 %v959, 31
    %v962 = vsub.s32 32, %v961
    %v963 = vshrl.u32 683565275, %v962
    %v964 = vshll.u32 683565275, %v961
    %v965 = vshrl.u32 2475754826, %v962
    %v966 = vor.u32 %v964, %v965
    %v967 = vshll.u32 2475754826, %v961
    %v968 = vshrl.u32 2131351028, %v962
    %v969 = vor.u32 %v967, %v968
    %v970 = vshll.u32 2131351028, %v961
    %v971 = vshrl.u32 2102212464, %v962
    %v972 = vor.u32 %v970, %v971
    %v973 = vshll.u32 2102212464, %v961
    %v974 = vshrl.u32 920167782, %v962
    %v975 = vor.u32 %v973, %v974
    %v976 = vshll.u32 920167782, %v961
    %v977 = vshrl.u32 1326507024, %v962
    %v978 = vor.u32 %v976, %v977
    %vm979 = vcmp.lt.s32.totalorder %v960, 1
    %vm980 = vcmp.lt.s32.totalorder %v960, 2
    %vm981 = vcmp.lt.s32.totalorder %v960, 3
    %vm982 = vcmp.lt.s32.totalorder %v960, 4
    %v983 = vsel %vm979, %v963, %v966
    %v984 = vsel %vm982, %v972, 2102212464
    %v985 = vsel %vm981, %v969, %v984
    %v986 = vsel %vm980, %v983, %v985
    %v987 = vsel %vm979, %v966, %v969
    %v988 = vsel %vm982, %v975, 920167782
    %v989 = vsel %vm981, %v972, %v988
    %v990 = vsel %vm980, %v987, %v989
    %v991 = vsel %vm979, %v969, %v972
    %v992 = vsel %vm982, %v978, 1326507024
    %v993 = vsel %vm981, %v975, %v992
    %v994 = vsel %vm980, %v991, %v993
    %v995 = vshll.u32 %v955, 8
    %v996 = vmul.u32.u64.compose %v995, %v994
    %v997 = vextract.low.u32 %v996
    %v998 = vextract.high.u32 %v996
    %v999 = vmul.u32.u64.compose %v995, %v990
    %v1000 = vextract.low.u32 %v999
    %v1001 = vextract.high.u32 %v999
    %v1002 = vmul.u32 %v995, %v986
    %v1003 = vadd.s32 %v998, %v1000
    %vm1004 = vc.u32 %v998, %v1000
    %v1005 = vadd.s32 %v1001, 1
    %v1006 = vsel %vm1004, %v1005, %v1001
    %v1007 = vadd.s32 %v1002, %v1006
    %v1008 = vadd.s32 %v1007, 536870912
    %v1009 = vshrl.u32 %v1008, 30
    %v1010 = vshll.u32 %v1009, 30
    %v1011 = vsub.s32 %v1007, %v1010
    %vm1012 = vcmp.lt.s32.totalorder %v1011, 0
    %v1013 = vsub.s32 0, %v1011
    %v1014 = vsel %vm1012, %v1013, %v1011
    %v1015 = vclz %v1014
    %v1016 = vsub.s32 %v1015, 2
    %vm1017 = vcmp.gt.s32.totalorder 0, %v1016
    %v1018 = vsel %vm1017, 0, %v1016
    %v1019 = vsub.s32 32, %v1018
    %v1020 = vshll.u32 %v1011, %v1018
    %v1021 = vshrl.u32 %v1003, %v1019
    %v1022 = vor.u32 %v1020, %v1021
    %v1023 = vsub.s32 4294967266, %v1018
    %v1024 = vadd.s32 %v1023, 127
    %v1025 = vshll.u32 %v1024, 23
    %v1026 = vor.u32 4788187, %v1025
    %v1027 = vand.u32 2147483647, %v1026
    %v1029 = vcvt.s32.f32 %v1022
    %v1030 = vmul.f32 %v1029, %v1027
    %v1031 = vxor.u32 %v1030, 2147483648
    %v1032 = vsel %vm949, %v1031, %v1030
    %v1033 = vsub.s32 4, %v1009
    %v1034 = vsel %vm949, %v1033, %v1009
    %v1035 = vsel %vm948, %v608, %v1032
    %v1036 = vsel %vm948, 0, %v1034
    %v1037 = vcosq.f32.pop %v1035
    %v1038 = vsinq.f32.pop %v1035
    %vm1039 = vweird.f32 %v608
    %v1040 = vadd.s32 %v1036, 3
    %v1041 = vand.u32 %v1040, 3
    %vm1042 = vcmp.lt.s32.totalorder %v1041, 2
    %vm1043 = vcmp.eq.s32.totalorder %v1041, 0
    %v1044 = vxor.u32 %v1038, 2147483648
    %v1045 = vsel %vm1043, %v1037, %v1044
    %vm1046 = vcmp.eq.s32.totalorder %v1041, 2
    %v1047 = vxor.u32 %v1037, 2147483648
    %v1048 = vsel %vm1046, %v1047, %v1038
    %v1049 = vsel %vm1042, %v1045, %v1048
    %v1050 = vsel %vm1039, nan, %v1049
    %v1051 = vmul.f32 %v739, %v631
    %v1052 = vmul.f32 %v842, %v632
    %v1053 = vsub.f32 0.0, %v946
    %v1054 = vsub.f32 0.0, %v1050
    %v1055 = vmul.f32 %v1053, %v635
    %v1056 = vmul.f32 %v1054, %v636
    %v1057 = vmul.f32 %v946, %v631
    %v1058 = vmul.f32 %v1050, %v632
    %v1059 = vmul.f32 %v739, %v635
    %v1060 = vmul.f32 %v842, %v636
    %v1061 = vsub.f32 0.0, %v1059
    %v1062 = vsub.f32 0.0, %v1060
    %1063 = vset.pattern.permute.xlu0 1
    %1064 = vperm.xlu0 %1063, %v527
    %v1065 = vpop.permute.xlu0 %1064
    %1067 = vset.pattern.permute.xlu0 1
    %1068 = vperm.xlu0 %1067, %v528
    %v1069 = vpop.permute.xlu0 %1068
    %v1071 = vmul.f32 %v1061, %v1065
    %v1072 = vmul.f32 %v1062, %v1069
    %1073 = vset.pattern.permute.xlu0 1
    %1074 = vperm.xlu0 %1073, %v531
    %v1075 = vpop.permute.xlu0 %1074
    %1077 = vset.pattern.permute.xlu0 1
    %1078 = vperm.xlu0 %1077, %v532
    %v1079 = vpop.permute.xlu0 %1078
    %v1081 = vmul.f32 %v1057, %v1075
    %v1082 = vmul.f32 %v1058, %v1079
    %v1083 = vsub.f32 %v1071, %v1081
    %v1084 = vsub.f32 %v1072, %v1082
    %v1085 = vmul.f32 %v1061, %v1075
    %v1086 = vmul.f32 %v1062, %v1079
    %v1087 = vmul.f32 %v1057, %v1065
    %v1088 = vmul.f32 %v1058, %v1069
    %v1089 = vadd.f32 %v1085, %v1087
    %v1090 = vadd.f32 %v1086, %v1088
    %1091 = vset.pattern.permute.xlu0 1
    %1092 = vperm.xlu0 %1091, %v34
    %v1093 = vpop.permute.xlu0 %1092
    %1095 = vset.pattern.permute.xlu0 1
    %1096 = vperm.xlu0 %1095, %v35
    %v1097 = vpop.permute.xlu0 %1096
    %v1099 = vmul.f32 %v1061, %v1093
    %v1100 = vmul.f32 %v1062, %v1097
    %1101 = vset.pattern.permute.xlu0 1
    %1102 = vperm.xlu0 %1101, %v36
    %v1103 = vpop.permute.xlu0 %1102
    %1105 = vset.pattern.permute.xlu0 1
    %1106 = vperm.xlu0 %1105, %v37
    %v1107 = vpop.permute.xlu0 %1106
    %v1109 = vmul.f32 %v1057, %v1103
    %v1110 = vmul.f32 %v1058, %v1107
    %v1111 = vsub.f32 %v1099, %v1109
    %v1112 = vsub.f32 %v1100, %v1110
    %v1113 = vmul.f32 %v1061, %v1103
    %v1114 = vmul.f32 %v1062, %v1107
    %v1115 = vmul.f32 %v1057, %v1093
    %v1116 = vmul.f32 %v1058, %v1097
    %v1117 = vadd.f32 %v1113, %v1115
    %v1118 = vadd.f32 %v1114, %v1116
    %1121 = vrot.lane.b32.xlu0 %v38, 127
    %v1122 = vpop.permute.xlu0 %1121
    %1123 = vrot.lane.b32.xlu0 %v39, 127
    %v1124 = vpop.permute.xlu0 %1123
    %v1127 = vadd.f32 %v38, %v1122
    %v1128 = vadd.f32 %v39, %v1124
    %v1129 = vmul.f32 %v507, %v1051
    %v1130 = vmul.f32 %v508, %v1052
    %v1131 = vmul.f32 %v511, %v1055
    %v1132 = vmul.f32 %v512, %v1056
    %v1133 = vsub.f32 %v1129, %v1131
    %v1134 = vsub.f32 %v1130, %v1132
    %v1135 = vmul.f32 %v507, %v1055
    %v1136 = vmul.f32 %v508, %v1056
    %v1137 = vmul.f32 %v511, %v1051
    %v1138 = vmul.f32 %v512, %v1052
    %v1139 = vadd.f32 %v1135, %v1137
    %v1140 = vadd.f32 %v1136, %v1138
    %v1141 = vmul.f32 %v559, %v1111
    %v1142 = vmul.f32 %v560, %v1112
    %v1143 = vmul.f32 %v565, %v1117
    %v1144 = vmul.f32 %v566, %v1118
    %v1145 = vsub.f32 %v1141, %v1143
    %v1146 = vsub.f32 %v1142, %v1144
    %v1147 = vmul.f32 %v559, %v1117
    %v1148 = vmul.f32 %v560, %v1118
    %v1149 = vmul.f32 %v565, %v1111
    %v1150 = vmul.f32 %v566, %v1112
    %v1151 = vadd.f32 %v1147, %v1149
    %v1152 = vadd.f32 %v1148, %v1150
    %v1153 = vmul.f32 %v507, %v1083
    %v1154 = vmul.f32 %v508, %v1084
    %v1155 = vmul.f32 %v511, %v1089
    %v1156 = vmul.f32 %v512, %v1090
    %v1157 = vsub.f32 %v1153, %v1155
    %v1158 = vsub.f32 %v1154, %v1156
    %v1159 = vmul.f32 %v507, %v1089
    %v1160 = vmul.f32 %v508, %v1090
    %v1161 = vmul.f32 %v511, %v1083
    %v1162 = vmul.f32 %v512, %v1084
    %v1163 = vadd.f32 %v1159, %v1161
    %v1164 = vadd.f32 %v1160, %v1162
    %v1165 = vmul.f32 %v559, %v1051
    %v1166 = vmul.f32 %v560, %v1052
    %v1167 = vmul.f32 %v565, %v1055
    %v1168 = vmul.f32 %v566, %v1056
    %v1169 = vsub.f32 %v1165, %v1167
    %v1170 = vsub.f32 %v1166, %v1168
    %v1171 = vmul.f32 %v559, %v1055
    %v1172 = vmul.f32 %v560, %v1056
    %v1173 = vmul.f32 %v565, %v1051
    %v1174 = vmul.f32 %v566, %v1052
    %v1175 = vadd.f32 %v1171, %v1173
    %v1176 = vadd.f32 %v1172, %v1174
    %v1177 = vadd.f32 %v1133, %v1145
    %v1178 = vadd.f32 %v1134, %v1146
    %v1179 = vadd.f32 %v1139, %v1151
    %v1180 = vadd.f32 %v1140, %v1152
    %v1181 = vadd.f32 %v1157, %v1169
    %v1182 = vadd.f32 %v1158, %v1170
    %v1183 = vadd.f32 %v1163, %v1175
    %v1184 = vadd.f32 %v1164, %v1176
    %v1185 = vmul.f32 %v591, %v1051
    %v1186 = vmul.f32 %v592, %v1052
    %v1187 = vmul.f32 %v597, %v1055
    %v1188 = vmul.f32 %v598, %v1056
    %v1189 = vsub.f32 %v1185, %v1187
    %v1190 = vsub.f32 %v1186, %v1188
    %v1191 = vmul.f32 %v591, %v1055
    %v1192 = vmul.f32 %v592, %v1056
    %v1193 = vmul.f32 %v597, %v1051
    %v1194 = vmul.f32 %v598, %v1052
    %v1195 = vadd.f32 %v1191, %v1193
    %v1196 = vadd.f32 %v1192, %v1194
    %v1197 = vmul.f32 %v507, %v1111
    %v1198 = vmul.f32 %v508, %v1112
    %v1199 = vmul.f32 %v511, %v1117
    %v1200 = vmul.f32 %v512, %v1118
    %v1201 = vsub.f32 %v1197, %v1199
    %v1202 = vsub.f32 %v1198, %v1200
    %v1203 = vmul.f32 %v507, %v1117
    %v1204 = vmul.f32 %v508, %v1118
    %v1205 = vmul.f32 %v511, %v1111
    %v1206 = vmul.f32 %v512, %v1112
    %v1207 = vadd.f32 %v1203, %v1205
    %v1208 = vadd.f32 %v1204, %v1206
    %v1209 = vmul.f32 %v591, %v1083
    %v1210 = vmul.f32 %v592, %v1084
    %v1211 = vmul.f32 %v597, %v1089
    %v1212 = vmul.f32 %v598, %v1090
    %v1213 = vsub.f32 %v1209, %v1211
    %v1214 = vsub.f32 %v1210, %v1212
    %v1215 = vmul.f32 %v591, %v1089
    %v1216 = vmul.f32 %v592, %v1090
    %v1217 = vmul.f32 %v597, %v1083
    %v1218 = vmul.f32 %v598, %v1084
    %v1219 = vadd.f32 %v1215, %v1217
    %v1220 = vadd.f32 %v1216, %v1218
    %v1221 = vadd.f32 %v1189, %v1201
    %v1222 = vadd.f32 %v1190, %v1202
    %v1223 = vadd.f32 %v1195, %v1207
    %v1224 = vadd.f32 %v1196, %v1208
    %v1225 = vadd.f32 %v1213, %v1133
    %v1226 = vadd.f32 %v1214, %v1134
    %v1227 = vadd.f32 %v1219, %v1139
    %v1228 = vadd.f32 %v1220, %v1140
    %1229 = vset.pattern.permute.xlu0 2
    %1230 = vperm.xlu0 %1229, %v41
    %v1231 = vpop.permute.xlu0 %1230
    %1233 = vset.pattern.permute.xlu0 2
    %1234 = vperm.xlu0 %1233, %v42
    %v1235 = vpop.permute.xlu0 %1234
    %v1237 = vmul.f32 %v47, %v1231
    %v1238 = vmul.f32 %v47, %v1235
    %1239 = vset.pattern.permute.xlu0 2
    %1240 = vperm.xlu0 %1239, %v61
    %v1241 = vpop.permute.xlu0 %1240
    %1243 = vset.pattern.permute.xlu0 2
    %1244 = vperm.xlu0 %1243, %v62
    %v1245 = vpop.permute.xlu0 %1244
    %v1247 = vmul.f32 %v47, %v1241
    %v1248 = vmul.f32 %v47, %v1245
    %v1249 = vmul.f32 %v1247, 1.442695
    %v1250 = vpow.pop %v1249
    %v1251 = vmul.f32 %v1248, 1.442695
    %v1252 = vpow.pop %v1251
    %v1253 = vsub.f32 0.0, %v1247
    %v1254 = vsub.f32 0.0, %v1248
    %v1255 = vmul.f32 %v1253, 1.442695
    %v1256 = vpow.pop %v1255
    %v1257 = vmul.f32 %v1254, 1.442695
    %v1258 = vpow.pop %v1257
    %v1259 = vadd.f32 %v1250, %v1256
    %v1260 = vadd.f32 %v1252, %v1258
    %v1261 = vmul.f32 %v1259, 0.5
    %v1262 = vmul.f32 %v1260, 0.5
    %v1263 = vsub.f32 %v1250, %v1256
    %v1264 = vsub.f32 %v1252, %v1258
    %v1265 = vmul.f32 %v1263, 0.5
    %v1266 = vmul.f32 %v1264, 0.5
    %v1267 = vand.u32 2147483647, %v1237
    %vm1268 = vcmp.le.f32.partialorder %v1267, 0.7853982
    %vm1269 = vcmp.lt.s32.totalorder %v1237, 0
    %v1270 = vand.u32 %v1237, 2139095040
    %v1271 = vshrl.u32 %v1270, 23
    %v1272 = vsub.s32 %v1271, 127
    %v1273 = vand.u32 2147483647, %v1237
    %v1274 = vand.u32 %v1273, 8388607
    %v1275 = vor.u32 %v1274, 8388608
    %v1276 = vsub.s32 0, %v1275
    %v1277 = vadd.s32 %v1272, 1
    %vm1278 = vcmp.gt.s32.totalorder %v1277, 0
    %v1279 = vsel %vm1278, %v1277, 0
    %v1280 = vshrl.u32 %v1279, 5
    %v1281 = vand.u32 %v1279, 31
    %v1282 = vsub.s32 32, %v1281
    %v1283 = vshrl.u32 683565275, %v1282
    %v1284 = vshll.u32 683565275, %v1281
    %v1285 = vshrl.u32 2475754826, %v1282
    %v1286 = vor.u32 %v1284, %v1285
    %v1287 = vshll.u32 2475754826, %v1281
    %v1288 = vshrl.u32 2131351028, %v1282
    %v1289 = vor.u32 %v1287, %v1288
    %v1290 = vshll.u32 2131351028, %v1281
    %v1291 = vshrl.u32 2102212464, %v1282
    %v1292 = vor.u32 %v1290, %v1291
    %v1293 = vshll.u32 2102212464, %v1281
    %v1294 = vshrl.u32 920167782, %v1282
    %v1295 = vor.u32 %v1293, %v1294
    %v1296 = vshll.u32 920167782, %v1281
    %v1297 = vshrl.u32 1326507024, %v1282
    %v1298 = vor.u32 %v1296, %v1297
    %vm1299 = vcmp.lt.s32.totalorder %v1280, 1
    %vm1300 = vcmp.lt.s32.totalorder %v1280, 2
    %vm1301 = vcmp.lt.s32.totalorder %v1280, 3
    %vm1302 = vcmp.lt.s32.totalorder %v1280, 4
    %v1303 = vsel %vm1299, %v1283, %v1286
    %v1304 = vsel %vm1302, %v1292, 2102212464
    %v1305 = vsel %vm1301, %v1289, %v1304
    %v1306 = vsel %vm1300, %v1303, %v1305
    %v1307 = vsel %vm1299, %v1286, %v1289
    %v1308 = vsel %vm1302, %v1295, 920167782
    %v1309 = vsel %vm1301, %v1292, %v1308
    %v1310 = vsel %vm1300, %v1307, %v1309
    %v1311 = vsel %vm1299, %v1289, %v1292
    %v1312 = vsel %vm1302, %v1298, 1326507024
    %v1313 = vsel %vm1301, %v1295, %v1312
    %v1314 = vsel %vm1300, %v1311, %v1313
    %v1315 = vshll.u32 %v1275, 8
    %v1316 = vmul.u32.u64.compose %v1315, %v1314
    %v1317 = vextract.low.u32 %v1316
    %v1318 = vextract.high.u32 %v1316
    %v1319 = vmul.u32.u64.compose %v1315, %v1310
    %v1320 = vextract.low.u32 %v1319
    %v1321 = vextract.high.u32 %v1319
    %v1322 = vmul.u32 %v1315, %v1306
    %v1323 = vadd.s32 %v1318, %v1320
    %vm1324 = vc.u32 %v1318, %v1320
    %v1325 = vadd.s32 %v1321, 1
    %v1326 = vsel %vm1324, %v1325, %v1321
    %v1327 = vadd.s32 %v1322, %v1326
    %v1328 = vadd.s32 %v1327, 536870912
    %v1329 = vshrl.u32 %v1328, 30
    %v1330 = vshll.u32 %v1329, 30
    %v1331 = vsub.s32 %v1327, %v1330
    %vm1332 = vcmp.lt.s32.totalorder %v1331, 0
    %v1333 = vsub.s32 0, %v1331
    %v1334 = vsel %vm1332, %v1333, %v1331
    %v1335 = vclz %v1334
    %v1336 = vsub.s32 %v1335, 2
    %vm1337 = vcmp.gt.s32.totalorder 0, %v1336
    %v1338 = vsel %vm1337, 0, %v1336
    %v1339 = vsub.s32 32, %v1338
    %v1340 = vshll.u32 %v1331, %v1338
    %v1341 = vshrl.u32 %v1323, %v1339
    %v1342 = vor.u32 %v1340, %v1341
    %v1343 = vsub.s32 4294967266, %v1338
    %v1344 = vadd.s32 %v1343, 127
    %v1345 = vshll.u32 %v1344, 23
    %v1346 = vor.u32 4788187, %v1345
    %v1347 = vand.u32 2147483647, %v1346
    %v1349 = vcvt.s32.f32 %v1342
    %v1350 = vmul.f32 %v1349, %v1347
    %v1351 = vxor.u32 %v1350, 2147483648
    %v1352 = vsel %vm1269, %v1351, %v1350
    %v1353 = vsub.s32 4, %v1329
    %v1354 = vsel %vm1269, %v1353, %v1329
    %v1355 = vsel %vm1268, %v1237, %v1352
    %v1356 = vsel %vm1268, 0, %v1354
    %v1357 = vcosq.f32.pop %v1355
    %v1358 = vsinq.f32.pop %v1355
    %vm1359 = vweird.f32 %v1237
    %v1360 = vand.u32 %v1356, 3
    %vm1361 = vcmp.lt.s32.totalorder %v1360, 2
    %vm1362 = vcmp.eq.s32.totalorder %v1360, 0
    %v1363 = vxor.u32 %v1358, 2147483648
    %v1364 = vsel %vm1362, %v1357, %v1363
    %vm1365 = vcmp.eq.s32.totalorder %v1360, 2
    %v1366 = vxor.u32 %v1357, 2147483648
    %v1367 = vsel %vm1365, %v1366, %v1358
    %v1368 = vsel %vm1361, %v1364, %v1367
    %v1369 = vsel %vm1359, nan, %v1368
    %v1370 = vand.u32 2147483647, %v1238
    %vm1371 = vcmp.le.f32.partialorder %v1370, 0.7853982
    %vm1372 = vcmp.lt.s32.totalorder %v1238, 0
    %v1373 = vand.u32 %v1238, 2139095040
    %v1374 = vshrl.u32 %v1373, 23
    %v1375 = vsub.s32 %v1374, 127
    %v1376 = vand.u32 2147483647, %v1238
    %v1377 = vand.u32 %v1376, 8388607
    %v1378 = vor.u32 %v1377, 8388608
    %v1379 = vsub.s32 0, %v1378
    %v1380 = vadd.s32 %v1375, 1
    %vm1381 = vcmp.gt.s32.totalorder %v1380, 0
    %v1382 = vsel %vm1381, %v1380, 0
    %v1383 = vshrl.u32 %v1382, 5
    %v1384 = vand.u32 %v1382, 31
    %v1385 = vsub.s32 32, %v1384
    %v1386 = vshrl.u32 683565275, %v1385
    %v1387 = vshll.u32 683565275, %v1384
    %v1388 = vshrl.u32 2475754826, %v1385
    %v1389 = vor.u32 %v1387, %v1388
    %v1390 = vshll.u32 2475754826, %v1384
    %v1391 = vshrl.u32 2131351028, %v1385
    %v1392 = vor.u32 %v1390, %v1391
    %v1393 = vshll.u32 2131351028, %v1384
    %v1394 = vshrl.u32 2102212464, %v1385
    %v1395 = vor.u32 %v1393, %v1394
    %v1396 = vshll.u32 2102212464, %v1384
    %v1397 = vshrl.u32 920167782, %v1385
    %v1398 = vor.u32 %v1396, %v1397
    %v1399 = vshll.u32 920167782, %v1384
    %v1400 = vshrl.u32 1326507024, %v1385
    %v1401 = vor.u32 %v1399, %v1400
    %vm1402 = vcmp.lt.s32.totalorder %v1383, 1
    %vm1403 = vcmp.lt.s32.totalorder %v1383, 2
    %vm1404 = vcmp.lt.s32.totalorder %v1383, 3
    %vm1405 = vcmp.lt.s32.totalorder %v1383, 4
    %v1406 = vsel %vm1402, %v1386, %v1389
    %v1407 = vsel %vm1405, %v1395, 2102212464
    %v1408 = vsel %vm1404, %v1392, %v1407
    %v1409 = vsel %vm1403, %v1406, %v1408
    %v1410 = vsel %vm1402, %v1389, %v1392
    %v1411 = vsel %vm1405, %v1398, 920167782
    %v1412 = vsel %vm1404, %v1395, %v1411
    %v1413 = vsel %vm1403, %v1410, %v1412
    %v1414 = vsel %vm1402, %v1392, %v1395
    %v1415 = vsel %vm1405, %v1401, 1326507024
    %v1416 = vsel %vm1404, %v1398, %v1415
    %v1417 = vsel %vm1403, %v1414, %v1416
    %v1418 = vshll.u32 %v1378, 8
    %v1419 = vmul.u32.u64.compose %v1418, %v1417
    %v1420 = vextract.low.u32 %v1419
    %v1421 = vextract.high.u32 %v1419
    %v1422 = vmul.u32.u64.compose %v1418, %v1413
    %v1423 = vextract.low.u32 %v1422
    %v1424 = vextract.high.u32 %v1422
    %v1425 = vmul.u32 %v1418, %v1409
    %v1426 = vadd.s32 %v1421, %v1423
    %vm1427 = vc.u32 %v1421, %v1423
    %v1428 = vadd.s32 %v1424, 1
    %v1429 = vsel %vm1427, %v1428, %v1424
    %v1430 = vadd.s32 %v1425, %v1429
    %v1431 = vadd.s32 %v1430, 536870912
    %v1432 = vshrl.u32 %v1431, 30
    %v1433 = vshll.u32 %v1432, 30
    %v1434 = vsub.s32 %v1430, %v1433
    %vm1435 = vcmp.lt.s32.totalorder %v1434, 0
    %v1436 = vsub.s32 0, %v1434
    %v1437 = vsel %vm1435, %v1436, %v1434
    %v1438 = vclz %v1437
    %v1439 = vsub.s32 %v1438, 2
    %vm1440 = vcmp.gt.s32.totalorder 0, %v1439
    %v1441 = vsel %vm1440, 0, %v1439
    %v1442 = vsub.s32 32, %v1441
    %v1443 = vshll.u32 %v1434, %v1441
    %v1444 = vshrl.u32 %v1426, %v1442
    %v1445 = vor.u32 %v1443, %v1444
    %v1446 = vsub.s32 4294967266, %v1441
    %v1447 = vadd.s32 %v1446, 127
    %v1448 = vshll.u32 %v1447, 23
    %v1449 = vor.u32 4788187, %v1448
    %v1450 = vand.u32 2147483647, %v1449
    %v1452 = vcvt.s32.f32 %v1445
    %v1453 = vmul.f32 %v1452, %v1450
    %v1454 = vxor.u32 %v1453, 2147483648
    %v1455 = vsel %vm1372, %v1454, %v1453
    %v1456 = vsub.s32 4, %v1432
    %v1457 = vsel %vm1372, %v1456, %v1432
    %v1458 = vsel %vm1371, %v1238, %v1455
    %v1459 = vsel %vm1371, 0, %v1457
    %v1460 = vcosq.f32.pop %v1458
    %v1461 = vsinq.f32.pop %v1458
    %vm1462 = vweird.f32 %v1238
    %v1463 = vand.u32 %v1459, 3
    %vm1464 = vcmp.lt.s32.totalorder %v1463, 2
    %vm1465 = vcmp.eq.s32.totalorder %v1463, 0
    %v1466 = vxor.u32 %v1461, 2147483648
    %v1467 = vsel %vm1465, %v1460, %v1466
    %vm1468 = vcmp.eq.s32.totalorder %v1463, 2
    %v1469 = vxor.u32 %v1460, 2147483648
    %v1470 = vsel %vm1468, %v1469, %v1461
    %v1471 = vsel %vm1464, %v1467, %v1470
    %v1472 = vsel %vm1462, nan, %v1471
    %v1473 = vand.u32 2147483647, %v1237
    %vm1474 = vcmp.le.f32.partialorder %v1473, 0.7853982
    %vm1475 = vcmp.lt.s32.totalorder %v1237, 0
    %v1476 = vand.u32 %v1237, 2139095040
    %v1477 = vshrl.u32 %v1476, 23
    %v1478 = vsub.s32 %v1477, 127
    %v1479 = vand.u32 2147483647, %v1237
    %v1480 = vand.u32 %v1479, 8388607
    %v1481 = vor.u32 %v1480, 8388608
    %v1482 = vsub.s32 0, %v1481
    %v1483 = vadd.s32 %v1478, 1
    %vm1484 = vcmp.gt.s32.totalorder %v1483, 0
    %v1485 = vsel %vm1484, %v1483, 0
    %v1486 = vshrl.u32 %v1485, 5
    %v1487 = vand.u32 %v1485, 31
    %v1488 = vsub.s32 32, %v1487
    %v1489 = vshrl.u32 683565275, %v1488
    %v1490 = vshll.u32 683565275, %v1487
    %v1491 = vshrl.u32 2475754826, %v1488
    %v1492 = vor.u32 %v1490, %v1491
    %v1493 = vshll.u32 2475754826, %v1487
    %v1494 = vshrl.u32 2131351028, %v1488
    %v1495 = vor.u32 %v1493, %v1494
    %v1496 = vshll.u32 2131351028, %v1487
    %v1497 = vshrl.u32 2102212464, %v1488
    %v1498 = vor.u32 %v1496, %v1497
    %v1499 = vshll.u32 2102212464, %v1487
    %v1500 = vshrl.u32 920167782, %v1488
    %v1501 = vor.u32 %v1499, %v1500
    %v1502 = vshll.u32 920167782, %v1487
    %v1503 = vshrl.u32 1326507024, %v1488
    %v1504 = vor.u32 %v1502, %v1503
    %vm1505 = vcmp.lt.s32.totalorder %v1486, 1
    %vm1506 = vcmp.lt.s32.totalorder %v1486, 2
    %vm1507 = vcmp.lt.s32.totalorder %v1486, 3
    %vm1508 = vcmp.lt.s32.totalorder %v1486, 4
    %v1509 = vsel %vm1505, %v1489, %v1492
    %v1510 = vsel %vm1508, %v1498, 2102212464
    %v1511 = vsel %vm1507, %v1495, %v1510
    %v1512 = vsel %vm1506, %v1509, %v1511
    %v1513 = vsel %vm1505, %v1492, %v1495
    %v1514 = vsel %vm1508, %v1501, 920167782
    %v1515 = vsel %vm1507, %v1498, %v1514
    %v1516 = vsel %vm1506, %v1513, %v1515
    %v1517 = vsel %vm1505, %v1495, %v1498
    %v1518 = vsel %vm1508, %v1504, 1326507024
    %v1519 = vsel %vm1507, %v1501, %v1518
    %v1520 = vsel %vm1506, %v1517, %v1519
    %v1521 = vshll.u32 %v1481, 8
    %v1522 = vmul.u32.u64.compose %v1521, %v1520
    %v1523 = vextract.low.u32 %v1522
    %v1524 = vextract.high.u32 %v1522
    %v1525 = vmul.u32.u64.compose %v1521, %v1516
    %v1526 = vextract.low.u32 %v1525
    %v1527 = vextract.high.u32 %v1525
    %v1528 = vmul.u32 %v1521, %v1512
    %v1529 = vadd.s32 %v1524, %v1526
    %vm1530 = vc.u32 %v1524, %v1526
    %v1531 = vadd.s32 %v1527, 1
    %v1532 = vsel %vm1530, %v1531, %v1527
    %v1533 = vadd.s32 %v1528, %v1532
    %v1534 = vadd.s32 %v1533, 536870912
    %v1535 = vshrl.u32 %v1534, 30
    %v1536 = vshll.u32 %v1535, 30
    %v1537 = vsub.s32 %v1533, %v1536
    %vm1538 = vcmp.lt.s32.totalorder %v1537, 0
    %v1539 = vsub.s32 0, %v1537
    %v1540 = vsel %vm1538, %v1539, %v1537
    %v1541 = vclz %v1540
    %v1542 = vsub.s32 %v1541, 2
    %vm1543 = vcmp.gt.s32.totalorder 0, %v1542
    %v1544 = vsel %vm1543, 0, %v1542
    %v1545 = vsub.s32 32, %v1544
    %v1546 = vshll.u32 %v1537, %v1544
    %v1547 = vshrl.u32 %v1529, %v1545
    %v1548 = vor.u32 %v1546, %v1547
    %v1549 = vsub.s32 4294967266, %v1544
    %v1550 = vadd.s32 %v1549, 127
    %v1551 = vshll.u32 %v1550, 23
    %v1552 = vor.u32 4788187, %v1551
    %v1553 = vand.u32 2147483647, %v1552
    %v1555 = vcvt.s32.f32 %v1548
    %v1556 = vmul.f32 %v1555, %v1553
    %v1557 = vxor.u32 %v1556, 2147483648
    %v1558 = vsel %vm1475, %v1557, %v1556
    %v1559 = vsub.s32 4, %v1535
    %v1560 = vsel %vm1475, %v1559, %v1535
    %v1561 = vsel %vm1474, %v1237, %v1558
    %v1562 = vsel %vm1474, 0, %v1560
    %v1563 = vcosq.f32.pop %v1561
    %v1564 = vsinq.f32.pop %v1561
    %vm1565 = vweird.f32 %v1237
    %v1566 = vadd.s32 %v1562, 3
    %v1567 = vand.u32 %v1566, 3
    %vm1568 = vcmp.lt.s32.totalorder %v1567, 2
    %vm1569 = vcmp.eq.s32.totalorder %v1567, 0
    %v1570 = vxor.u32 %v1564, 2147483648
    %v1571 = vsel %vm1569, %v1563, %v1570
    %vm1572 = vcmp.eq.s32.totalorder %v1567, 2
    %v1573 = vxor.u32 %v1563, 2147483648
    %v1574 = vsel %vm1572, %v1573, %v1564
    %v1575 = vsel %vm1568, %v1571, %v1574
    %v1576 = vsel %vm1565, nan, %v1575
    %v1577 = vand.u32 2147483647, %v1238
    %vm1578 = vcmp.le.f32.partialorder %v1577, 0.7853982
    %vm1579 = vcmp.lt.s32.totalorder %v1238, 0
    %v1580 = vand.u32 %v1238, 2139095040
    %v1581 = vshrl.u32 %v1580, 23
    %v1582 = vsub.s32 %v1581, 127
    %v1583 = vand.u32 2147483647, %v1238
    %v1584 = vand.u32 %v1583, 8388607
    %v1585 = vor.u32 %v1584, 8388608
    %v1586 = vsub.s32 0, %v1585
    %v1587 = vadd.s32 %v1582, 1
    %vm1588 = vcmp.gt.s32.totalorder %v1587, 0
    %v1589 = vsel %vm1588, %v1587, 0
    %v1590 = vshrl.u32 %v1589, 5
    %v1591 = vand.u32 %v1589, 31
    %v1592 = vsub.s32 32, %v1591
    %v1593 = vshrl.u32 683565275, %v1592
    %v1594 = vshll.u32 683565275, %v1591
    %v1595 = vshrl.u32 2475754826, %v1592
    %v1596 = vor.u32 %v1594, %v1595
    %v1597 = vshll.u32 2475754826, %v1591
    %v1598 = vshrl.u32 2131351028, %v1592
    %v1599 = vor.u32 %v1597, %v1598
    %v1600 = vshll.u32 2131351028, %v1591
    %v1601 = vshrl.u32 2102212464, %v1592
    %v1602 = vor.u32 %v1600, %v1601
    %v1603 = vshll.u32 2102212464, %v1591
    %v1604 = vshrl.u32 920167782, %v1592
    %v1605 = vor.u32 %v1603, %v1604
    %v1606 = vshll.u32 920167782, %v1591
    %v1607 = vshrl.u32 1326507024, %v1592
    %v1608 = vor.u32 %v1606, %v1607
    %vm1609 = vcmp.lt.s32.totalorder %v1590, 1
    %vm1610 = vcmp.lt.s32.totalorder %v1590, 2
    %vm1611 = vcmp.lt.s32.totalorder %v1590, 3
    %vm1612 = vcmp.lt.s32.totalorder %v1590, 4
    %v1613 = vsel %vm1609, %v1593, %v1596
    %v1614 = vsel %vm1612, %v1602, 2102212464
    %v1615 = vsel %vm1611, %v1599, %v1614
    %v1616 = vsel %vm1610, %v1613, %v1615
    %v1617 = vsel %vm1609, %v1596, %v1599
    %v1618 = vsel %vm1612, %v1605, 920167782
    %v1619 = vsel %vm1611, %v1602, %v1618
    %v1620 = vsel %vm1610, %v1617, %v1619
    %v1621 = vsel %vm1609, %v1599, %v1602
    %v1622 = vsel %vm1612, %v1608, 1326507024
    %v1623 = vsel %vm1611, %v1605, %v1622
    %v1624 = vsel %vm1610, %v1621, %v1623
    %v1625 = vshll.u32 %v1585, 8
    %v1626 = vmul.u32.u64.compose %v1625, %v1624
    %v1627 = vextract.low.u32 %v1626
    %v1628 = vextract.high.u32 %v1626
    %v1629 = vmul.u32.u64.compose %v1625, %v1620
    %v1630 = vextract.low.u32 %v1629
    %v1631 = vextract.high.u32 %v1629
    %v1632 = vmul.u32 %v1625, %v1616
    %v1633 = vadd.s32 %v1628, %v1630
    %vm1634 = vc.u32 %v1628, %v1630
    %v1635 = vadd.s32 %v1631, 1
    %v1636 = vsel %vm1634, %v1635, %v1631
    %v1637 = vadd.s32 %v1632, %v1636
    %v1638 = vadd.s32 %v1637, 536870912
    %v1639 = vshrl.u32 %v1638, 30
    %v1640 = vshll.u32 %v1639, 30
    %v1641 = vsub.s32 %v1637, %v1640
    %vm1642 = vcmp.lt.s32.totalorder %v1641, 0
    %v1643 = vsub.s32 0, %v1641
    %v1644 = vsel %vm1642, %v1643, %v1641
    %v1645 = vclz %v1644
    %v1646 = vsub.s32 %v1645, 2
    %vm1647 = vcmp.gt.s32.totalorder 0, %v1646
    %v1648 = vsel %vm1647, 0, %v1646
    %v1649 = vsub.s32 32, %v1648
    %v1650 = vshll.u32 %v1641, %v1648
    %v1651 = vshrl.u32 %v1633, %v1649
    %v1652 = vor.u32 %v1650, %v1651
    %v1653 = vsub.s32 4294967266, %v1648
    %v1654 = vadd.s32 %v1653, 127
    %v1655 = vshll.u32 %v1654, 23
    %v1656 = vor.u32 4788187, %v1655
    %v1657 = vand.u32 2147483647, %v1656
    %v1659 = vcvt.s32.f32 %v1652
    %v1660 = vmul.f32 %v1659, %v1657
    %v1661 = vxor.u32 %v1660, 2147483648
    %v1662 = vsel %vm1579, %v1661, %v1660
    %v1663 = vsub.s32 4, %v1639
    %v1664 = vsel %vm1579, %v1663, %v1639
    %v1665 = vsel %vm1578, %v1238, %v1662
    %v1666 = vsel %vm1578, 0, %v1664
    %v1667 = vcosq.f32.pop %v1665
    %v1668 = vsinq.f32.pop %v1665
    %vm1669 = vweird.f32 %v1238
    %v1670 = vadd.s32 %v1666, 3
    %v1671 = vand.u32 %v1670, 3
    %vm1672 = vcmp.lt.s32.totalorder %v1671, 2
    %vm1673 = vcmp.eq.s32.totalorder %v1671, 0
    %v1674 = vxor.u32 %v1668, 2147483648
    %v1675 = vsel %vm1673, %v1667, %v1674
    %vm1676 = vcmp.eq.s32.totalorder %v1671, 2
    %v1677 = vxor.u32 %v1667, 2147483648
    %v1678 = vsel %vm1676, %v1677, %v1668
    %v1679 = vsel %vm1672, %v1675, %v1678
    %v1680 = vsel %vm1669, nan, %v1679
    %v1681 = vmul.f32 %v1369, %v1261
    %v1682 = vmul.f32 %v1472, %v1262
    %v1683 = vsub.f32 0.0, %v1576
    %v1684 = vsub.f32 0.0, %v1680
    %v1685 = vmul.f32 %v1683, %v1265
    %v1686 = vmul.f32 %v1684, %v1266
    %v1687 = vmul.f32 %v1576, %v1261
    %v1688 = vmul.f32 %v1680, %v1262
    %v1689 = vmul.f32 %v1369, %v1265
    %v1690 = vmul.f32 %v1472, %v1266
    %v1691 = vsub.f32 0.0, %v1689
    %v1692 = vsub.f32 0.0, %v1690
    %1693 = vset.pattern.permute.xlu0 2
    %1694 = vperm.xlu0 %1693, %v527
    %v1695 = vpop.permute.xlu0 %1694
    %1697 = vset.pattern.permute.xlu0 2
    %1698 = vperm.xlu0 %1697, %v528
    %v1699 = vpop.permute.xlu0 %1698
    %v1701 = vmul.f32 %v1691, %v1695
    %v1702 = vmul.f32 %v1692, %v1699
    %1703 = vset.pattern.permute.xlu0 2
    %1704 = vperm.xlu0 %1703, %v531
    %v1705 = vpop.permute.xlu0 %1704
    %1707 = vset.pattern.permute.xlu0 2
    %1708 = vperm.xlu0 %1707, %v532
    %v1709 = vpop.permute.xlu0 %1708
    %v1711 = vmul.f32 %v1687, %v1705
    %v1712 = vmul.f32 %v1688, %v1709
    %v1713 = vsub.f32 %v1701, %v1711
    %v1714 = vsub.f32 %v1702, %v1712
    %v1715 = vmul.f32 %v1691, %v1705
    %v1716 = vmul.f32 %v1692, %v1709
    %v1717 = vmul.f32 %v1687, %v1695
    %v1718 = vmul.f32 %v1688, %v1699
    %v1719 = vadd.f32 %v1715, %v1717
    %v1720 = vadd.f32 %v1716, %v1718
    %1721 = vset.pattern.permute.xlu0 2
    %1722 = vperm.xlu0 %1721, %v34
    %v1723 = vpop.permute.xlu0 %1722
    %1725 = vset.pattern.permute.xlu0 2
    %1726 = vperm.xlu0 %1725, %v35
    %v1727 = vpop.permute.xlu0 %1726
    %v1729 = vmul.f32 %v1691, %v1723
    %v1730 = vmul.f32 %v1692, %v1727
    %1731 = vset.pattern.permute.xlu0 2
    %1732 = vperm.xlu0 %1731, %v36
    %v1733 = vpop.permute.xlu0 %1732
    %1735 = vset.pattern.permute.xlu0 2
    %1736 = vperm.xlu0 %1735, %v37
    %v1737 = vpop.permute.xlu0 %1736
    %v1739 = vmul.f32 %v1687, %v1733
    %v1740 = vmul.f32 %v1688, %v1737
    %v1741 = vsub.f32 %v1729, %v1739
    %v1742 = vsub.f32 %v1730, %v1740
    %v1743 = vmul.f32 %v1691, %v1733
    %v1744 = vmul.f32 %v1692, %v1737
    %v1745 = vmul.f32 %v1687, %v1723
    %v1746 = vmul.f32 %v1688, %v1727
    %v1747 = vadd.f32 %v1743, %v1745
    %v1748 = vadd.f32 %v1744, %v1746
    %1749 = vrot.lane.b32.xlu0 %v38, 126
    %v1750 = vpop.permute.xlu0 %1749
    %1751 = vrot.lane.b32.xlu0 %v39, 126
    %v1752 = vpop.permute.xlu0 %1751
    %v1755 = vadd.f32 %v1127, %v1750
    %v1756 = vadd.f32 %v1128, %v1752
    %v1757 = vmul.f32 %v1177, %v1681
    %v1758 = vmul.f32 %v1178, %v1682
    %v1759 = vmul.f32 %v1179, %v1685
    %v1760 = vmul.f32 %v1180, %v1686
    %v1761 = vsub.f32 %v1757, %v1759
    %v1762 = vsub.f32 %v1758, %v1760
    %v1763 = vmul.f32 %v1177, %v1685
    %v1764 = vmul.f32 %v1178, %v1686
    %v1765 = vmul.f32 %v1179, %v1681
    %v1766 = vmul.f32 %v1180, %v1682
    %v1767 = vadd.f32 %v1763, %v1765
    %v1768 = vadd.f32 %v1764, %v1766
    %v1769 = vmul.f32 %v1181, %v1741
    %v1770 = vmul.f32 %v1182, %v1742
    %v1771 = vmul.f32 %v1183, %v1747
    %v1772 = vmul.f32 %v1184, %v1748
    %v1773 = vsub.f32 %v1769, %v1771
    %v1774 = vsub.f32 %v1770, %v1772
    %v1775 = vmul.f32 %v1181, %v1747
    %v1776 = vmul.f32 %v1182, %v1748
    %v1777 = vmul.f32 %v1183, %v1741
    %v1778 = vmul.f32 %v1184, %v1742
    %v1779 = vadd.f32 %v1775, %v1777
    %v1780 = vadd.f32 %v1776, %v1778
    %v1781 = vmul.f32 %v1177, %v1713
    %v1782 = vmul.f32 %v1178, %v1714
    %v1783 = vmul.f32 %v1179, %v1719
    %v1784 = vmul.f32 %v1180, %v1720
    %v1785 = vsub.f32 %v1781, %v1783
    %v1786 = vsub.f32 %v1782, %v1784
    %v1787 = vmul.f32 %v1177, %v1719
    %v1788 = vmul.f32 %v1178, %v1720
    %v1789 = vmul.f32 %v1179, %v1713
    %v1790 = vmul.f32 %v1180, %v1714
    %v1791 = vadd.f32 %v1787, %v1789
    %v1792 = vadd.f32 %v1788, %v1790
    %v1793 = vmul.f32 %v1181, %v1681
    %v1794 = vmul.f32 %v1182, %v1682
    %v1795 = vmul.f32 %v1183, %v1685
    %v1796 = vmul.f32 %v1184, %v1686
    %v1797 = vsub.f32 %v1793, %v1795
    %v1798 = vsub.f32 %v1794, %v1796
    %v1799 = vmul.f32 %v1181, %v1685
    %v1800 = vmul.f32 %v1182, %v1686
    %v1801 = vmul.f32 %v1183, %v1681
    %v1802 = vmul.f32 %v1184, %v1682
    %v1803 = vadd.f32 %v1799, %v1801
    %v1804 = vadd.f32 %v1800, %v1802
    %v1805 = vadd.f32 %v1761, %v1773
    %v1806 = vadd.f32 %v1762, %v1774
    %v1807 = vadd.f32 %v1767, %v1779
    %v1808 = vadd.f32 %v1768, %v1780
    %v1809 = vadd.f32 %v1785, %v1797
    %v1810 = vadd.f32 %v1786, %v1798
    %v1811 = vadd.f32 %v1791, %v1803
    %v1812 = vadd.f32 %v1792, %v1804
    %v1813 = vmul.f32 %v1221, %v1681
    %v1814 = vmul.f32 %v1222, %v1682
    %v1815 = vmul.f32 %v1223, %v1685
    %v1816 = vmul.f32 %v1224, %v1686
    %v1817 = vsub.f32 %v1813, %v1815
    %v1818 = vsub.f32 %v1814, %v1816
    %v1819 = vmul.f32 %v1221, %v1685
    %v1820 = vmul.f32 %v1222, %v1686
    %v1821 = vmul.f32 %v1223, %v1681
    %v1822 = vmul.f32 %v1224, %v1682
    %v1823 = vadd.f32 %v1819, %v1821
    %v1824 = vadd.f32 %v1820, %v1822
    %v1825 = vmul.f32 %v1225, %v1741
    %v1826 = vmul.f32 %v1226, %v1742
    %v1827 = vmul.f32 %v1227, %v1747
    %v1828 = vmul.f32 %v1228, %v1748
    %v1829 = vsub.f32 %v1825, %v1827
    %v1830 = vsub.f32 %v1826, %v1828
    %v1831 = vmul.f32 %v1225, %v1747
    %v1832 = vmul.f32 %v1226, %v1748
    %v1833 = vmul.f32 %v1227, %v1741
    %v1834 = vmul.f32 %v1228, %v1742
    %v1835 = vadd.f32 %v1831, %v1833
    %v1836 = vadd.f32 %v1832, %v1834
    %v1837 = vmul.f32 %v1221, %v1713
    %v1838 = vmul.f32 %v1222, %v1714
    %v1839 = vmul.f32 %v1223, %v1719
    %v1840 = vmul.f32 %v1224, %v1720
    %v1841 = vsub.f32 %v1837, %v1839
    %v1842 = vsub.f32 %v1838, %v1840
    %v1843 = vmul.f32 %v1221, %v1719
    %v1844 = vmul.f32 %v1222, %v1720
    %v1845 = vmul.f32 %v1223, %v1713
    %v1846 = vmul.f32 %v1224, %v1714
    %v1847 = vadd.f32 %v1843, %v1845
    %v1848 = vadd.f32 %v1844, %v1846
    %v1849 = vmul.f32 %v1225, %v1681
    %v1850 = vmul.f32 %v1226, %v1682
    %v1851 = vmul.f32 %v1227, %v1685
    %v1852 = vmul.f32 %v1228, %v1686
    %v1853 = vsub.f32 %v1849, %v1851
    %v1854 = vsub.f32 %v1850, %v1852
    %v1855 = vmul.f32 %v1225, %v1685
    %v1856 = vmul.f32 %v1226, %v1686
    %v1857 = vmul.f32 %v1227, %v1681
    %v1858 = vmul.f32 %v1228, %v1682
    %v1859 = vadd.f32 %v1855, %v1857
    %v1860 = vadd.f32 %v1856, %v1858
    %v1861 = vadd.f32 %v1817, %v1829
    %v1862 = vadd.f32 %v1818, %v1830
    %v1863 = vadd.f32 %v1823, %v1835
    %v1864 = vadd.f32 %v1824, %v1836
    %v1865 = vadd.f32 %v1841, %v1853
    %v1866 = vadd.f32 %v1842, %v1854
    %v1867 = vadd.f32 %v1847, %v1859
    %v1868 = vadd.f32 %v1848, %v1860
    %v1869 = vadd.f32 %v1805, %v1809
    %v1870 = vadd.f32 %v1806, %v1810
    %v1871 = vadd.f32 %v1869, %v1861
    %v1872 = vadd.f32 %v1870, %v1862
    %v1873 = vadd.f32 %v1871, %v1865
    %v1874 = vadd.f32 %v1872, %v1866
    %v1875 = vadd.f32 %v1807, %v1811
    %v1876 = vadd.f32 %v1808, %v1812
    %v1877 = vadd.f32 %v1875, %v1863
    %v1878 = vadd.f32 %v1876, %v1864
    %v1879 = vadd.f32 %v1877, %v1867
    %v1880 = vadd.f32 %v1878, %v1868
    %v1881 = vsub.f32 %v1805, %v1809
    %v1882 = vsub.f32 %v1806, %v1810
    %v1883 = vsub.f32 %v1881, %v1861
    %v1884 = vsub.f32 %v1882, %v1862
    %v1885 = vadd.f32 %v1883, %v1865
    %v1886 = vadd.f32 %v1884, %v1866
    %v1887 = vsub.f32 %v1807, %v1811
    %v1888 = vsub.f32 %v1808, %v1812
    %v1889 = vsub.f32 %v1887, %v1863
    %v1890 = vsub.f32 %v1888, %v1864
    %v1891 = vadd.f32 %v1889, %v1867
    %v1892 = vadd.f32 %v1890, %v1868
    %v1893 = vmul.f32 %v1873, %v1873
    %v1894 = vmul.f32 %v1874, %v1874
    %v1895 = vmul.f32 %v1879, %v1879
    %v1896 = vmul.f32 %v1880, %v1880
    %v1897 = vadd.f32 %v1893, %v1895
    %v1898 = vadd.f32 %v1894, %v1896
    %v1899 = vrcp.pop %v1897
    %v1900 = vrcp.pop %v1898
    %v1901 = vmul.f32 %v1885, %v1885
    %v1902 = vmul.f32 %v1886, %v1886
    %v1903 = vmul.f32 %v1891, %v1891
    %v1904 = vmul.f32 %v1892, %v1892
    %v1905 = vadd.f32 %v1901, %v1903
    %v1906 = vadd.f32 %v1902, %v1904
    %v1907 = vrcp.pop %v1905
    %v1908 = vrcp.pop %v1906
    %v1909 = vmul.f32 %v1873, 2.0
    %v1910 = vmul.f32 %v1874, 2.0
    %v1911 = vmul.f32 %v1909, %v1899
    %v1912 = vmul.f32 %v1910, %v1900
    %v1913 = vmul.f32 %v1879, -2.0
    %v1914 = vmul.f32 %v1880, -2.0
    %v1915 = vmul.f32 %v1913, %v1899
    %v1916 = vmul.f32 %v1914, %v1900
    %v1917 = vmul.f32 %v1885, 2.0
    %v1918 = vmul.f32 %v1886, 2.0
    %v1919 = vmul.f32 %v1917, %v1907
    %v1920 = vmul.f32 %v1918, %v1908
    %v1921 = vmul.f32 %v1891, -2.0
    %v1922 = vmul.f32 %v1892, -2.0
    %v1923 = vmul.f32 %v1921, %v1907
    %v1924 = vmul.f32 %v1922, %v1908
    %1926 = vset.pattern.permute.xlu0 0
    %1927 = vperm.xlu0 %1926, %v1755
    %v1928 = vpop.permute.xlu0 %1927
    %1931 = vset.pattern.permute.xlu0 0
    %1932 = vperm.xlu0 %1931, %v1756
    %v1933 = vpop.permute.xlu0 %1932
    %v1935 = vmul.f32 %v47, %v1928
    %v1936 = vmul.f32 %v47, %v1933
    %v1937 = vand.u32 2147483647, %v1935
    %vm1938 = vcmp.le.f32.partialorder %v1937, 0.7853982
    %vm1939 = vcmp.lt.s32.totalorder %v1935, 0
    %v1940 = vand.u32 %v1935, 2139095040
    %v1941 = vshrl.u32 %v1940, 23
    %v1942 = vsub.s32 %v1941, 127
    %v1943 = vand.u32 2147483647, %v1935
    %v1944 = vand.u32 %v1943, 8388607
    %v1945 = vor.u32 %v1944, 8388608
    %v1946 = vsub.s32 0, %v1945
    %v1947 = vadd.s32 %v1942, 1
    %vm1948 = vcmp.gt.s32.totalorder %v1947, 0
    %v1949 = vsel %vm1948, %v1947, 0
    %v1950 = vshrl.u32 %v1949, 5
    %v1951 = vand.u32 %v1949, 31
    %v1952 = vsub.s32 32, %v1951
    %v1953 = vshrl.u32 683565275, %v1952
    %v1954 = vshll.u32 683565275, %v1951
    %v1955 = vshrl.u32 2475754826, %v1952
    %v1956 = vor.u32 %v1954, %v1955
    %v1957 = vshll.u32 2475754826, %v1951
    %v1958 = vshrl.u32 2131351028, %v1952
    %v1959 = vor.u32 %v1957, %v1958
    %v1960 = vshll.u32 2131351028, %v1951
    %v1961 = vshrl.u32 2102212464, %v1952
    %v1962 = vor.u32 %v1960, %v1961
    %v1963 = vshll.u32 2102212464, %v1951
    %v1964 = vshrl.u32 920167782, %v1952
    %v1965 = vor.u32 %v1963, %v1964
    %v1966 = vshll.u32 920167782, %v1951
    %v1967 = vshrl.u32 1326507024, %v1952
    %v1968 = vor.u32 %v1966, %v1967
    %vm1969 = vcmp.lt.s32.totalorder %v1950, 1
    %vm1970 = vcmp.lt.s32.totalorder %v1950, 2
    %vm1971 = vcmp.lt.s32.totalorder %v1950, 3
    %vm1972 = vcmp.lt.s32.totalorder %v1950, 4
    %v1973 = vsel %vm1969, %v1953, %v1956
    %v1974 = vsel %vm1972, %v1962, 2102212464
    %v1975 = vsel %vm1971, %v1959, %v1974
    %v1976 = vsel %vm1970, %v1973, %v1975
    %v1977 = vsel %vm1969, %v1956, %v1959
    %v1978 = vsel %vm1972, %v1965, 920167782
    %v1979 = vsel %vm1971, %v1962, %v1978
    %v1980 = vsel %vm1970, %v1977, %v1979
    %v1981 = vsel %vm1969, %v1959, %v1962
    %v1982 = vsel %vm1972, %v1968, 1326507024
    %v1983 = vsel %vm1971, %v1965, %v1982
    %v1984 = vsel %vm1970, %v1981, %v1983
    %v1985 = vshll.u32 %v1945, 8
    %v1986 = vmul.u32.u64.compose %v1985, %v1984
    %v1987 = vextract.low.u32 %v1986
    %v1988 = vextract.high.u32 %v1986
    %v1989 = vmul.u32.u64.compose %v1985, %v1980
    %v1990 = vextract.low.u32 %v1989
    %v1991 = vextract.high.u32 %v1989
    %v1992 = vmul.u32 %v1985, %v1976
    %v1993 = vadd.s32 %v1988, %v1990
    %vm1994 = vc.u32 %v1988, %v1990
    %v1995 = vadd.s32 %v1991, 1
    %v1996 = vsel %vm1994, %v1995, %v1991
    %v1997 = vadd.s32 %v1992, %v1996
    %v1998 = vadd.s32 %v1997, 536870912
    %v1999 = vshrl.u32 %v1998, 30
    %v2000 = vshll.u32 %v1999, 30
    %v2001 = vsub.s32 %v1997, %v2000
    %vm2002 = vcmp.lt.s32.totalorder %v2001, 0
    %v2003 = vsub.s32 0, %v2001
    %v2004 = vsel %vm2002, %v2003, %v2001
    %v2005 = vclz %v2004
    %v2006 = vsub.s32 %v2005, 2
    %vm2007 = vcmp.gt.s32.totalorder 0, %v2006
    %v2008 = vsel %vm2007, 0, %v2006
    %v2009 = vsub.s32 32, %v2008
    %v2010 = vshll.u32 %v2001, %v2008
    %v2011 = vshrl.u32 %v1993, %v2009
    %v2012 = vor.u32 %v2010, %v2011
    %v2013 = vsub.s32 4294967266, %v2008
    %v2014 = vadd.s32 %v2013, 127
    %v2015 = vshll.u32 %v2014, 23
    %v2016 = vor.u32 4788187, %v2015
    %v2017 = vand.u32 2147483647, %v2016
    %v2019 = vcvt.s32.f32 %v2012
    %v2020 = vmul.f32 %v2019, %v2017
    %v2021 = vxor.u32 %v2020, 2147483648
    %v2022 = vsel %vm1939, %v2021, %v2020
    %v2023 = vsub.s32 4, %v1999
    %v2024 = vsel %vm1939, %v2023, %v1999
    %v2025 = vsel %vm1938, %v1935, %v2022
    %v2026 = vsel %vm1938, 0, %v2024
    %v2027 = vcosq.f32.pop %v2025
    %v2028 = vsinq.f32.pop %v2025
    %vm2029 = vweird.f32 %v1935
    %v2030 = vand.u32 %v2026, 3
    %vm2031 = vcmp.lt.s32.totalorder %v2030, 2
    %vm2032 = vcmp.eq.s32.totalorder %v2030, 0
    %v2033 = vxor.u32 %v2028, 2147483648
    %v2034 = vsel %vm2032, %v2027, %v2033
    %vm2035 = vcmp.eq.s32.totalorder %v2030, 2
    %v2036 = vxor.u32 %v2027, 2147483648
    %v2037 = vsel %vm2035, %v2036, %v2028
    %v2038 = vsel %vm2031, %v2034, %v2037
    %v2039 = vsel %vm2029, nan, %v2038
    %v2040 = vand.u32 2147483647, %v1936
    %vm2041 = vcmp.le.f32.partialorder %v2040, 0.7853982
    %vm2042 = vcmp.lt.s32.totalorder %v1936, 0
    %v2043 = vand.u32 %v1936, 2139095040
    %v2044 = vshrl.u32 %v2043, 23
    %v2045 = vsub.s32 %v2044, 127
    %v2046 = vand.u32 2147483647, %v1936
    %v2047 = vand.u32 %v2046, 8388607
    %v2048 = vor.u32 %v2047, 8388608
    %v2049 = vsub.s32 0, %v2048
    %v2050 = vadd.s32 %v2045, 1
    %vm2051 = vcmp.gt.s32.totalorder %v2050, 0
    %v2052 = vsel %vm2051, %v2050, 0
    %v2053 = vshrl.u32 %v2052, 5
    %v2054 = vand.u32 %v2052, 31
    %v2055 = vsub.s32 32, %v2054
    %v2056 = vshrl.u32 683565275, %v2055
    %v2057 = vshll.u32 683565275, %v2054
    %v2058 = vshrl.u32 2475754826, %v2055
    %v2059 = vor.u32 %v2057, %v2058
    %v2060 = vshll.u32 2475754826, %v2054
    %v2061 = vshrl.u32 2131351028, %v2055
    %v2062 = vor.u32 %v2060, %v2061
    %v2063 = vshll.u32 2131351028, %v2054
    %v2064 = vshrl.u32 2102212464, %v2055
    %v2065 = vor.u32 %v2063, %v2064
    %v2066 = vshll.u32 2102212464, %v2054
    %v2067 = vshrl.u32 920167782, %v2055
    %v2068 = vor.u32 %v2066, %v2067
    %v2069 = vshll.u32 920167782, %v2054
    %v2070 = vshrl.u32 1326507024, %v2055
    %v2071 = vor.u32 %v2069, %v2070
    %vm2072 = vcmp.lt.s32.totalorder %v2053, 1
    %vm2073 = vcmp.lt.s32.totalorder %v2053, 2
    %vm2074 = vcmp.lt.s32.totalorder %v2053, 3
    %vm2075 = vcmp.lt.s32.totalorder %v2053, 4
    %v2076 = vsel %vm2072, %v2056, %v2059
    %v2077 = vsel %vm2075, %v2065, 2102212464
    %v2078 = vsel %vm2074, %v2062, %v2077
    %v2079 = vsel %vm2073, %v2076, %v2078
    %v2080 = vsel %vm2072, %v2059, %v2062
    %v2081 = vsel %vm2075, %v2068, 920167782
    %v2082 = vsel %vm2074, %v2065, %v2081
    %v2083 = vsel %vm2073, %v2080, %v2082
    %v2084 = vsel %vm2072, %v2062, %v2065
    %v2085 = vsel %vm2075, %v2071, 1326507024
    %v2086 = vsel %vm2074, %v2068, %v2085
    %v2087 = vsel %vm2073, %v2084, %v2086
    %v2088 = vshll.u32 %v2048, 8
    %v2089 = vmul.u32.u64.compose %v2088, %v2087
    %v2090 = vextract.low.u32 %v2089
    %v2091 = vextract.high.u32 %v2089
    %v2092 = vmul.u32.u64.compose %v2088, %v2083
    %v2093 = vextract.low.u32 %v2092
    %v2094 = vextract.high.u32 %v2092
    %v2095 = vmul.u32 %v2088, %v2079
    %v2096 = vadd.s32 %v2091, %v2093
    %vm2097 = vc.u32 %v2091, %v2093
    %v2098 = vadd.s32 %v2094, 1
    %v2099 = vsel %vm2097, %v2098, %v2094
    %v2100 = vadd.s32 %v2095, %v2099
    %v2101 = vadd.s32 %v2100, 536870912
    %v2102 = vshrl.u32 %v2101, 30
    %v2103 = vshll.u32 %v2102, 30
    %v2104 = vsub.s32 %v2100, %v2103
    %vm2105 = vcmp.lt.s32.totalorder %v2104, 0
    %v2106 = vsub.s32 0, %v2104
    %v2107 = vsel %vm2105, %v2106, %v2104
    %v2108 = vclz %v2107
    %v2109 = vsub.s32 %v2108, 2
    %vm2110 = vcmp.gt.s32.totalorder 0, %v2109
    %v2111 = vsel %vm2110, 0, %v2109
    %v2112 = vsub.s32 32, %v2111
    %v2113 = vshll.u32 %v2104, %v2111
    %v2114 = vshrl.u32 %v2096, %v2112
    %v2115 = vor.u32 %v2113, %v2114
    %v2116 = vsub.s32 4294967266, %v2111
    %v2117 = vadd.s32 %v2116, 127
    %v2118 = vshll.u32 %v2117, 23
    %v2119 = vor.u32 4788187, %v2118
    %v2120 = vand.u32 2147483647, %v2119
    %v2122 = vcvt.s32.f32 %v2115
    %v2123 = vmul.f32 %v2122, %v2120
    %v2124 = vxor.u32 %v2123, 2147483648
    %v2125 = vsel %vm2042, %v2124, %v2123
    %v2126 = vsub.s32 4, %v2102
    %v2127 = vsel %vm2042, %v2126, %v2102
    %v2128 = vsel %vm2041, %v1936, %v2125
    %v2129 = vsel %vm2041, 0, %v2127
    %v2130 = vcosq.f32.pop %v2128
    %v2131 = vsinq.f32.pop %v2128
    %vm2132 = vweird.f32 %v1936
    %v2133 = vand.u32 %v2129, 3
    %vm2134 = vcmp.lt.s32.totalorder %v2133, 2
    %vm2135 = vcmp.eq.s32.totalorder %v2133, 0
    %v2136 = vxor.u32 %v2131, 2147483648
    %v2137 = vsel %vm2135, %v2130, %v2136
    %vm2138 = vcmp.eq.s32.totalorder %v2133, 2
    %v2139 = vxor.u32 %v2130, 2147483648
    %v2140 = vsel %vm2138, %v2139, %v2131
    %v2141 = vsel %vm2134, %v2137, %v2140
    %v2142 = vsel %vm2132, nan, %v2141
    %v2143 = vand.u32 2147483647, %v1935
    %vm2144 = vcmp.le.f32.partialorder %v2143, 0.7853982
    %vm2145 = vcmp.lt.s32.totalorder %v1935, 0
    %v2146 = vand.u32 %v1935, 2139095040
    %v2147 = vshrl.u32 %v2146, 23
    %v2148 = vsub.s32 %v2147, 127
    %v2149 = vand.u32 2147483647, %v1935
    %v2150 = vand.u32 %v2149, 8388607
    %v2151 = vor.u32 %v2150, 8388608
    %v2152 = vsub.s32 0, %v2151
    %v2153 = vadd.s32 %v2148, 1
    %vm2154 = vcmp.gt.s32.totalorder %v2153, 0
    %v2155 = vsel %vm2154, %v2153, 0
    %v2156 = vshrl.u32 %v2155, 5
    %v2157 = vand.u32 %v2155, 31
    %v2158 = vsub.s32 32, %v2157
    %v2159 = vshrl.u32 683565275, %v2158
    %v2160 = vshll.u32 683565275, %v2157
    %v2161 = vshrl.u32 2475754826, %v2158
    %v2162 = vor.u32 %v2160, %v2161
    %v2163 = vshll.u32 2475754826, %v2157
    %v2164 = vshrl.u32 2131351028, %v2158
    %v2165 = vor.u32 %v2163, %v2164
    %v2166 = vshll.u32 2131351028, %v2157
    %v2167 = vshrl.u32 2102212464, %v2158
    %v2168 = vor.u32 %v2166, %v2167
    %v2169 = vshll.u32 2102212464, %v2157
    %v2170 = vshrl.u32 920167782, %v2158
    %v2171 = vor.u32 %v2169, %v2170
    %v2172 = vshll.u32 920167782, %v2157
    %v2173 = vshrl.u32 1326507024, %v2158
    %v2174 = vor.u32 %v2172, %v2173
    %vm2175 = vcmp.lt.s32.totalorder %v2156, 1
    %vm2176 = vcmp.lt.s32.totalorder %v2156, 2
    %vm2177 = vcmp.lt.s32.totalorder %v2156, 3
    %vm2178 = vcmp.lt.s32.totalorder %v2156, 4
    %v2179 = vsel %vm2175, %v2159, %v2162
    %v2180 = vsel %vm2178, %v2168, 2102212464
    %v2181 = vsel %vm2177, %v2165, %v2180
    %v2182 = vsel %vm2176, %v2179, %v2181
    %v2183 = vsel %vm2175, %v2162, %v2165
    %v2184 = vsel %vm2178, %v2171, 920167782
    %v2185 = vsel %vm2177, %v2168, %v2184
    %v2186 = vsel %vm2176, %v2183, %v2185
    %v2187 = vsel %vm2175, %v2165, %v2168
    %v2188 = vsel %vm2178, %v2174, 1326507024
    %v2189 = vsel %vm2177, %v2171, %v2188
    %v2190 = vsel %vm2176, %v2187, %v2189
    %v2191 = vshll.u32 %v2151, 8
    %v2192 = vmul.u32.u64.compose %v2191, %v2190
    %v2193 = vextract.low.u32 %v2192
    %v2194 = vextract.high.u32 %v2192
    %v2195 = vmul.u32.u64.compose %v2191, %v2186
    %v2196 = vextract.low.u32 %v2195
    %v2197 = vextract.high.u32 %v2195
    %v2198 = vmul.u32 %v2191, %v2182
    %v2199 = vadd.s32 %v2194, %v2196
    %vm2200 = vc.u32 %v2194, %v2196
    %v2201 = vadd.s32 %v2197, 1
    %v2202 = vsel %vm2200, %v2201, %v2197
    %v2203 = vadd.s32 %v2198, %v2202
    %v2204 = vadd.s32 %v2203, 536870912
    %v2205 = vshrl.u32 %v2204, 30
    %v2206 = vshll.u32 %v2205, 30
    %v2207 = vsub.s32 %v2203, %v2206
    %vm2208 = vcmp.lt.s32.totalorder %v2207, 0
    %v2209 = vsub.s32 0, %v2207
    %v2210 = vsel %vm2208, %v2209, %v2207
    %v2211 = vclz %v2210
    %v2212 = vsub.s32 %v2211, 2
    %vm2213 = vcmp.gt.s32.totalorder 0, %v2212
    %v2214 = vsel %vm2213, 0, %v2212
    %v2215 = vsub.s32 32, %v2214
    %v2216 = vshll.u32 %v2207, %v2214
    %v2217 = vshrl.u32 %v2199, %v2215
    %v2218 = vor.u32 %v2216, %v2217
    %v2219 = vsub.s32 4294967266, %v2214
    %v2220 = vadd.s32 %v2219, 127
    %v2221 = vshll.u32 %v2220, 23
    %v2222 = vor.u32 4788187, %v2221
    %v2223 = vand.u32 2147483647, %v2222
    %v2225 = vcvt.s32.f32 %v2218
    %v2226 = vmul.f32 %v2225, %v2223
    %v2227 = vxor.u32 %v2226, 2147483648
    %v2228 = vsel %vm2145, %v2227, %v2226
    %v2229 = vsub.s32 4, %v2205
    %v2230 = vsel %vm2145, %v2229, %v2205
    %v2231 = vsel %vm2144, %v1935, %v2228
    %v2232 = vsel %vm2144, 0, %v2230
    %v2233 = vcosq.f32.pop %v2231
    %v2234 = vsinq.f32.pop %v2231
    %vm2235 = vweird.f32 %v1935
    %v2236 = vadd.s32 %v2232, 3
    %v2237 = vand.u32 %v2236, 3
    %vm2238 = vcmp.lt.s32.totalorder %v2237, 2
    %vm2239 = vcmp.eq.s32.totalorder %v2237, 0
    %v2240 = vxor.u32 %v2234, 2147483648
    %v2241 = vsel %vm2239, %v2233, %v2240
    %vm2242 = vcmp.eq.s32.totalorder %v2237, 2
    %v2243 = vxor.u32 %v2233, 2147483648
    %v2244 = vsel %vm2242, %v2243, %v2234
    %v2245 = vsel %vm2238, %v2241, %v2244
    %v2246 = vsel %vm2235, nan, %v2245
    %v2247 = vand.u32 2147483647, %v1936
    %vm2248 = vcmp.le.f32.partialorder %v2247, 0.7853982
    %vm2249 = vcmp.lt.s32.totalorder %v1936, 0
    %v2250 = vand.u32 %v1936, 2139095040
    %v2251 = vshrl.u32 %v2250, 23
    %v2252 = vsub.s32 %v2251, 127
    %v2253 = vand.u32 2147483647, %v1936
    %v2254 = vand.u32 %v2253, 8388607
    %v2255 = vor.u32 %v2254, 8388608
    %v2256 = vsub.s32 0, %v2255
    %v2257 = vadd.s32 %v2252, 1
    %vm2258 = vcmp.gt.s32.totalorder %v2257, 0
    %v2259 = vsel %vm2258, %v2257, 0
    %v2260 = vshrl.u32 %v2259, 5
    %v2261 = vand.u32 %v2259, 31
    %v2262 = vsub.s32 32, %v2261
    %v2263 = vshrl.u32 683565275, %v2262
    %v2264 = vshll.u32 683565275, %v2261
    %v2265 = vshrl.u32 2475754826, %v2262
    %v2266 = vor.u32 %v2264, %v2265
    %v2267 = vshll.u32 2475754826, %v2261
    %v2268 = vshrl.u32 2131351028, %v2262
    %v2269 = vor.u32 %v2267, %v2268
    %v2270 = vshll.u32 2131351028, %v2261
    %v2271 = vshrl.u32 2102212464, %v2262
    %v2272 = vor.u32 %v2270, %v2271
    %v2273 = vshll.u32 2102212464, %v2261
    %v2274 = vshrl.u32 920167782, %v2262
    %v2275 = vor.u32 %v2273, %v2274
    %v2276 = vshll.u32 920167782, %v2261
    %v2277 = vshrl.u32 1326507024, %v2262
    %v2278 = vor.u32 %v2276, %v2277
    %vm2279 = vcmp.lt.s32.totalorder %v2260, 1
    %vm2280 = vcmp.lt.s32.totalorder %v2260, 2
    %vm2281 = vcmp.lt.s32.totalorder %v2260, 3
    %vm2282 = vcmp.lt.s32.totalorder %v2260, 4
    %v2283 = vsel %vm2279, %v2263, %v2266
    %v2284 = vsel %vm2282, %v2272, 2102212464
    %v2285 = vsel %vm2281, %v2269, %v2284
    %v2286 = vsel %vm2280, %v2283, %v2285
    %v2287 = vsel %vm2279, %v2266, %v2269
    %v2288 = vsel %vm2282, %v2275, 920167782
    %v2289 = vsel %vm2281, %v2272, %v2288
    %v2290 = vsel %vm2280, %v2287, %v2289
    %v2291 = vsel %vm2279, %v2269, %v2272
    %v2292 = vsel %vm2282, %v2278, 1326507024
    %v2293 = vsel %vm2281, %v2275, %v2292
    %v2294 = vsel %vm2280, %v2291, %v2293
    %v2295 = vshll.u32 %v2255, 8
    %v2296 = vmul.u32.u64.compose %v2295, %v2294
    %v2297 = vextract.low.u32 %v2296
    %v2298 = vextract.high.u32 %v2296
    %v2299 = vmul.u32.u64.compose %v2295, %v2290
    %v2300 = vextract.low.u32 %v2299
    %v2301 = vextract.high.u32 %v2299
    %v2302 = vmul.u32 %v2295, %v2286
    %v2303 = vadd.s32 %v2298, %v2300
    %vm2304 = vc.u32 %v2298, %v2300
    %v2305 = vadd.s32 %v2301, 1
    %v2306 = vsel %vm2304, %v2305, %v2301
    %v2307 = vadd.s32 %v2302, %v2306
    %v2308 = vadd.s32 %v2307, 536870912
    %v2309 = vshrl.u32 %v2308, 30
    %v2310 = vshll.u32 %v2309, 30
    %v2311 = vsub.s32 %v2307, %v2310
    %vm2312 = vcmp.lt.s32.totalorder %v2311, 0
    %v2313 = vsub.s32 0, %v2311
    %v2314 = vsel %vm2312, %v2313, %v2311
    %v2315 = vclz %v2314
    %v2316 = vsub.s32 %v2315, 2
    %vm2317 = vcmp.gt.s32.totalorder 0, %v2316
    %v2318 = vsel %vm2317, 0, %v2316
    %v2319 = vsub.s32 32, %v2318
    %v2320 = vshll.u32 %v2311, %v2318
    %v2321 = vshrl.u32 %v2303, %v2319
    %v2322 = vor.u32 %v2320, %v2321
    %v2323 = vsub.s32 4294967266, %v2318
    %v2324 = vadd.s32 %v2323, 127
    %v2325 = vshll.u32 %v2324, 23
    %v2326 = vor.u32 4788187, %v2325
    %v2327 = vand.u32 2147483647, %v2326
    %v2329 = vcvt.s32.f32 %v2322
    %v2330 = vmul.f32 %v2329, %v2327
    %v2331 = vxor.u32 %v2330, 2147483648
    %v2332 = vsel %vm2249, %v2331, %v2330
    %v2333 = vsub.s32 4, %v2309
    %v2334 = vsel %vm2249, %v2333, %v2309
    %v2335 = vsel %vm2248, %v1936, %v2332
    %v2336 = vsel %vm2248, 0, %v2334
    %v2337 = vcosq.f32.pop %v2335
    %v2338 = vsinq.f32.pop %v2335
    %vm2339 = vweird.f32 %v1936
    %v2340 = vadd.s32 %v2336, 3
    %v2341 = vand.u32 %v2340, 3
    %vm2342 = vcmp.lt.s32.totalorder %v2341, 2
    %vm2343 = vcmp.eq.s32.totalorder %v2341, 0
    %v2344 = vxor.u32 %v2338, 2147483648
    %v2345 = vsel %vm2343, %v2337, %v2344
    %vm2346 = vcmp.eq.s32.totalorder %v2341, 2
    %v2347 = vxor.u32 %v2337, 2147483648
    %v2348 = vsel %vm2346, %v2347, %v2338
    %v2349 = vsel %vm2342, %v2345, %v2348
    %v2350 = vsel %vm2339, nan, %v2349
    %v2351 = vmul.f32 %v1911, %v2039
    %v2352 = vmul.f32 %v1912, %v2142
    %v2353 = vmul.f32 %v1915, %v2246
    %v2354 = vmul.f32 %v1916, %v2350
    %v2355 = vsub.f32 %v2351, %v2353
    %v2356 = vsub.f32 %v2352, %v2354
    %v2357 = vmul.f32 %v1911, %v2246
    %v2358 = vmul.f32 %v1912, %v2350
    %v2359 = vmul.f32 %v1915, %v2039
    %v2360 = vmul.f32 %v1916, %v2142
    %v2361 = vadd.f32 %v2357, %v2359
    %v2362 = vadd.f32 %v2358, %v2360
    %v2363 = vmul.f32 %v1919, %v2039
    %v2364 = vmul.f32 %v1920, %v2142
    %v2365 = vmul.f32 %v1923, %v2246
    %v2366 = vmul.f32 %v1924, %v2350
    %v2367 = vadd.f32 %v2363, %v2365
    %v2368 = vadd.f32 %v2364, %v2366
    %v2369 = vmul.f32 %v1923, %v2039
    %v2370 = vmul.f32 %v1924, %v2142
    %v2371 = vmul.f32 %v1919, %v2246
    %v2372 = vmul.f32 %v1920, %v2350
    %v2373 = vsub.f32 %v2369, %v2371
    %v2374 = vsub.f32 %v2370, %v2372
    %v2375 = vpack.c.bf16 %v2356, %v2355
    %v2376 = vpack.c.bf16 %v2362, %v2361
    %v2377 = vpack.c.bf16 %v2368, %v2367
    %v2378 = vpack.c.bf16 %v2374, %v2373
    %v2379 = vld [vmem:[#allocation2] sm:$0xff]
    %v2380 = vld [vmem:[#allocation2 + $0x8] sm:$0xff]
    %v2381 = vld [vmem:[#allocation2 + $0x10] sm:$0xff]
    %v2382 = vld [vmem:[#allocation2 + $0x18] sm:$0xff]
    %v2383 = vld [vmem:[#allocation2 + $0x20] sm:$0xff]
    %v2384 = vld [vmem:[#allocation2 + $0x28] sm:$0xff]
    %v2385 = vld [vmem:[#allocation2 + $0x30] sm:$0xff]
    %v2386 = vld [vmem:[#allocation2 + $0x38] sm:$0xff]
    %v2387 = vld [vmem:[#allocation2 + $0x40] sm:$0xff]
    %v2388 = vld [vmem:[#allocation2 + $0x48] sm:$0xff]
    %v2389 = vld [vmem:[#allocation2 + $0x50] sm:$0xff]
    %v2390 = vld [vmem:[#allocation2 + $0x58] sm:$0xff]
    %v2391 = vld [vmem:[#allocation2 + $0x60] sm:$0xff]
    %v2392 = vld [vmem:[#allocation2 + $0x68] sm:$0xff]
    %v2393 = vld [vmem:[#allocation2 + $0x70] sm:$0xff]
    %v2394 = vld [vmem:[#allocation2 + $0x78] sm:$0xff]
    %v2395 = vld [vmem:[#allocation2 + $0x80] sm:$0xff]
    %v2396 = vld [vmem:[#allocation2 + $0x88] sm:$0xff]
    %v2397 = vld [vmem:[#allocation2 + $0x90] sm:$0xff]
    %v2398 = vld [vmem:[#allocation2 + $0x98] sm:$0xff]
    %v2399 = vld [vmem:[#allocation2 + $0xa0] sm:$0xff]
    %v2400 = vld [vmem:[#allocation2 + $0xa8] sm:$0xff]
    %v2401 = vld [vmem:[#allocation2 + $0xb0] sm:$0xff]
    %v2402 = vld [vmem:[#allocation2 + $0xb8] sm:$0xff]
    %v2403 = vld [vmem:[#allocation2 + $0xc0] sm:$0xff]
    %v2404 = vld [vmem:[#allocation2 + $0xc8] sm:$0xff]
    %v2405 = vld [vmem:[#allocation2 + $0xd0] sm:$0xff]
    %v2406 = vld [vmem:[#allocation2 + $0xd8] sm:$0xff]
    %v2407 = vld [vmem:[#allocation2 + $0xe0] sm:$0xff]
    %v2408 = vld [vmem:[#allocation2 + $0xe8] sm:$0xff]
    %v2409 = vld [vmem:[#allocation2 + $0xf0] sm:$0xff]
    %v2410 = vld [vmem:[#allocation2 + $0xf8] sm:$0xff]
    %v2411 = vld [vmem:[#allocation2 + $0x100] sm:$0xff]
    %v2412 = vld [vmem:[#allocation2 + $0x108] sm:$0xff]
    %v2413 = vld [vmem:[#allocation2 + $0x110] sm:$0xff]
    %v2414 = vld [vmem:[#allocation2 + $0x118] sm:$0xff]
    %v2415 = vld [vmem:[#allocation2 + $0x120] sm:$0xff]
    %v2416 = vld [vmem:[#allocation2 + $0x128] sm:$0xff]
    %v2417 = vld [vmem:[#allocation2 + $0x130] sm:$0xff]
    %v2418 = vld [vmem:[#allocation2 + $0x138] sm:$0xff]
    %v2419 = vld [vmem:[#allocation2 + $0x140] sm:$0xff]
    %v2420 = vld [vmem:[#allocation2 + $0x148] sm:$0xff]
    %v2421 = vld [vmem:[#allocation2 + $0x150] sm:$0xff]
    %v2422 = vld [vmem:[#allocation2 + $0x158] sm:$0xff]
    %v2423 = vld [vmem:[#allocation2 + $0x160] sm:$0xff]
    %v2424 = vld [vmem:[#allocation2 + $0x168] sm:$0xff]
    %v2425 = vld [vmem:[#allocation2 + $0x170] sm:$0xff]
    %v2426 = vld [vmem:[#allocation2 + $0x178] sm:$0xff]
    %v2427 = vld [vmem:[#allocation2 + $0x180] sm:$0xff]
    %v2428 = vld [vmem:[#allocation2 + $0x188] sm:$0xff]
    %v2429 = vld [vmem:[#allocation2 + $0x190] sm:$0xff]
    %v2430 = vld [vmem:[#allocation2 + $0x198] sm:$0xff]
    %v2431 = vld [vmem:[#allocation2 + $0x1a0] sm:$0xff]
    %v2432 = vld [vmem:[#allocation2 + $0x1a8] sm:$0xff]
    %v2433 = vld [vmem:[#allocation2 + $0x1b0] sm:$0xff]
    %v2434 = vld [vmem:[#allocation2 + $0x1b8] sm:$0xff]
    %v2435 = vld [vmem:[#allocation2 + $0x1c0] sm:$0xff]
    %v2436 = vld [vmem:[#allocation2 + $0x1c8] sm:$0xff]
    %v2437 = vld [vmem:[#allocation2 + $0x1d0] sm:$0xff]
    %v2438 = vld [vmem:[#allocation2 + $0x1d8] sm:$0xff]
    %v2439 = vld [vmem:[#allocation2 + $0x1e0] sm:$0xff]
    %v2440 = vld [vmem:[#allocation2 + $0x1e8] sm:$0xff]
    %v2441 = vld [vmem:[#allocation2 + $0x1f0] sm:$0xff]
    %v2442 = vld [vmem:[#allocation2 + $0x1f8] sm:$0xff]
    %v2507 = vunpack.c.l.b16 %v2379
    %v2508 = vunpack.c.h.b16 %v2379
    %v2509 = vunpack.c.l.b16 %v2380
    %v2510 = vunpack.c.h.b16 %v2380
    %v2511 = vunpack.c.l.b16 %v2381
    %v2512 = vunpack.c.h.b16 %v2381
    %v2513 = vunpack.c.l.b16 %v2382
    %v2514 = vunpack.c.h.b16 %v2382
    %v2515 = vunpack.c.l.b16 %v2383
    %v2516 = vunpack.c.h.b16 %v2383
    %v2517 = vunpack.c.l.b16 %v2384
    %v2518 = vunpack.c.h.b16 %v2384
    %v2519 = vunpack.c.l.b16 %v2385
    %v2520 = vunpack.c.h.b16 %v2385
    %v2521 = vunpack.c.l.b16 %v2386
    %v2522 = vunpack.c.h.b16 %v2386
    %v2523 = vunpack.c.l.b16 %v2387
    %v2524 = vunpack.c.h.b16 %v2387
    %v2525 = vunpack.c.l.b16 %v2388
    %v2526 = vunpack.c.h.b16 %v2388
    %v2527 = vunpack.c.l.b16 %v2389
    %v2528 = vunpack.c.h.b16 %v2389
    %v2529 = vunpack.c.l.b16 %v2390
    %v2530 = vunpack.c.h.b16 %v2390
    %v2531 = vunpack.c.l.b16 %v2391
    %v2532 = vunpack.c.h.b16 %v2391
    %v2533 = vunpack.c.l.b16 %v2392
    %v2534 = vunpack.c.h.b16 %v2392
    %v2535 = vunpack.c.l.b16 %v2393
    %v2536 = vunpack.c.h.b16 %v2393
    %v2537 = vunpack.c.l.b16 %v2394
    %v2538 = vunpack.c.h.b16 %v2394
    %v2539 = vunpack.c.l.b16 %v2395
    %v2540 = vunpack.c.h.b16 %v2395
    %v2541 = vunpack.c.l.b16 %v2396
    %v2542 = vunpack.c.h.b16 %v2396
    %v2543 = vunpack.c.l.b16 %v2397
    %v2544 = vunpack.c.h.b16 %v2397
    %v2545 = vunpack.c.l.b16 %v2398
    %v2546 = vunpack.c.h.b16 %v2398
    %v2547 = vunpack.c.l.b16 %v2399
    %v2548 = vunpack.c.h.b16 %v2399
    %v2549 = vunpack.c.l.b16 %v2400
    %v2550 = vunpack.c.h.b16 %v2400
    %v2551 = vunpack.c.l.b16 %v2401
    %v2552 = vunpack.c.h.b16 %v2401
    %v2553 = vunpack.c.l.b16 %v2402
    %v2554 = vunpack.c.h.b16 %v2402
    %v2555 = vunpack.c.l.b16 %v2403
    %v2556 = vunpack.c.h.b16 %v2403
    %v2557 = vunpack.c.l.b16 %v2404
    %v2558 = vunpack.c.h.b16 %v2404
    %v2559 = vunpack.c.l.b16 %v2405
    %v2560 = vunpack.c.h.b16 %v2405
    %v2561 = vunpack.c.l.b16 %v2406
    %v2562 = vunpack.c.h.b16 %v2406
    %v2563 = vunpack.c.l.b16 %v2407
    %v2564 = vunpack.c.h.b16 %v2407
    %v2565 = vunpack.c.l.b16 %v2408
    %v2566 = vunpack.c.h.b16 %v2408
    %v2567 = vunpack.c.l.b16 %v2409
    %v2568 = vunpack.c.h.b16 %v2409
    %v2569 = vunpack.c.l.b16 %v2410
    %v2570 = vunpack.c.h.b16 %v2410
    %v2571 = vunpack.c.l.b16 %v2411
    %v2572 = vunpack.c.h.b16 %v2411
    %v2573 = vunpack.c.l.b16 %v2412
    %v2574 = vunpack.c.h.b16 %v2412
    %v2575 = vunpack.c.l.b16 %v2413
    %v2576 = vunpack.c.h.b16 %v2413
    %v2577 = vunpack.c.l.b16 %v2414
    %v2578 = vunpack.c.h.b16 %v2414
    %v2579 = vunpack.c.l.b16 %v2415
    %v2580 = vunpack.c.h.b16 %v2415
    %v2581 = vunpack.c.l.b16 %v2416
    %v2582 = vunpack.c.h.b16 %v2416
    %v2583 = vunpack.c.l.b16 %v2417
    %v2584 = vunpack.c.h.b16 %v2417
    %v2585 = vunpack.c.l.b16 %v2418
    %v2586 = vunpack.c.h.b16 %v2418
    %v2587 = vunpack.c.l.b16 %v2419
    %v2588 = vunpack.c.h.b16 %v2419
    %v2589 = vunpack.c.l.b16 %v2420
    %v2590 = vunpack.c.h.b16 %v2420
    %v2591 = vunpack.c.l.b16 %v2421
    %v2592 = vunpack.c.h.b16 %v2421
    %v2593 = vunpack.c.l.b16 %v2422
    %v2594 = vunpack.c.h.b16 %v2422
    %v2595 = vunpack.c.l.b16 %v2423
    %v2596 = vunpack.c.h.b16 %v2423
    %v2597 = vunpack.c.l.b16 %v2424
    %v2598 = vunpack.c.h.b16 %v2424
    %v2599 = vunpack.c.l.b16 %v2425
    %v2600 = vunpack.c.h.b16 %v2425
    %v2601 = vunpack.c.l.b16 %v2426
    %v2602 = vunpack.c.h.b16 %v2426
    %v2603 = vunpack.c.l.b16 %v2427
    %v2604 = vunpack.c.h.b16 %v2427
    %v2605 = vunpack.c.l.b16 %v2428
    %v2606 = vunpack.c.h.b16 %v2428
    %v2607 = vunpack.c.l.b16 %v2429
    %v2608 = vunpack.c.h.b16 %v2429
    %v2609 = vunpack.c.l.b16 %v2430
    %v2610 = vunpack.c.h.b16 %v2430
    %v2611 = vunpack.c.l.b16 %v2431
    %v2612 = vunpack.c.h.b16 %v2431
    %v2613 = vunpack.c.l.b16 %v2432
    %v2614 = vunpack.c.h.b16 %v2432
    %v2615 = vunpack.c.l.b16 %v2433
    %v2616 = vunpack.c.h.b16 %v2433
    %v2617 = vunpack.c.l.b16 %v2434
    %v2618 = vunpack.c.h.b16 %v2434
    %v2619 = vunpack.c.l.b16 %v2435
    %v2620 = vunpack.c.h.b16 %v2435
    %v2621 = vunpack.c.l.b16 %v2436
    %v2622 = vunpack.c.h.b16 %v2436
    %v2623 = vunpack.c.l.b16 %v2437
    %v2624 = vunpack.c.h.b16 %v2437
    %v2625 = vunpack.c.l.b16 %v2438
    %v2626 = vunpack.c.h.b16 %v2438
    %v2627 = vunpack.c.l.b16 %v2439
    %v2628 = vunpack.c.h.b16 %v2439
    %v2629 = vunpack.c.l.b16 %v2440
    %v2630 = vunpack.c.h.b16 %v2440
    %v2631 = vunpack.c.l.b16 %v2441
    %v2632 = vunpack.c.h.b16 %v2441
    %v2633 = vunpack.c.l.b16 %v2442
    %v2634 = vunpack.c.h.b16 %v2442
    %v2635 = vpack.c.b16 %v2509, %v2507
    %v2636 = vpack.c.b16 %v2510, %v2508
    %v2637 = vpack.c.b16 %v2513, %v2511
    %v2638 = vpack.c.b16 %v2514, %v2512
    %v2639 = vpack.c.b16 %v2517, %v2515
    %v2640 = vpack.c.b16 %v2518, %v2516
    %v2641 = vpack.c.b16 %v2521, %v2519
    %v2642 = vpack.c.b16 %v2522, %v2520
    %v2643 = vpack.c.b16 %v2525, %v2523
    %v2644 = vpack.c.b16 %v2526, %v2524
    %v2645 = vpack.c.b16 %v2529, %v2527
    %v2646 = vpack.c.b16 %v2530, %v2528
    %v2647 = vpack.c.b16 %v2533, %v2531
    %v2648 = vpack.c.b16 %v2534, %v2532
    %v2649 = vpack.c.b16 %v2537, %v2535
    %v2650 = vpack.c.b16 %v2538, %v2536
    %v2651 = vpack.c.b16 %v2541, %v2539
    %v2652 = vpack.c.b16 %v2542, %v2540
    %v2653 = vpack.c.b16 %v2545, %v2543
    %v2654 = vpack.c.b16 %v2546, %v2544
    %v2655 = vpack.c.b16 %v2549, %v2547
    %v2656 = vpack.c.b16 %v2550, %v2548
    %v2657 = vpack.c.b16 %v2553, %v2551
    %v2658 = vpack.c.b16 %v2554, %v2552
    %v2659 = vpack.c.b16 %v2557, %v2555
    %v2660 = vpack.c.b16 %v2558, %v2556
    %v2661 = vpack.c.b16 %v2561, %v2559
    %v2662 = vpack.c.b16 %v2562, %v2560
    %v2663 = vpack.c.b16 %v2565, %v2563
    %v2664 = vpack.c.b16 %v2566, %v2564
    %v2665 = vpack.c.b16 %v2569, %v2567
    %v2666 = vpack.c.b16 %v2570, %v2568
    %v2667 = vpack.c.b16 %v2573, %v2571
    %v2668 = vpack.c.b16 %v2574, %v2572
    %v2669 = vpack.c.b16 %v2577, %v2575
    %v2670 = vpack.c.b16 %v2578, %v2576
    %v2671 = vpack.c.b16 %v2581, %v2579
    %v2672 = vpack.c.b16 %v2582, %v2580
    %v2673 = vpack.c.b16 %v2585, %v2583
    %v2674 = vpack.c.b16 %v2586, %v2584
    %v2675 = vpack.c.b16 %v2589, %v2587
    %v2676 = vpack.c.b16 %v2590, %v2588
    %v2677 = vpack.c.b16 %v2593, %v2591
    %v2678 = vpack.c.b16 %v2594, %v2592
    %v2679 = vpack.c.b16 %v2597, %v2595
    %v2680 = vpack.c.b16 %v2598, %v2596
    %v2681 = vpack.c.b16 %v2601, %v2599
    %v2682 = vpack.c.b16 %v2602, %v2600
    %v2683 = vpack.c.b16 %v2605, %v2603
    %v2684 = vpack.c.b16 %v2606, %v2604
    %v2685 = vpack.c.b16 %v2609, %v2607
    %v2686 = vpack.c.b16 %v2610, %v2608
    %v2687 = vpack.c.b16 %v2613, %v2611
    %v2688 = vpack.c.b16 %v2614, %v2612
    %v2689 = vpack.c.b16 %v2617, %v2615
    %v2690 = vpack.c.b16 %v2618, %v2616
    %v2691 = vpack.c.b16 %v2621, %v2619
    %v2692 = vpack.c.b16 %v2622, %v2620
    %v2693 = vpack.c.b16 %v2625, %v2623
    %v2694 = vpack.c.b16 %v2626, %v2624
    %v2695 = vpack.c.b16 %v2629, %v2627
    %v2696 = vpack.c.b16 %v2630, %v2628
    %v2697 = vpack.c.b16 %v2633, %v2631
    %v2698 = vpack.c.b16 %v2634, %v2632
    %2763 = vmatprep.subr.bf16.mxu0 %v2650
    %2764 = vmatpush1.bf16.msra.mxu0 %v2649
    %2765 = vmatprep.subr.bf16.mxu0 %v2648
    %2766 = vmatpush1.bf16.msra.mxu0 %v2647
    %2767 = vmatprep.subr.bf16.mxu0 %v2646
    %2768 = vmatpush1.bf16.msra.mxu0 %v2645
    %2769 = vmatprep.subr.bf16.mxu0 %v2644
    %2770 = vmatpush1.bf16.msra.mxu0 %v2643
    %2771 = vmatprep.subr.bf16.mxu0 %v2642
    %2772 = vmatpush1.bf16.msra.mxu0 %v2641
    %2773 = vmatprep.subr.bf16.mxu0 %v2640
    %2774 = vmatpush1.bf16.msra.mxu0 %v2639
    %2775 = vmatprep.subr.bf16.mxu0 %v2638
    %2776 = vmatpush1.bf16.msra.mxu0 %v2637
    %2777 = vmatprep.subr.bf16.mxu0 %v2636
    %2778 = vmatpush1.bf16.msra.mxu0 %v2635
    %2779 = vmatprep.subr.bf16.mxu0 %v2666
    %2780 = vmatpush2.bf16.msra.mxu0 %v2665
    %2781 = vmatprep.subr.bf16.mxu0 %v2664
    %2782 = vmatpush2.bf16.msra.mxu0 %v2663
    %2783 = vmatprep.subr.bf16.mxu0 %v2662
    %2784 = vmatpush2.bf16.msra.mxu0 %v2661
    %2785 = vmatprep.subr.bf16.mxu0 %v2660
    %2786 = vmatpush2.bf16.msra.mxu0 %v2659
    %2787 = vmatprep.subr.bf16.mxu0 %v2658
    %2788 = vmatpush2.bf16.msra.mxu0 %v2657
    %2789 = vmatprep.subr.bf16.mxu0 %v2656
    %2790 = vmatpush2.bf16.msra.mxu0 %v2655
    %2791 = vmatprep.subr.bf16.mxu0 %v2654
    %2792 = vmatpush2.bf16.msra.mxu0 %v2653
    %2793 = vmatprep.subr.bf16.mxu0 %v2652
    %2794 = vmatpush2.bf16.msra.mxu0 %v2651
    %2795 = vmatprep.mubr.bf16.mxu0 %v2376
    %2796 = vmatmul.mubr.bf16.gmra.mxu0 %v2375
    %v2797 = vpop.f32.mrf.mxu0
    %v2798 = vadd.f32 3.2426513e-05, %v2797
    %v2799 = vpop.f32.mrf.mxu0
    %v2800 = vadd.f32 3.2426513e-05, %v2799
    %v2801 = vpop.f32.mrf.mxu0
    %v2802 = vadd.f32 3.2426513e-05, %v2801
    %v2803 = vpop.f32.mrf.mxu0
    %v2804 = vadd.f32 3.2426513e-05, %v2803
    %2805 = vdwg.mxu0
    %2806 = vmatprep.subr.bf16.mxu0 %v2682
    %2807 = vmatpush1.bf16.msra.mxu0 %v2681
    %2808 = vmatprep.subr.bf16.mxu0 %v2680
    %2809 = vmatpush1.bf16.msra.mxu0 %v2679
    %2810 = vmatprep.subr.bf16.mxu0 %v2678
    %2811 = vmatpush1.bf16.msra.mxu0 %v2677
    %2812 = vmatprep.subr.bf16.mxu0 %v2676
    %2813 = vmatpush1.bf16.msra.mxu0 %v2675
    %2814 = vmatprep.subr.bf16.mxu0 %v2674
    %2815 = vmatpush1.bf16.msra.mxu0 %v2673
    %2816 = vmatprep.subr.bf16.mxu0 %v2672
    %2817 = vmatpush1.bf16.msra.mxu0 %v2671
    %2818 = vmatprep.subr.bf16.mxu0 %v2670
    %2819 = vmatpush1.bf16.msra.mxu0 %v2669
    %2820 = vmatprep.subr.bf16.mxu0 %v2668
    %2821 = vmatpush1.bf16.msra.mxu0 %v2667
    %2822 = vmatprep.subr.bf16.mxu0 %v2698
    %2823 = vmatpush2.bf16.msra.mxu0 %v2697
    %2824 = vmatprep.subr.bf16.mxu0 %v2696
    %2825 = vmatpush2.bf16.msra.mxu0 %v2695
    %2826 = vmatprep.subr.bf16.mxu0 %v2694
    %2827 = vmatpush2.bf16.msra.mxu0 %v2693
    %2828 = vmatprep.subr.bf16.mxu0 %v2692
    %2829 = vmatpush2.bf16.msra.mxu0 %v2691
    %2830 = vmatprep.subr.bf16.mxu0 %v2690
    %2831 = vmatpush2.bf16.msra.mxu0 %v2689
    %2832 = vmatprep.subr.bf16.mxu0 %v2688
    %2833 = vmatpush2.bf16.msra.mxu0 %v2687
    %2834 = vmatprep.subr.bf16.mxu0 %v2686
    %2835 = vmatpush2.bf16.msra.mxu0 %v2685
    %2836 = vmatprep.subr.bf16.mxu0 %v2684
    %2837 = vmatpush2.bf16.msra.mxu0 %v2683
    %2838 = vmatprep.mubr.bf16.mxu0 %v2378
    %2839 = vmatmul.mubr.bf16.gmra.mxu0 %v2377
    %v2840 = vpop.f32.mrf.mxu0
    %v2841 = vadd.f32 %v2798, %v2840
    %v2842 = vpop.f32.mrf.mxu0
    %v2843 = vadd.f32 %v2800, %v2842
    %v2844 = vpop.f32.mrf.mxu0
    %v2845 = vadd.f32 %v2802, %v2844
    %v2846 = vpop.f32.mrf.mxu0
    %v2847 = vadd.f32 %v2804, %v2846
    %2848 = vdwg.mxu0
    %2849 = vst [vmem:[%s5] sm:$0xff] %v2841
    %2850 = vst [vmem:[%s5 + $0x8] sm:$0xff] %v2843
    %2851 = vst [vmem:[%s5 + $0x10] sm:$0xff] %v2845
    %2852 = vst [vmem:[%s5 + $0x18] sm:$0xff] %v2847
    // Predicated region
    $region26: #{simulate.1} parent=1 // pred_check
      _
    $region27: #{simulate.1} parent=1 // pred_check_branch
      %2854 = sbr.rel (0) target = $region29
    $region28: #{simulate.1} parent=1 // pred_region
      _
    $region29: #{simulate.1} parent=1 // pred_fallthru
      _
    // Predicated region
    $region30: #{simulate.1} parent=1 // pred_check
      _
    $region31: #{simulate.1} parent=1 // pred_check_branch
      %2856 = sbr.rel (0) target = $region33
    $region32: #{simulate.1} parent=1 // pred_region
      _
    $region33: #{simulate.1} parent=1 // pred_fallthru
      _
    %2857 = vsyncpa [#allocation3], 1

</llo_original>
